<compile_context>
chip_gen: v7x
topology: tpu7x:2x2x1
jax: 0.10.0
libtpu: 0.0.40
codegen_flags: <defaults>
</compile_context>

<pallas_src>
import functools

import jax
import jax.numpy as jnp
from jax.experimental import pallas as pl
from jax.experimental.pallas import tpu as pltpu

NC = 28          # columns per phase throughout the decoder (= 27 real positions + 1 pad)


# ------------------------------- fused kernel ------------------------------- #

def decoder_kernel(z_ref, lw_ref, lb_ref,
                   wt1_ref, wb1_ref, b1_ref,
                   wt2_ref, wb2_ref, b2_ref,
                   wt3_ref, wb3_ref, b3_ref,
                   w4_ref, b4_ref,
                   o_ref,
                   a0, a1, a2, a3, *, filters):
    f1, f2, f4 = filters, 2 * filters, 4 * filters

    def convt_s4(x_in_ref, x_out_ref, wt_ref, wb_ref, b_ref, n_in, cout):
        """ConvTranspose1d(k=7, s=4) + ReLU in composed-polyphase form.

        x_in_ref : (cin, n_in*28)  phase-major input  (column u*28+r = natural n_in*r+u)
        x_out_ref: (cout, 4*n_in*28) phase-major output
        wt_ref   : (4*cout, cin)  taps 0..3  (multiply x[q])
        wb_ref   : (4*cout, cin)  taps 4..6  (multiply x[q-1]); rows of phase 3 are zero
        """
        x = x_in_ref[...]                                   # (cin, n_in*28)
        cin = x.shape[0]
        last = x[:, (n_in - 1) * NC:]                       # last phase block
        last_shift = jnp.concatenate(
            [jnp.zeros((cin, 1), jnp.float32), last[:, :NC - 1]], axis=1)
        if n_in == 1:
            xm1 = last_shift
        else:
            xm1 = jnp.concatenate([last_shift, x[:, :(n_in - 1) * NC]], axis=1)

        res = (jnp.dot(wt_ref[...], x, preferred_element_type=jnp.float32)
               + jnp.dot(wb_ref[...], xm1, preferred_element_type=jnp.float32)
               + b_ref[...])                                # (4*cout, n_in*28)
        res = jnp.maximum(res, 0.0)                         # ReLU

        # scatter row-group p / column-block u  ->  output phase P = 4*u + p
        for u in range(n_in):
            for p in range(4):
                dst = (4 * u + p) * NC
                x_out_ref[:, dst:dst + NC] = res[p * cout:(p + 1) * cout,
                                                 u * NC:u * NC + NC]
        # the single out-of-range tail entry (phase 4*n_in-1, col 27) must be zero so the
        # next layer's x[q-1]/x[q] zero-extension stays exact
        x_out_ref[:, 4 * n_in * NC - 1:4 * n_in * NC] = jnp.zeros((cout, 1), jnp.float32)

    # ---- Linear: z -> (4f, 27), stored channel-major with one zero pad column ----
    lin = (jnp.dot(z_ref[0], lw_ref[...], preferred_element_type=jnp.float32)
           + lb_ref[...])                                   # (1, 4f*28)
    for c in range(f4):
        a0[c:c + 1, :] = lin[:, c * NC:(c + 1) * NC]

    # ---- three ConvTranspose1d(k=7, s=4) + ReLU layers (27 -> 111 -> 447 -> 1791) ----
    convt_s4(a0, a1, wt1_ref, wb1_ref, b1_ref, n_in=1, cout=f4)
    convt_s4(a1, a2, wt2_ref, wb2_ref, b2_ref, n_in=4, cout=f2)
    convt_s4(a2, a3, wt3_ref, wb3_ref, b3_ref, n_in=16, cout=f1)

    # ---- ConvTranspose1d(k=1, s=1, Cout=1): VPU weighted channel sum, no ReLU ----
    y3 = a3[...]                                            # (f, 64*28)
    out = jnp.sum(y3 * w4_ref[...], axis=0, keepdims=True) + b4_ref[...]
    o_ref[0, :, :] = out                                    # (1, 1792) phase-major


# ------------------------------ host wrappers ------------------------------- #

def init_params(key, filters, latent_dim):
    f4, f2, f1 = 4 * filters, 2 * filters, filters
    ks = jax.random.split(key, 10)
    sw, sb = 0.25, 0.1
    return {
        # linear weight stored as (latent_dim, 4f*27) == PyTorch weight transposed
        "lin_w": jax.random.normal(ks[0], (latent_dim, f4 * 27), jnp.float32) * 0.2,
        "lin_b": jax.random.normal(ks[1], (1, f4 * 27), jnp.float32) * sb,
        # PyTorch ConvTranspose1d weight layout: (in_channels, out_channels, K)
        "w1": jax.random.normal(ks[2], (f4, f4, 7), jnp.float32) * sw,
        "b1": jax.random.normal(ks[3], (f4,), jnp.float32) * sb,
        "w2": jax.random.normal(ks[4], (f4, f2, 7), jnp.float32) * sw,
        "b2": jax.random.normal(ks[5], (f2,), jnp.float32) * sb,
        "w3": jax.random.normal(ks[6], (f2, f1, 7), jnp.float32) * sw,
        "b3": jax.random.normal(ks[7], (f1,), jnp.float32) * sb,
        "w4": jax.random.normal(ks[8], (f1, 1, 1), jnp.float32) * sw,
        "b4": jax.random.normal(ks[9], (1,), jnp.float32) * sb,
    }


def prepare_params(params, filters):
    """One-time weight preparation (hoisted out of the forward path)."""
    f1, f2, f4 = filters, 2 * filters, 4 * filters

    def prep_s4(w_pt, b):                       # w_pt: (Cin, Cout, 7), b: (Cout,)
        cin, cout, _ = w_pt.shape
        wk = jnp.transpose(w_pt, (2, 1, 0))     # (7, Cout, Cin); wk[k,co,ci]=w_pt[ci,co,k]
        wt = wk[0:4].reshape(4 * cout, cin)                      # taps 0..3  (vs x[q])
        wb = jnp.concatenate(
            [wk[4:7], jnp.zeros((1, cout, cin), w_pt.dtype)], axis=0
        ).reshape(4 * cout, cin)                                 # taps 4..6  (vs x[q-1])
        bs = jnp.tile(b, 4).reshape(4 * cout, 1)
        return wt, wb, bs

    D = params["lin_w"].shape[0]
    lin_w = jnp.pad(params["lin_w"].reshape(D, f4, 27),
                    ((0, 0), (0, 0), (0, 1))).reshape(D, f4 * NC)
    lin_b = jnp.pad(params["lin_b"].reshape(1, f4, 27),
                    ((0, 0), (0, 0), (0, 1))).reshape(1, f4 * NC)
    wt1, wb1, b1 = prep_s4(params["w1"], params["b1"])
    wt2, wb2, b2 = prep_s4(params["w2"], params["b2"])
    wt3, wb3, b3 = prep_s4(params["w3"], params["b3"])
    return {
        "lin_w": lin_w, "lin_b": lin_b,
        "wt1": wt1, "wb1": wb1, "b1": b1,
        "wt2": wt2, "wb2": wb2, "b2": b2,
        "wt3": wt3, "wb3": wb3, "b3": b3,
        "w4": params["w4"].reshape(f1, 1),
        "b4": params["b4"].reshape(1, 1),
    }


@functools.partial(jax.jit, static_argnames=("filters",))
def decoder_blue_forward(prepped, z, filters):
    f1, f2, f4 = filters, 2 * filters, 4 * filters
    B, latent = z.shape
    NPH = 64                      # 4**3 phases after three stride-4 layers
    LPAD = NPH * NC               # 1792 = 1791 + 1
    z3 = z.reshape(B, 1, latent)

    def cspec(shape):
        n = len(shape)
        return pl.BlockSpec(shape, lambda b, _n=n: (0,) * _n)

    in_specs = [
        pl.BlockSpec((1, 1, latent), lambda b: (b, 0, 0)),
        cspec(prepped["lin_w"].shape), cspec(prepped["lin_b"].shape),
        cspec(prepped["wt1"].shape), cspec(prepped["wb1"].shape), cspec(prepped["b1"].shape),
        cspec(prepped["wt2"].shape), cspec(prepped["wb2"].shape), cspec(prepped["b2"].shape),
        cspec(prepped["wt3"].shape), cspec(prepped["wb3"].shape), cspec(prepped["b3"].shape),
        cspec(prepped["w4"].shape), cspec(prepped["b4"].shape),
    ]

    out_ph = pl.pallas_call(
        functools.partial(decoder_kernel, filters=filters),
        out_shape=jax.ShapeDtypeStruct((B, 1, LPAD), jnp.float32),
        grid=(B,),
        in_specs=in_specs,
        out_specs=pl.BlockSpec((1, 1, LPAD), lambda b: (b, 0, 0)),
        scratch_shapes=[
            pltpu.VMEM((f4, NC), jnp.float32),          # a0: linear out  (16, 28)
            pltpu.VMEM((f4, 4 * NC), jnp.float32),      # a1: conv1 out   (16, 112)
            pltpu.VMEM((f2, 16 * NC), jnp.float32),     # a2: conv2 out   (8, 448)
            pltpu.VMEM((f1, 64 * NC), jnp.float32),     # a3: conv3 out   (4, 1792)
        ],
        compiler_params=pltpu.CompilerParams(
            dimension_semantics=("parallel",)),
    )(z3, prepped["lin_w"], prepped["lin_b"],
      prepped["wt1"], prepped["wb1"], prepped["b1"],
      prepped["wt2"], prepped["wb2"], prepped["b2"],
      prepped["wt3"], prepped["wb3"], prepped["b3"],
      prepped["w4"], prepped["b4"])

    # de-interleave phases (tiny XLA op): column P*28+r holds natural position 64*r+P
    out = out_ph.reshape(B, NPH, NC).transpose(0, 2, 1).reshape(B, 1, LPAD)
    return out[:, :, :LPAD - 1]                              # 1792 -> 1791


# ------------------------------ pure-JAX reference ------------------------------ #

def ref_forward(params, z, filters):
    f4 = 4 * filters
    y = z @ params["lin_w"] + params["lin_b"]
    y = y.reshape(-1, f4, 27)

    def convt(x, w_pt, b, stride):                           # x: (B,Cin,L), w_pt: (Cin,Cout,K)
        K = w_pt.shape[2]
        out = jax.lax.conv_general_dilated(
            x, jnp.flip(w_pt, 2).transpose(1, 0, 2),
            window_strides=(1,), padding=[(K - 1, K - 1)],
            lhs_dilation=(stride,), rhs_dilation=(1,),
            dimension_numbers=("NCH", "OIH", "NCH"))
        return out + b[None, :, None]

    y = jax.nn.relu(convt(y, params["w1"], params["b1"], 4))
    y = jax.nn.relu(convt(y, params["w2"], params["b2"], 4))
    y = jax.nn.relu(convt(y, params["w3"], params["b3"], 4))
    return convt(y, params["w4"], params["b4"], 1)


if __name__ == "__main__":
    filters = 4
    latent_dim = 32
    batch = 2

    key = jax.random.PRNGKey(0)
    k_params, k_z = jax.random.split(key)
    params = init_params(k_params, filters, latent_dim)
    prepped = prepare_params(params, filters)
    z = jax.random.normal(k_z, (batch, latent_dim), jnp.float32)

    out = decoder_blue_forward(prepped, z, filters)
    out = jax.block_until_ready(out)

    # ConvTranspose1d length: 27 -> 111 -> 447 -> 1791 -> 1791
    assert out.shape == (batch, 1, 1791), out.shape
    assert out.dtype == jnp.float32

    ref = ref_forward(params, z, filters)
    err = float(jnp.max(jnp.abs(out - ref)))
    # loose tolerance: MXU/conv default matmul precision may differ between paths
    assert err < 3e-2, f"max abs err vs reference: {err}"

    print("KERNEL_OK")
</pallas_src>

<mosaic_0001>
module attributes {stable_mosaic.version = 11 : i64} {
  func.func @decoder_kernel(%arg0: i32, %arg1: memref<1x1x32xf32, #tpu.memory_space<vmem>>, %arg2: memref<32x448xf32, #tpu.memory_space<vmem>>, %arg3: memref<1x448xf32, #tpu.memory_space<vmem>>, %arg4: memref<64x16xf32, #tpu.memory_space<vmem>>, %arg5: memref<64x16xf32, #tpu.memory_space<vmem>>, %arg6: memref<64x1xf32, #tpu.memory_space<vmem>>, %arg7: memref<32x16xf32, #tpu.memory_space<vmem>>, %arg8: memref<32x16xf32, #tpu.memory_space<vmem>>, %arg9: memref<32x1xf32, #tpu.memory_space<vmem>>, %arg10: memref<16x8xf32, #tpu.memory_space<vmem>>, %arg11: memref<16x8xf32, #tpu.memory_space<vmem>>, %arg12: memref<16x1xf32, #tpu.memory_space<vmem>>, %arg13: memref<4x1xf32, #tpu.memory_space<vmem>>, %arg14: memref<1x1xf32, #tpu.memory_space<vmem>>, %arg15: memref<1x1x1792xf32, #tpu.memory_space<vmem>>, %arg16: memref<16x28xf32, #tpu.memory_space<vmem>>, %arg17: memref<16x112xf32, #tpu.memory_space<vmem>>, %arg18: memref<8x448xf32, #tpu.memory_space<vmem>>, %arg19: memref<4x1792xf32, #tpu.memory_space<vmem>>) attributes {dimension_semantics = [#tpu.dimension_semantics<parallel>], iteration_bounds = array<i64: 2>, scalar_prefetch = 0 : i64, scratch_operands = 4 : i64, tpu.core_type = #tpu.core_type<tc>, window_params = [{transform_indices = @transform_0, window_bounds = array<i64: 1, 1, 32>}, {pipeline_mode = #tpu.pipeline_mode<synchronous>, transform_indices = @transform_1, window_bounds = array<i64: 32, 448>}, {pipeline_mode = #tpu.pipeline_mode<synchronous>, transform_indices = @transform_2, window_bounds = array<i64: 1, 448>}, {pipeline_mode = #tpu.pipeline_mode<synchronous>, transform_indices = @transform_3, window_bounds = array<i64: 64, 16>}, {pipeline_mode = #tpu.pipeline_mode<synchronous>, transform_indices = @transform_4, window_bounds = array<i64: 64, 16>}, {pipeline_mode = #tpu.pipeline_mode<synchronous>, transform_indices = @transform_5, window_bounds = array<i64: 64, 1>}, {pipeline_mode = #tpu.pipeline_mode<synchronous>, transform_indices = @transform_6, window_bounds = array<i64: 32, 16>}, {pipeline_mode = #tpu.pipeline_mode<synchronous>, transform_indices = @transform_7, window_bounds = array<i64: 32, 16>}, {pipeline_mode = #tpu.pipeline_mode<synchronous>, transform_indices = @transform_8, window_bounds = array<i64: 32, 1>}, {pipeline_mode = #tpu.pipeline_mode<synchronous>, transform_indices = @transform_9, window_bounds = array<i64: 16, 8>}, {pipeline_mode = #tpu.pipeline_mode<synchronous>, transform_indices = @transform_10, window_bounds = array<i64: 16, 8>}, {pipeline_mode = #tpu.pipeline_mode<synchronous>, transform_indices = @transform_11, window_bounds = array<i64: 16, 1>}, {pipeline_mode = #tpu.pipeline_mode<synchronous>, transform_indices = @transform_12, window_bounds = array<i64: 4, 1>}, {pipeline_mode = #tpu.pipeline_mode<synchronous>, transform_indices = @transform_13, window_bounds = array<i64: 1, 1>}, {transform_indices = @transform_14, window_bounds = array<i64: 1, 1, 1792>}]} {
    %c0 = arith.constant 0 : index
    %c0_0 = arith.constant 0 : index
    %c0_1 = arith.constant 0 : index
    %0 = vector.load %arg1[%c0, %c0_0, %c0_1] : memref<1x1x32xf32, #tpu.memory_space<vmem>>, vector<1x1x32xf32>
    %1 = vector.shape_cast %0 : vector<1x1x32xf32> to vector<1x32xf32>
    %c0_2 = arith.constant 0 : index
    %c0_3 = arith.constant 0 : index
    %2 = vector.load %arg2[%c0_2, %c0_3] : memref<32x448xf32, #tpu.memory_space<vmem>>, vector<32x448xf32>
    %cst = arith.constant dense<0.000000e+00> : vector<1x448xf32>
    %3 = tpu.matmul %1, %2, %cst {dimension_numbers = #tpu.dot_dimension_numbers<[1], [0], [0], [1], [0, 0, 1, 1], [], []>} : vector<1x32xf32>, vector<32x448xf32>, vector<1x448xf32> -> vector<1x448xf32>
    %c0_4 = arith.constant 0 : index
    %c0_5 = arith.constant 0 : index
    %4 = vector.load %arg3[%c0_4, %c0_5] : memref<1x448xf32, #tpu.memory_space<vmem>>, vector<1x448xf32>
    %5 = arith.addf %3, %4 : vector<1x448xf32>
    %6 = vector.extract_strided_slice %5 {offsets = [0, 0], sizes = [1, 28], strides = [1, 1]} : vector<1x448xf32> to vector<1x28xf32>
    %c0_6 = arith.constant 0 : index
    %c0_7 = arith.constant 0 : index
    %7 = vector.load %arg16[%c0_6, %c0_7] : memref<16x28xf32, #tpu.memory_space<vmem>>, vector<1x28xf32>
    tpu.vector_store %arg16[%c0_6, %c0_7], %6 {strides = array<i32>} : memref<16x28xf32, #tpu.memory_space<vmem>>, vector<1x28xf32>,
    %8 = vector.extract_strided_slice %5 {offsets = [0, 28], sizes = [1, 28], strides = [1, 1]} : vector<1x448xf32> to vector<1x28xf32>
    %c1 = arith.constant 1 : index
    %c0_8 = arith.constant 0 : index
    %9 = vector.load %arg16[%c1, %c0_8] : memref<16x28xf32, #tpu.memory_space<vmem>>, vector<1x28xf32>
    tpu.vector_store %arg16[%c1, %c0_8], %8 {strides = array<i32>} : memref<16x28xf32, #tpu.memory_space<vmem>>, vector<1x28xf32>,
    %10 = vector.extract_strided_slice %5 {offsets = [0, 56], sizes = [1, 28], strides = [1, 1]} : vector<1x448xf32> to vector<1x28xf32>
    %c2 = arith.constant 2 : index
    %c0_9 = arith.constant 0 : index
    %11 = vector.load %arg16[%c2, %c0_9] : memref<16x28xf32, #tpu.memory_space<vmem>>, vector<1x28xf32>
    tpu.vector_store %arg16[%c2, %c0_9], %10 {strides = array<i32>} : memref<16x28xf32, #tpu.memory_space<vmem>>, vector<1x28xf32>,
    %12 = vector.extract_strided_slice %5 {offsets = [0, 84], sizes = [1, 28], strides = [1, 1]} : vector<1x448xf32> to vector<1x28xf32>
    %c3 = arith.constant 3 : index
    %c0_10 = arith.constant 0 : index
    %13 = vector.load %arg16[%c3, %c0_10] : memref<16x28xf32, #tpu.memory_space<vmem>>, vector<1x28xf32>
    tpu.vector_store %arg16[%c3, %c0_10], %12 {strides = array<i32>} : memref<16x28xf32, #tpu.memory_space<vmem>>, vector<1x28xf32>,
    %14 = vector.extract_strided_slice %5 {offsets = [0, 112], sizes = [1, 28], strides = [1, 1]} : vector<1x448xf32> to vector<1x28xf32>
    %c4 = arith.constant 4 : index
    %c0_11 = arith.constant 0 : index
    %15 = vector.load %arg16[%c4, %c0_11] : memref<16x28xf32, #tpu.memory_space<vmem>>, vector<1x28xf32>
    tpu.vector_store %arg16[%c4, %c0_11], %14 {strides = array<i32>} : memref<16x28xf32, #tpu.memory_space<vmem>>, vector<1x28xf32>,
    %16 = vector.extract_strided_slice %5 {offsets = [0, 140], sizes = [1, 28], strides = [1, 1]} : vector<1x448xf32> to vector<1x28xf32>
    %c5 = arith.constant 5 : index
    %c0_12 = arith.constant 0 : index
    %17 = vector.load %arg16[%c5, %c0_12] : memref<16x28xf32, #tpu.memory_space<vmem>>, vector<1x28xf32>
    tpu.vector_store %arg16[%c5, %c0_12], %16 {strides = array<i32>} : memref<16x28xf32, #tpu.memory_space<vmem>>, vector<1x28xf32>,
    %18 = vector.extract_strided_slice %5 {offsets = [0, 168], sizes = [1, 28], strides = [1, 1]} : vector<1x448xf32> to vector<1x28xf32>
    %c6 = arith.constant 6 : index
    %c0_13 = arith.constant 0 : index
    %19 = vector.load %arg16[%c6, %c0_13] : memref<16x28xf32, #tpu.memory_space<vmem>>, vector<1x28xf32>
    tpu.vector_store %arg16[%c6, %c0_13], %18 {strides = array<i32>} : memref<16x28xf32, #tpu.memory_space<vmem>>, vector<1x28xf32>,
    %20 = vector.extract_strided_slice %5 {offsets = [0, 196], sizes = [1, 28], strides = [1, 1]} : vector<1x448xf32> to vector<1x28xf32>
    %c7 = arith.constant 7 : index
    %c0_14 = arith.constant 0 : index
    %21 = vector.load %arg16[%c7, %c0_14] : memref<16x28xf32, #tpu.memory_space<vmem>>, vector<1x28xf32>
    tpu.vector_store %arg16[%c7, %c0_14], %20 {strides = array<i32>} : memref<16x28xf32, #tpu.memory_space<vmem>>, vector<1x28xf32>,
    %22 = vector.extract_strided_slice %5 {offsets = [0, 224], sizes = [1, 28], strides = [1, 1]} : vector<1x448xf32> to vector<1x28xf32>
    %c8 = arith.constant 8 : index
    %c0_15 = arith.constant 0 : index
    %23 = vector.load %arg16[%c8, %c0_15] : memref<16x28xf32, #tpu.memory_space<vmem>>, vector<1x28xf32>
    tpu.vector_store %arg16[%c8, %c0_15], %22 {strides = array<i32>} : memref<16x28xf32, #tpu.memory_space<vmem>>, vector<1x28xf32>,
    %24 = vector.extract_strided_slice %5 {offsets = [0, 252], sizes = [1, 28], strides = [1, 1]} : vector<1x448xf32> to vector<1x28xf32>
    %c9 = arith.constant 9 : index
    %c0_16 = arith.constant 0 : index
    %25 = vector.load %arg16[%c9, %c0_16] : memref<16x28xf32, #tpu.memory_space<vmem>>, vector<1x28xf32>
    tpu.vector_store %arg16[%c9, %c0_16], %24 {strides = array<i32>} : memref<16x28xf32, #tpu.memory_space<vmem>>, vector<1x28xf32>,
    %26 = vector.extract_strided_slice %5 {offsets = [0, 280], sizes = [1, 28], strides = [1, 1]} : vector<1x448xf32> to vector<1x28xf32>
    %c10 = arith.constant 10 : index
    %c0_17 = arith.constant 0 : index
    %27 = vector.load %arg16[%c10, %c0_17] : memref<16x28xf32, #tpu.memory_space<vmem>>, vector<1x28xf32>
    tpu.vector_store %arg16[%c10, %c0_17], %26 {strides = array<i32>} : memref<16x28xf32, #tpu.memory_space<vmem>>, vector<1x28xf32>,
    %28 = vector.extract_strided_slice %5 {offsets = [0, 308], sizes = [1, 28], strides = [1, 1]} : vector<1x448xf32> to vector<1x28xf32>
    %c11 = arith.constant 11 : index
    %c0_18 = arith.constant 0 : index
    %29 = vector.load %arg16[%c11, %c0_18] : memref<16x28xf32, #tpu.memory_space<vmem>>, vector<1x28xf32>
    tpu.vector_store %arg16[%c11, %c0_18], %28 {strides = array<i32>} : memref<16x28xf32, #tpu.memory_space<vmem>>, vector<1x28xf32>,
    %30 = vector.extract_strided_slice %5 {offsets = [0, 336], sizes = [1, 28], strides = [1, 1]} : vector<1x448xf32> to vector<1x28xf32>
    %c12 = arith.constant 12 : index
    %c0_19 = arith.constant 0 : index
    %31 = vector.load %arg16[%c12, %c0_19] : memref<16x28xf32, #tpu.memory_space<vmem>>, vector<1x28xf32>
    tpu.vector_store %arg16[%c12, %c0_19], %30 {strides = array<i32>} : memref<16x28xf32, #tpu.memory_space<vmem>>, vector<1x28xf32>,
    %32 = vector.extract_strided_slice %5 {offsets = [0, 364], sizes = [1, 28], strides = [1, 1]} : vector<1x448xf32> to vector<1x28xf32>
    %c13 = arith.constant 13 : index
    %c0_20 = arith.constant 0 : index
    %33 = vector.load %arg16[%c13, %c0_20] : memref<16x28xf32, #tpu.memory_space<vmem>>, vector<1x28xf32>
    tpu.vector_store %arg16[%c13, %c0_20], %32 {strides = array<i32>} : memref<16x28xf32, #tpu.memory_space<vmem>>, vector<1x28xf32>,
    %34 = vector.extract_strided_slice %5 {offsets = [0, 392], sizes = [1, 28], strides = [1, 1]} : vector<1x448xf32> to vector<1x28xf32>
    %c14 = arith.constant 14 : index
    %c0_21 = arith.constant 0 : index
    %35 = vector.load %arg16[%c14, %c0_21] : memref<16x28xf32, #tpu.memory_space<vmem>>, vector<1x28xf32>
    tpu.vector_store %arg16[%c14, %c0_21], %34 {strides = array<i32>} : memref<16x28xf32, #tpu.memory_space<vmem>>, vector<1x28xf32>,
    %36 = vector.extract_strided_slice %5 {offsets = [0, 420], sizes = [1, 28], strides = [1, 1]} : vector<1x448xf32> to vector<1x28xf32>
    %c15 = arith.constant 15 : index
    %c0_22 = arith.constant 0 : index
    %37 = vector.load %arg16[%c15, %c0_22] : memref<16x28xf32, #tpu.memory_space<vmem>>, vector<1x28xf32>
    tpu.vector_store %arg16[%c15, %c0_22], %36 {strides = array<i32>} : memref<16x28xf32, #tpu.memory_space<vmem>>, vector<1x28xf32>,
    %c0_23 = arith.constant 0 : index
    %c0_24 = arith.constant 0 : index
    %38 = vector.load %arg16[%c0_23, %c0_24] : memref<16x28xf32, #tpu.memory_space<vmem>>, vector<16x28xf32>
    %cst_25 = arith.constant 0.000000e+00 : f32
    %39 = vector.broadcast %cst_25 : f32 to vector<16x1xf32>
    %40 = vector.extract_strided_slice %38 {offsets = [0, 0], sizes = [16, 27], strides = [1, 1]} : vector<16x28xf32> to vector<16x27xf32>
    %41 = tpu.concatenate %39, %40 in 1 : vector<16x1xf32>, vector<16x27xf32> -> vector<16x28xf32>
    %c0_26 = arith.constant 0 : index
    %c0_27 = arith.constant 0 : index
    %42 = vector.load %arg4[%c0_26, %c0_27] : memref<64x16xf32, #tpu.memory_space<vmem>>, vector<64x16xf32>
    %cst_28 = arith.constant dense<0.000000e+00> : vector<64x28xf32>
    %43 = tpu.matmul %42, %38, %cst_28 {dimension_numbers = #tpu.dot_dimension_numbers<[1], [0], [0], [1], [0, 0, 1, 1], [], []>} : vector<64x16xf32>, vector<16x28xf32>, vector<64x28xf32> -> vector<64x28xf32>
    %c0_29 = arith.constant 0 : index
    %c0_30 = arith.constant 0 : index
    %44 = vector.load %arg5[%c0_29, %c0_30] : memref<64x16xf32, #tpu.memory_space<vmem>>, vector<64x16xf32>
    %cst_31 = arith.constant dense<0.000000e+00> : vector<64x28xf32>
    %45 = tpu.matmul %44, %41, %cst_31 {dimension_numbers = #tpu.dot_dimension_numbers<[1], [0], [0], [1], [0, 0, 1, 1], [], []>} : vector<64x16xf32>, vector<16x28xf32>, vector<64x28xf32> -> vector<64x28xf32>
    %46 = arith.addf %43, %45 : vector<64x28xf32>
    %c0_32 = arith.constant 0 : index
    %c0_33 = arith.constant 0 : index
    %47 = vector.load %arg6[%c0_32, %c0_33] : memref<64x1xf32, #tpu.memory_space<vmem>>, vector<64x1xf32>
    %48 = vector.broadcast %47 : vector<64x1xf32> to vector<64x28xf32>
    %49 = arith.addf %46, %48 : vector<64x28xf32>
    %cst_34 = arith.constant 0.000000e+00 : f32
    %50 = vector.broadcast %cst_34 : f32 to vector<64x28xf32>
    %51 = arith.maximumf %49, %50 : vector<64x28xf32>
    %52 = vector.extract_strided_slice %51 {offsets = [0, 0], sizes = [16, 28], strides = [1, 1]} : vector<64x28xf32> to vector<16x28xf32>
    %c0_35 = arith.constant 0 : index
    %c0_36 = arith.constant 0 : index
    %53 = vector.load %arg17[%c0_35, %c0_36] : memref<16x112xf32, #tpu.memory_space<vmem>>, vector<16x28xf32>
    tpu.vector_store %arg17[%c0_35, %c0_36], %52 {strides = array<i32>} : memref<16x112xf32, #tpu.memory_space<vmem>>, vector<16x28xf32>,
    %54 = vector.extract_strided_slice %51 {offsets = [16, 0], sizes = [16, 28], strides = [1, 1]} : vector<64x28xf32> to vector<16x28xf32>
    %c0_37 = arith.constant 0 : index
    %c28 = arith.constant 28 : index
    %55 = vector.load %arg17[%c0_37, %c28] : memref<16x112xf32, #tpu.memory_space<vmem>>, vector<16x28xf32>
    tpu.vector_store %arg17[%c0_37, %c28], %54 {strides = array<i32>} : memref<16x112xf32, #tpu.memory_space<vmem>>, vector<16x28xf32>,
    %56 = vector.extract_strided_slice %51 {offsets = [32, 0], sizes = [16, 28], strides = [1, 1]} : vector<64x28xf32> to vector<16x28xf32>
    %c0_38 = arith.constant 0 : index
    %c56 = arith.constant 56 : index
    %57 = vector.load %arg17[%c0_38, %c56] : memref<16x112xf32, #tpu.memory_space<vmem>>, vector<16x28xf32>
    tpu.vector_store %arg17[%c0_38, %c56], %56 {strides = array<i32>} : memref<16x112xf32, #tpu.memory_space<vmem>>, vector<16x28xf32>,
    %58 = vector.extract_strided_slice %51 {offsets = [48, 0], sizes = [16, 28], strides = [1, 1]} : vector<64x28xf32> to vector<16x28xf32>
    %c0_39 = arith.constant 0 : index
    %c84 = arith.constant 84 : index
    %59 = vector.load %arg17[%c0_39, %c84] : memref<16x112xf32, #tpu.memory_space<vmem>>, vector<16x28xf32>
    tpu.vector_store %arg17[%c0_39, %c84], %58 {strides = array<i32>} : memref<16x112xf32, #tpu.memory_space<vmem>>, vector<16x28xf32>,
    %cst_40 = arith.constant 0.000000e+00 : f32
    %60 = vector.broadcast %cst_40 : f32 to vector<16x1xf32>
    %c0_41 = arith.constant 0 : index
    %c111 = arith.constant 111 : index
    %61 = vector.load %arg17[%c0_41, %c111] : memref<16x112xf32, #tpu.memory_space<vmem>>, vector<16x1xf32>
    tpu.vector_store %arg17[%c0_41, %c111], %60 {strides = array<i32>} : memref<16x112xf32, #tpu.memory_space<vmem>>, vector<16x1xf32>,
    %c0_42 = arith.constant 0 : index
    %c0_43 = arith.constant 0 : index
    %62 = vector.load %arg17[%c0_42, %c0_43] : memref<16x112xf32, #tpu.memory_space<vmem>>, vector<16x112xf32>
    %63 = vector.extract_strided_slice %62 {offsets = [0, 84], sizes = [16, 28], strides = [1, 1]} : vector<16x112xf32> to vector<16x28xf32>
    %cst_44 = arith.constant 0.000000e+00 : f32
    %64 = vector.broadcast %cst_44 : f32 to vector<16x1xf32>
    %65 = vector.extract_strided_slice %63 {offsets = [0, 0], sizes = [16, 27], strides = [1, 1]} : vector<16x28xf32> to vector<16x27xf32>
    %66 = tpu.concatenate %64, %65 in 1 : vector<16x1xf32>, vector<16x27xf32> -> vector<16x28xf32>
    %67 = vector.extract_strided_slice %62 {offsets = [0, 0], sizes = [16, 84], strides = [1, 1]} : vector<16x112xf32> to vector<16x84xf32>
    %68 = tpu.concatenate %66, %67 in 1 : vector<16x28xf32>, vector<16x84xf32> -> vector<16x112xf32>
    %c0_45 = arith.constant 0 : index
    %c0_46 = arith.constant 0 : index
    %69 = vector.load %arg7[%c0_45, %c0_46] : memref<32x16xf32, #tpu.memory_space<vmem>>, vector<32x16xf32>
    %cst_47 = arith.constant dense<0.000000e+00> : vector<32x112xf32>
    %70 = tpu.matmul %69, %62, %cst_47 {dimension_numbers = #tpu.dot_dimension_numbers<[1], [0], [0], [1], [0, 0, 1, 1], [], []>} : vector<32x16xf32>, vector<16x112xf32>, vector<32x112xf32> -> vector<32x112xf32>
    %c0_48 = arith.constant 0 : index
    %c0_49 = arith.constant 0 : index
    %71 = vector.load %arg8[%c0_48, %c0_49] : memref<32x16xf32, #tpu.memory_space<vmem>>, vector<32x16xf32>
    %cst_50 = arith.constant dense<0.000000e+00> : vector<32x112xf32>
    %72 = tpu.matmul %71, %68, %cst_50 {dimension_numbers = #tpu.dot_dimension_numbers<[1], [0], [0], [1], [0, 0, 1, 1], [], []>} : vector<32x16xf32>, vector<16x112xf32>, vector<32x112xf32> -> vector<32x112xf32>
    %73 = arith.addf %70, %72 : vector<32x112xf32>
    %c0_51 = arith.constant 0 : index
    %c0_52 = arith.constant 0 : index
    %74 = vector.load %arg9[%c0_51, %c0_52] : memref<32x1xf32, #tpu.memory_space<vmem>>, vector<32x1xf32>
    %75 = vector.broadcast %74 : vector<32x1xf32> to vector<32x112xf32>
    %76 = arith.addf %73, %75 : vector<32x112xf32>
    %cst_53 = arith.constant 0.000000e+00 : f32
    %77 = vector.broadcast %cst_53 : f32 to vector<32x112xf32>
    %78 = arith.maximumf %76, %77 : vector<32x112xf32>
    %79 = vector.extract_strided_slice %78 {offsets = [0, 0], sizes = [8, 28], strides = [1, 1]} : vector<32x112xf32> to vector<8x28xf32>
    %c0_54 = arith.constant 0 : index
    %c0_55 = arith.constant 0 : index
    %80 = vector.load %arg18[%c0_54, %c0_55] : memref<8x448xf32, #tpu.memory_space<vmem>>, vector<8x28xf32>
    tpu.vector_store %arg18[%c0_54, %c0_55], %79 {strides = array<i32>} : memref<8x448xf32, #tpu.memory_space<vmem>>, vector<8x28xf32>,
    %81 = vector.extract_strided_slice %78 {offsets = [8, 0], sizes = [8, 28], strides = [1, 1]} : vector<32x112xf32> to vector<8x28xf32>
    %c0_56 = arith.constant 0 : index
    %c28_57 = arith.constant 28 : index
    %82 = vector.load %arg18[%c0_56, %c28_57] : memref<8x448xf32, #tpu.memory_space<vmem>>, vector<8x28xf32>
    tpu.vector_store %arg18[%c0_56, %c28_57], %81 {strides = array<i32>} : memref<8x448xf32, #tpu.memory_space<vmem>>, vector<8x28xf32>,
    %83 = vector.extract_strided_slice %78 {offsets = [16, 0], sizes = [8, 28], strides = [1, 1]} : vector<32x112xf32> to vector<8x28xf32>
    %c0_58 = arith.constant 0 : index
    %c56_59 = arith.constant 56 : index
    %84 = vector.load %arg18[%c0_58, %c56_59] : memref<8x448xf32, #tpu.memory_space<vmem>>, vector<8x28xf32>
    tpu.vector_store %arg18[%c0_58, %c56_59], %83 {strides = array<i32>} : memref<8x448xf32, #tpu.memory_space<vmem>>, vector<8x28xf32>,
    %85 = vector.extract_strided_slice %78 {offsets = [24, 0], sizes = [8, 28], strides = [1, 1]} : vector<32x112xf32> to vector<8x28xf32>
    %c0_60 = arith.constant 0 : index
    %c84_61 = arith.constant 84 : index
    %86 = vector.load %arg18[%c0_60, %c84_61] : memref<8x448xf32, #tpu.memory_space<vmem>>, vector<8x28xf32>
    tpu.vector_store %arg18[%c0_60, %c84_61], %85 {strides = array<i32>} : memref<8x448xf32, #tpu.memory_space<vmem>>, vector<8x28xf32>,
    %87 = vector.extract_strided_slice %78 {offsets = [0, 28], sizes = [8, 28], strides = [1, 1]} : vector<32x112xf32> to vector<8x28xf32>
    %c0_62 = arith.constant 0 : index
    %c112 = arith.constant 112 : index
    %88 = vector.load %arg18[%c0_62, %c112] : memref<8x448xf32, #tpu.memory_space<vmem>>, vector<8x28xf32>
    tpu.vector_store %arg18[%c0_62, %c112], %87 {strides = array<i32>} : memref<8x448xf32, #tpu.memory_space<vmem>>, vector<8x28xf32>,
    %89 = vector.extract_strided_slice %78 {offsets = [8, 28], sizes = [8, 28], strides = [1, 1]} : vector<32x112xf32> to vector<8x28xf32>
    %c0_63 = arith.constant 0 : index
    %c140 = arith.constant 140 : index
    %90 = vector.load %arg18[%c0_63, %c140] : memref<8x448xf32, #tpu.memory_space<vmem>>, vector<8x28xf32>
    tpu.vector_store %arg18[%c0_63, %c140], %89 {strides = array<i32>} : memref<8x448xf32, #tpu.memory_space<vmem>>, vector<8x28xf32>,
    %91 = vector.extract_strided_slice %78 {offsets = [16, 28], sizes = [8, 28], strides = [1, 1]} : vector<32x112xf32> to vector<8x28xf32>
    %c0_64 = arith.constant 0 : index
    %c168 = arith.constant 168 : index
    %92 = vector.load %arg18[%c0_64, %c168] : memref<8x448xf32, #tpu.memory_space<vmem>>, vector<8x28xf32>
    tpu.vector_store %arg18[%c0_64, %c168], %91 {strides = array<i32>} : memref<8x448xf32, #tpu.memory_space<vmem>>, vector<8x28xf32>,
    %93 = vector.extract_strided_slice %78 {offsets = [24, 28], sizes = [8, 28], strides = [1, 1]} : vector<32x112xf32> to vector<8x28xf32>
    %c0_65 = arith.constant 0 : index
    %c196 = arith.constant 196 : index
    %94 = vector.load %arg18[%c0_65, %c196] : memref<8x448xf32, #tpu.memory_space<vmem>>, vector<8x28xf32>
    tpu.vector_store %arg18[%c0_65, %c196], %93 {strides = array<i32>} : memref<8x448xf32, #tpu.memory_space<vmem>>, vector<8x28xf32>,
    %95 = vector.extract_strided_slice %78 {offsets = [0, 56], sizes = [8, 28], strides = [1, 1]} : vector<32x112xf32> to vector<8x28xf32>
    %c0_66 = arith.constant 0 : index
    %c224 = arith.constant 224 : index
    %96 = vector.load %arg18[%c0_66, %c224] : memref<8x448xf32, #tpu.memory_space<vmem>>, vector<8x28xf32>
    tpu.vector_store %arg18[%c0_66, %c224], %95 {strides = array<i32>} : memref<8x448xf32, #tpu.memory_space<vmem>>, vector<8x28xf32>,
    %97 = vector.extract_strided_slice %78 {offsets = [8, 56], sizes = [8, 28], strides = [1, 1]} : vector<32x112xf32> to vector<8x28xf32>
    %c0_67 = arith.constant 0 : index
    %c252 = arith.constant 252 : index
    %98 = vector.load %arg18[%c0_67, %c252] : memref<8x448xf32, #tpu.memory_space<vmem>>, vector<8x28xf32>
    tpu.vector_store %arg18[%c0_67, %c252], %97 {strides = array<i32>} : memref<8x448xf32, #tpu.memory_space<vmem>>, vector<8x28xf32>,
    %99 = vector.extract_strided_slice %78 {offsets = [16, 56], sizes = [8, 28], strides = [1, 1]} : vector<32x112xf32> to vector<8x28xf32>
    %c0_68 = arith.constant 0 : index
    %c280 = arith.constant 280 : index
    %100 = vector.load %arg18[%c0_68, %c280] : memref<8x448xf32, #tpu.memory_space<vmem>>, vector<8x28xf32>
    tpu.vector_store %arg18[%c0_68, %c280], %99 {strides = array<i32>} : memref<8x448xf32, #tpu.memory_space<vmem>>, vector<8x28xf32>,
    %101 = vector.extract_strided_slice %78 {offsets = [24, 56], sizes = [8, 28], strides = [1, 1]} : vector<32x112xf32> to vector<8x28xf32>
    %c0_69 = arith.constant 0 : index
    %c308 = arith.constant 308 : index
    %102 = vector.load %arg18[%c0_69, %c308] : memref<8x448xf32, #tpu.memory_space<vmem>>, vector<8x28xf32>
    tpu.vector_store %arg18[%c0_69, %c308], %101 {strides = array<i32>} : memref<8x448xf32, #tpu.memory_space<vmem>>, vector<8x28xf32>,
    %103 = vector.extract_strided_slice %78 {offsets = [0, 84], sizes = [8, 28], strides = [1, 1]} : vector<32x112xf32> to vector<8x28xf32>
    %c0_70 = arith.constant 0 : index
    %c336 = arith.constant 336 : index
    %104 = vector.load %arg18[%c0_70, %c336] : memref<8x448xf32, #tpu.memory_space<vmem>>, vector<8x28xf32>
    tpu.vector_store %arg18[%c0_70, %c336], %103 {strides = array<i32>} : memref<8x448xf32, #tpu.memory_space<vmem>>, vector<8x28xf32>,
    %105 = vector.extract_strided_slice %78 {offsets = [8, 84], sizes = [8, 28], strides = [1, 1]} : vector<32x112xf32> to vector<8x28xf32>
    %c0_71 = arith.constant 0 : index
    %c364 = arith.constant 364 : index
    %106 = vector.load %arg18[%c0_71, %c364] : memref<8x448xf32, #tpu.memory_space<vmem>>, vector<8x28xf32>
    tpu.vector_store %arg18[%c0_71, %c364], %105 {strides = array<i32>} : memref<8x448xf32, #tpu.memory_space<vmem>>, vector<8x28xf32>,
    %107 = vector.extract_strided_slice %78 {offsets = [16, 84], sizes = [8, 28], strides = [1, 1]} : vector<32x112xf32> to vector<8x28xf32>
    %c0_72 = arith.constant 0 : index
    %c392 = arith.constant 392 : index
    %108 = vector.load %arg18[%c0_72, %c392] : memref<8x448xf32, #tpu.memory_space<vmem>>, vector<8x28xf32>
    tpu.vector_store %arg18[%c0_72, %c392], %107 {strides = array<i32>} : memref<8x448xf32, #tpu.memory_space<vmem>>, vector<8x28xf32>,
    %109 = vector.extract_strided_slice %78 {offsets = [24, 84], sizes = [8, 28], strides = [1, 1]} : vector<32x112xf32> to vector<8x28xf32>
    %c0_73 = arith.constant 0 : index
    %c420 = arith.constant 420 : index
    %110 = vector.load %arg18[%c0_73, %c420] : memref<8x448xf32, #tpu.memory_space<vmem>>, vector<8x28xf32>
    tpu.vector_store %arg18[%c0_73, %c420], %109 {strides = array<i32>} : memref<8x448xf32, #tpu.memory_space<vmem>>, vector<8x28xf32>,
    %cst_74 = arith.constant 0.000000e+00 : f32
    %111 = vector.broadcast %cst_74 : f32 to vector<8x1xf32>
    %c0_75 = arith.constant 0 : index
    %c447 = arith.constant 447 : index
    %112 = vector.load %arg18[%c0_75, %c447] : memref<8x448xf32, #tpu.memory_space<vmem>>, vector<8x1xf32>
    tpu.vector_store %arg18[%c0_75, %c447], %111 {strides = array<i32>} : memref<8x448xf32, #tpu.memory_space<vmem>>, vector<8x1xf32>,
    %c0_76 = arith.constant 0 : index
    %c0_77 = arith.constant 0 : index
    %113 = vector.load %arg18[%c0_76, %c0_77] : memref<8x448xf32, #tpu.memory_space<vmem>>, vector<8x448xf32>
    %114 = vector.extract_strided_slice %113 {offsets = [0, 420], sizes = [8, 28], strides = [1, 1]} : vector<8x448xf32> to vector<8x28xf32>
    %cst_78 = arith.constant 0.000000e+00 : f32
    %115 = vector.broadcast %cst_78 : f32 to vector<8x1xf32>
    %116 = vector.extract_strided_slice %114 {offsets = [0, 0], sizes = [8, 27], strides = [1, 1]} : vector<8x28xf32> to vector<8x27xf32>
    %117 = tpu.concatenate %115, %116 in 1 : vector<8x1xf32>, vector<8x27xf32> -> vector<8x28xf32>
    %118 = vector.extract_strided_slice %113 {offsets = [0, 0], sizes = [8, 420], strides = [1, 1]} : vector<8x448xf32> to vector<8x420xf32>
    %119 = tpu.concatenate %117, %118 in 1 : vector<8x28xf32>, vector<8x420xf32> -> vector<8x448xf32>
    %c0_79 = arith.constant 0 : index
    %c0_80 = arith.constant 0 : index
    %120 = vector.load %arg10[%c0_79, %c0_80] : memref<16x8xf32, #tpu.memory_space<vmem>>, vector<16x8xf32>
    %cst_81 = arith.constant dense<0.000000e+00> : vector<16x448xf32>
    %121 = tpu.matmul %120, %113, %cst_81 {dimension_numbers = #tpu.dot_dimension_numbers<[1], [0], [0], [1], [0, 0, 1, 1], [], []>} : vector<16x8xf32>, vector<8x448xf32>, vector<16x448xf32> -> vector<16x448xf32>
    %c0_82 = arith.constant 0 : index
    %c0_83 = arith.constant 0 : index
    %122 = vector.load %arg11[%c0_82, %c0_83] : memref<16x8xf32, #tpu.memory_space<vmem>>, vector<16x8xf32>
    %cst_84 = arith.constant dense<0.000000e+00> : vector<16x448xf32>
    %123 = tpu.matmul %122, %119, %cst_84 {dimension_numbers = #tpu.dot_dimension_numbers<[1], [0], [0], [1], [0, 0, 1, 1], [], []>} : vector<16x8xf32>, vector<8x448xf32>, vector<16x448xf32> -> vector<16x448xf32>
    %124 = arith.addf %121, %123 : vector<16x448xf32>
    %c0_85 = arith.constant 0 : index
    %c0_86 = arith.constant 0 : index
    %125 = vector.load %arg12[%c0_85, %c0_86] : memref<16x1xf32, #tpu.memory_space<vmem>>, vector<16x1xf32>
    %126 = vector.broadcast %125 : vector<16x1xf32> to vector<16x448xf32>
    %127 = arith.addf %124, %126 : vector<16x448xf32>
    %cst_87 = arith.constant 0.000000e+00 : f32
    %128 = vector.broadcast %cst_87 : f32 to vector<16x448xf32>
    %129 = arith.maximumf %127, %128 : vector<16x448xf32>
    %130 = vector.extract_strided_slice %129 {offsets = [0, 0], sizes = [4, 28], strides = [1, 1]} : vector<16x448xf32> to vector<4x28xf32>
    %c0_88 = arith.constant 0 : index
    %c0_89 = arith.constant 0 : index
    %131 = vector.load %arg19[%c0_88, %c0_89] : memref<4x1792xf32, #tpu.memory_space<vmem>>, vector<4x28xf32>
    tpu.vector_store %arg19[%c0_88, %c0_89], %130 {strides = array<i32>} : memref<4x1792xf32, #tpu.memory_space<vmem>>, vector<4x28xf32>,
    %132 = vector.extract_strided_slice %129 {offsets = [4, 0], sizes = [4, 28], strides = [1, 1]} : vector<16x448xf32> to vector<4x28xf32>
    %c0_90 = arith.constant 0 : index
    %c28_91 = arith.constant 28 : index
    %133 = vector.load %arg19[%c0_90, %c28_91] : memref<4x1792xf32, #tpu.memory_space<vmem>>, vector<4x28xf32>
    tpu.vector_store %arg19[%c0_90, %c28_91], %132 {strides = array<i32>} : memref<4x1792xf32, #tpu.memory_space<vmem>>, vector<4x28xf32>,
    %134 = vector.extract_strided_slice %129 {offsets = [8, 0], sizes = [4, 28], strides = [1, 1]} : vector<16x448xf32> to vector<4x28xf32>
    %c0_92 = arith.constant 0 : index
    %c56_93 = arith.constant 56 : index
    %135 = vector.load %arg19[%c0_92, %c56_93] : memref<4x1792xf32, #tpu.memory_space<vmem>>, vector<4x28xf32>
    tpu.vector_store %arg19[%c0_92, %c56_93], %134 {strides = array<i32>} : memref<4x1792xf32, #tpu.memory_space<vmem>>, vector<4x28xf32>,
    %136 = vector.extract_strided_slice %129 {offsets = [12, 0], sizes = [4, 28], strides = [1, 1]} : vector<16x448xf32> to vector<4x28xf32>
    %c0_94 = arith.constant 0 : index
    %c84_95 = arith.constant 84 : index
    %137 = vector.load %arg19[%c0_94, %c84_95] : memref<4x1792xf32, #tpu.memory_space<vmem>>, vector<4x28xf32>
    tpu.vector_store %arg19[%c0_94, %c84_95], %136 {strides = array<i32>} : memref<4x1792xf32, #tpu.memory_space<vmem>>, vector<4x28xf32>,
    %138 = vector.extract_strided_slice %129 {offsets = [0, 28], sizes = [4, 28], strides = [1, 1]} : vector<16x448xf32> to vector<4x28xf32>
    %c0_96 = arith.constant 0 : index
    %c112_97 = arith.constant 112 : index
    %139 = vector.load %arg19[%c0_96, %c112_97] : memref<4x1792xf32, #tpu.memory_space<vmem>>, vector<4x28xf32>
    tpu.vector_store %arg19[%c0_96, %c112_97], %138 {strides = array<i32>} : memref<4x1792xf32, #tpu.memory_space<vmem>>, vector<4x28xf32>,
    %140 = vector.extract_strided_slice %129 {offsets = [4, 28], sizes = [4, 28], strides = [1, 1]} : vector<16x448xf32> to vector<4x28xf32>
    %c0_98 = arith.constant 0 : index
    %c140_99 = arith.constant 140 : index
    %141 = vector.load %arg19[%c0_98, %c140_99] : memref<4x1792xf32, #tpu.memory_space<vmem>>, vector<4x28xf32>
    tpu.vector_store %arg19[%c0_98, %c140_99], %140 {strides = array<i32>} : memref<4x1792xf32, #tpu.memory_space<vmem>>, vector<4x28xf32>,
    %142 = vector.extract_strided_slice %129 {offsets = [8, 28], sizes = [4, 28], strides = [1, 1]} : vector<16x448xf32> to vector<4x28xf32>
    %c0_100 = arith.constant 0 : index
    %c168_101 = arith.constant 168 : index
    %143 = vector.load %arg19[%c0_100, %c168_101] : memref<4x1792xf32, #tpu.memory_space<vmem>>, vector<4x28xf32>
    tpu.vector_store %arg19[%c0_100, %c168_101], %142 {strides = array<i32>} : memref<4x1792xf32, #tpu.memory_space<vmem>>, vector<4x28xf32>,
    %144 = vector.extract_strided_slice %129 {offsets = [12, 28], sizes = [4, 28], strides = [1, 1]} : vector<16x448xf32> to vector<4x28xf32>
    %c0_102 = arith.constant 0 : index
    %c196_103 = arith.constant 196 : index
    %145 = vector.load %arg19[%c0_102, %c196_103] : memref<4x1792xf32, #tpu.memory_space<vmem>>, vector<4x28xf32>
    tpu.vector_store %arg19[%c0_102, %c196_103], %144 {strides = array<i32>} : memref<4x1792xf32, #tpu.memory_space<vmem>>, vector<4x28xf32>,
    %146 = vector.extract_strided_slice %129 {offsets = [0, 56], sizes = [4, 28], strides = [1, 1]} : vector<16x448xf32> to vector<4x28xf32>
    %c0_104 = arith.constant 0 : index
    %c224_105 = arith.constant 224 : index
    %147 = vector.load %arg19[%c0_104, %c224_105] : memref<4x1792xf32, #tpu.memory_space<vmem>>, vector<4x28xf32>
    tpu.vector_store %arg19[%c0_104, %c224_105], %146 {strides = array<i32>} : memref<4x1792xf32, #tpu.memory_space<vmem>>, vector<4x28xf32>,
    %148 = vector.extract_strided_slice %129 {offsets = [4, 56], sizes = [4, 28], strides = [1, 1]} : vector<16x448xf32> to vector<4x28xf32>
    %c0_106 = arith.constant 0 : index
    %c252_107 = arith.constant 252 : index
    %149 = vector.load %arg19[%c0_106, %c252_107] : memref<4x1792xf32, #tpu.memory_space<vmem>>, vector<4x28xf32>
    tpu.vector_store %arg19[%c0_106, %c252_107], %148 {strides = array<i32>} : memref<4x1792xf32, #tpu.memory_space<vmem>>, vector<4x28xf32>,
    %150 = vector.extract_strided_slice %129 {offsets = [8, 56], sizes = [4, 28], strides = [1, 1]} : vector<16x448xf32> to vector<4x28xf32>
    %c0_108 = arith.constant 0 : index
    %c280_109 = arith.constant 280 : index
    %151 = vector.load %arg19[%c0_108, %c280_109] : memref<4x1792xf32, #tpu.memory_space<vmem>>, vector<4x28xf32>
    tpu.vector_store %arg19[%c0_108, %c280_109], %150 {strides = array<i32>} : memref<4x1792xf32, #tpu.memory_space<vmem>>, vector<4x28xf32>,
    %152 = vector.extract_strided_slice %129 {offsets = [12, 56], sizes = [4, 28], strides = [1, 1]} : vector<16x448xf32> to vector<4x28xf32>
    %c0_110 = arith.constant 0 : index
    %c308_111 = arith.constant 308 : index
    %153 = vector.load %arg19[%c0_110, %c308_111] : memref<4x1792xf32, #tpu.memory_space<vmem>>, vector<4x28xf32>
    tpu.vector_store %arg19[%c0_110, %c308_111], %152 {strides = array<i32>} : memref<4x1792xf32, #tpu.memory_space<vmem>>, vector<4x28xf32>,
    %154 = vector.extract_strided_slice %129 {offsets = [0, 84], sizes = [4, 28], strides = [1, 1]} : vector<16x448xf32> to vector<4x28xf32>
    %c0_112 = arith.constant 0 : index
    %c336_113 = arith.constant 336 : index
    %155 = vector.load %arg19[%c0_112, %c336_113] : memref<4x1792xf32, #tpu.memory_space<vmem>>, vector<4x28xf32>
    tpu.vector_store %arg19[%c0_112, %c336_113], %154 {strides = array<i32>} : memref<4x1792xf32, #tpu.memory_space<vmem>>, vector<4x28xf32>,
    %156 = vector.extract_strided_slice %129 {offsets = [4, 84], sizes = [4, 28], strides = [1, 1]} : vector<16x448xf32> to vector<4x28xf32>
    %c0_114 = arith.constant 0 : index
    %c364_115 = arith.constant 364 : index
    %157 = vector.load %arg19[%c0_114, %c364_115] : memref<4x1792xf32, #tpu.memory_space<vmem>>, vector<4x28xf32>
    tpu.vector_store %arg19[%c0_114, %c364_115], %156 {strides = array<i32>} : memref<4x1792xf32, #tpu.memory_space<vmem>>, vector<4x28xf32>,
    %158 = vector.extract_strided_slice %129 {offsets = [8, 84], sizes = [4, 28], strides = [1, 1]} : vector<16x448xf32> to vector<4x28xf32>
    %c0_116 = arith.constant 0 : index
    %c392_117 = arith.constant 392 : index
    %159 = vector.load %arg19[%c0_116, %c392_117] : memref<4x1792xf32, #tpu.memory_space<vmem>>, vector<4x28xf32>
    tpu.vector_store %arg19[%c0_116, %c392_117], %158 {strides = array<i32>} : memref<4x1792xf32, #tpu.memory_space<vmem>>, vector<4x28xf32>,
    %160 = vector.extract_strided_slice %129 {offsets = [12, 84], sizes = [4, 28], strides = [1, 1]} : vector<16x448xf32> to vector<4x28xf32>
    %c0_118 = arith.constant 0 : index
    %c420_119 = arith.constant 420 : index
    %161 = vector.load %arg19[%c0_118, %c420_119] : memref<4x1792xf32, #tpu.memory_space<vmem>>, vector<4x28xf32>
    tpu.vector_store %arg19[%c0_118, %c420_119], %160 {strides = array<i32>} : memref<4x1792xf32, #tpu.memory_space<vmem>>, vector<4x28xf32>,
    %162 = vector.extract_strided_slice %129 {offsets = [0, 112], sizes = [4, 28], strides = [1, 1]} : vector<16x448xf32> to vector<4x28xf32>
    %c0_120 = arith.constant 0 : index
    %c448 = arith.constant 448 : index
    %163 = vector.load %arg19[%c0_120, %c448] : memref<4x1792xf32, #tpu.memory_space<vmem>>, vector<4x28xf32>
    tpu.vector_store %arg19[%c0_120, %c448], %162 {strides = array<i32>} : memref<4x1792xf32, #tpu.memory_space<vmem>>, vector<4x28xf32>,
    %164 = vector.extract_strided_slice %129 {offsets = [4, 112], sizes = [4, 28], strides = [1, 1]} : vector<16x448xf32> to vector<4x28xf32>
    %c0_121 = arith.constant 0 : index
    %c476 = arith.constant 476 : index
    %165 = vector.load %arg19[%c0_121, %c476] : memref<4x1792xf32, #tpu.memory_space<vmem>>, vector<4x28xf32>
    tpu.vector_store %arg19[%c0_121, %c476], %164 {strides = array<i32>} : memref<4x1792xf32, #tpu.memory_space<vmem>>, vector<4x28xf32>,
    %166 = vector.extract_strided_slice %129 {offsets = [8, 112], sizes = [4, 28], strides = [1, 1]} : vector<16x448xf32> to vector<4x28xf32>
    %c0_122 = arith.constant 0 : index
    %c504 = arith.constant 504 : index
    %167 = vector.load %arg19[%c0_122, %c504] : memref<4x1792xf32, #tpu.memory_space<vmem>>, vector<4x28xf32>
    tpu.vector_store %arg19[%c0_122, %c504], %166 {strides = array<i32>} : memref<4x1792xf32, #tpu.memory_space<vmem>>, vector<4x28xf32>,
    %168 = vector.extract_strided_slice %129 {offsets = [12, 112], sizes = [4, 28], strides = [1, 1]} : vector<16x448xf32> to vector<4x28xf32>
    %c0_123 = arith.constant 0 : index
    %c532 = arith.constant 532 : index
    %169 = vector.load %arg19[%c0_123, %c532] : memref<4x1792xf32, #tpu.memory_space<vmem>>, vector<4x28xf32>
    tpu.vector_store %arg19[%c0_123, %c532], %168 {strides = array<i32>} : memref<4x1792xf32, #tpu.memory_space<vmem>>, vector<4x28xf32>,
    %170 = vector.extract_strided_slice %129 {offsets = [0, 140], sizes = [4, 28], strides = [1, 1]} : vector<16x448xf32> to vector<4x28xf32>
    %c0_124 = arith.constant 0 : index
    %c560 = arith.constant 560 : index
    %171 = vector.load %arg19[%c0_124, %c560] : memref<4x1792xf32, #tpu.memory_space<vmem>>, vector<4x28xf32>
    tpu.vector_store %arg19[%c0_124, %c560], %170 {strides = array<i32>} : memref<4x1792xf32, #tpu.memory_space<vmem>>, vector<4x28xf32>,
    %172 = vector.extract_strided_slice %129 {offsets = [4, 140], sizes = [4, 28], strides = [1, 1]} : vector<16x448xf32> to vector<4x28xf32>
    %c0_125 = arith.constant 0 : index
    %c588 = arith.constant 588 : index
    %173 = vector.load %arg19[%c0_125, %c588] : memref<4x1792xf32, #tpu.memory_space<vmem>>, vector<4x28xf32>
    tpu.vector_store %arg19[%c0_125, %c588], %172 {strides = array<i32>} : memref<4x1792xf32, #tpu.memory_space<vmem>>, vector<4x28xf32>,
    %174 = vector.extract_strided_slice %129 {offsets = [8, 140], sizes = [4, 28], strides = [1, 1]} : vector<16x448xf32> to vector<4x28xf32>
    %c0_126 = arith.constant 0 : index
    %c616 = arith.constant 616 : index
    %175 = vector.load %arg19[%c0_126, %c616] : memref<4x1792xf32, #tpu.memory_space<vmem>>, vector<4x28xf32>
    tpu.vector_store %arg19[%c0_126, %c616], %174 {strides = array<i32>} : memref<4x1792xf32, #tpu.memory_space<vmem>>, vector<4x28xf32>,
    %176 = vector.extract_strided_slice %129 {offsets = [12, 140], sizes = [4, 28], strides = [1, 1]} : vector<16x448xf32> to vector<4x28xf32>
    %c0_127 = arith.constant 0 : index
    %c644 = arith.constant 644 : index
    %177 = vector.load %arg19[%c0_127, %c644] : memref<4x1792xf32, #tpu.memory_space<vmem>>, vector<4x28xf32>
    tpu.vector_store %arg19[%c0_127, %c644], %176 {strides = array<i32>} : memref<4x1792xf32, #tpu.memory_space<vmem>>, vector<4x28xf32>,
    %178 = vector.extract_strided_slice %129 {offsets = [0, 168], sizes = [4, 28], strides = [1, 1]} : vector<16x448xf32> to vector<4x28xf32>
    %c0_128 = arith.constant 0 : index
    %c672 = arith.constant 672 : index
    %179 = vector.load %arg19[%c0_128, %c672] : memref<4x1792xf32, #tpu.memory_space<vmem>>, vector<4x28xf32>
    tpu.vector_store %arg19[%c0_128, %c672], %178 {strides = array<i32>} : memref<4x1792xf32, #tpu.memory_space<vmem>>, vector<4x28xf32>,
    %180 = vector.extract_strided_slice %129 {offsets = [4, 168], sizes = [4, 28], strides = [1, 1]} : vector<16x448xf32> to vector<4x28xf32>
    %c0_129 = arith.constant 0 : index
    %c700 = arith.constant 700 : index
    %181 = vector.load %arg19[%c0_129, %c700] : memref<4x1792xf32, #tpu.memory_space<vmem>>, vector<4x28xf32>
    tpu.vector_store %arg19[%c0_129, %c700], %180 {strides = array<i32>} : memref<4x1792xf32, #tpu.memory_space<vmem>>, vector<4x28xf32>,
    %182 = vector.extract_strided_slice %129 {offsets = [8, 168], sizes = [4, 28], strides = [1, 1]} : vector<16x448xf32> to vector<4x28xf32>
    %c0_130 = arith.constant 0 : index
    %c728 = arith.constant 728 : index
    %183 = vector.load %arg19[%c0_130, %c728] : memref<4x1792xf32, #tpu.memory_space<vmem>>, vector<4x28xf32>
    tpu.vector_store %arg19[%c0_130, %c728], %182 {strides = array<i32>} : memref<4x1792xf32, #tpu.memory_space<vmem>>, vector<4x28xf32>,
    %184 = vector.extract_strided_slice %129 {offsets = [12, 168], sizes = [4, 28], strides = [1, 1]} : vector<16x448xf32> to vector<4x28xf32>
    %c0_131 = arith.constant 0 : index
    %c756 = arith.constant 756 : index
    %185 = vector.load %arg19[%c0_131, %c756] : memref<4x1792xf32, #tpu.memory_space<vmem>>, vector<4x28xf32>
    tpu.vector_store %arg19[%c0_131, %c756], %184 {strides = array<i32>} : memref<4x1792xf32, #tpu.memory_space<vmem>>, vector<4x28xf32>,
    %186 = vector.extract_strided_slice %129 {offsets = [0, 196], sizes = [4, 28], strides = [1, 1]} : vector<16x448xf32> to vector<4x28xf32>
    %c0_132 = arith.constant 0 : index
    %c784 = arith.constant 784 : index
    %187 = vector.load %arg19[%c0_132, %c784] : memref<4x1792xf32, #tpu.memory_space<vmem>>, vector<4x28xf32>
    tpu.vector_store %arg19[%c0_132, %c784], %186 {strides = array<i32>} : memref<4x1792xf32, #tpu.memory_space<vmem>>, vector<4x28xf32>,
    %188 = vector.extract_strided_slice %129 {offsets = [4, 196], sizes = [4, 28], strides = [1, 1]} : vector<16x448xf32> to vector<4x28xf32>
    %c0_133 = arith.constant 0 : index
    %c812 = arith.constant 812 : index
    %189 = vector.load %arg19[%c0_133, %c812] : memref<4x1792xf32, #tpu.memory_space<vmem>>, vector<4x28xf32>
    tpu.vector_store %arg19[%c0_133, %c812], %188 {strides = array<i32>} : memref<4x1792xf32, #tpu.memory_space<vmem>>, vector<4x28xf32>,
    %190 = vector.extract_strided_slice %129 {offsets = [8, 196], sizes = [4, 28], strides = [1, 1]} : vector<16x448xf32> to vector<4x28xf32>
    %c0_134 = arith.constant 0 : index
    %c840 = arith.constant 840 : index
    %191 = vector.load %arg19[%c0_134, %c840] : memref<4x1792xf32, #tpu.memory_space<vmem>>, vector<4x28xf32>
    tpu.vector_store %arg19[%c0_134, %c840], %190 {strides = array<i32>} : memref<4x1792xf32, #tpu.memory_space<vmem>>, vector<4x28xf32>,
    %192 = vector.extract_strided_slice %129 {offsets = [12, 196], sizes = [4, 28], strides = [1, 1]} : vector<16x448xf32> to vector<4x28xf32>
    %c0_135 = arith.constant 0 : index
    %c868 = arith.constant 868 : index
    %193 = vector.load %arg19[%c0_135, %c868] : memref<4x1792xf32, #tpu.memory_space<vmem>>, vector<4x28xf32>
    tpu.vector_store %arg19[%c0_135, %c868], %192 {strides = array<i32>} : memref<4x1792xf32, #tpu.memory_space<vmem>>, vector<4x28xf32>,
    %194 = vector.extract_strided_slice %129 {offsets = [0, 224], sizes = [4, 28], strides = [1, 1]} : vector<16x448xf32> to vector<4x28xf32>
    %c0_136 = arith.constant 0 : index
    %c896 = arith.constant 896 : index
    %195 = vector.load %arg19[%c0_136, %c896] : memref<4x1792xf32, #tpu.memory_space<vmem>>, vector<4x28xf32>
    tpu.vector_store %arg19[%c0_136, %c896], %194 {strides = array<i32>} : memref<4x1792xf32, #tpu.memory_space<vmem>>, vector<4x28xf32>,
    %196 = vector.extract_strided_slice %129 {offsets = [4, 224], sizes = [4, 28], strides = [1, 1]} : vector<16x448xf32> to vector<4x28xf32>
    %c0_137 = arith.constant 0 : index
    %c924 = arith.constant 924 : index
    %197 = vector.load %arg19[%c0_137, %c924] : memref<4x1792xf32, #tpu.memory_space<vmem>>, vector<4x28xf32>
    tpu.vector_store %arg19[%c0_137, %c924], %196 {strides = array<i32>} : memref<4x1792xf32, #tpu.memory_space<vmem>>, vector<4x28xf32>,
    %198 = vector.extract_strided_slice %129 {offsets = [8, 224], sizes = [4, 28], strides = [1, 1]} : vector<16x448xf32> to vector<4x28xf32>
    %c0_138 = arith.constant 0 : index
    %c952 = arith.constant 952 : index
    %199 = vector.load %arg19[%c0_138, %c952] : memref<4x1792xf32, #tpu.memory_space<vmem>>, vector<4x28xf32>
    tpu.vector_store %arg19[%c0_138, %c952], %198 {strides = array<i32>} : memref<4x1792xf32, #tpu.memory_space<vmem>>, vector<4x28xf32>,
    %200 = vector.extract_strided_slice %129 {offsets = [12, 224], sizes = [4, 28], strides = [1, 1]} : vector<16x448xf32> to vector<4x28xf32>
    %c0_139 = arith.constant 0 : index
    %c980 = arith.constant 980 : index
    %201 = vector.load %arg19[%c0_139, %c980] : memref<4x1792xf32, #tpu.memory_space<vmem>>, vector<4x28xf32>
    tpu.vector_store %arg19[%c0_139, %c980], %200 {strides = array<i32>} : memref<4x1792xf32, #tpu.memory_space<vmem>>, vector<4x28xf32>,
    %202 = vector.extract_strided_slice %129 {offsets = [0, 252], sizes = [4, 28], strides = [1, 1]} : vector<16x448xf32> to vector<4x28xf32>
    %c0_140 = arith.constant 0 : index
    %c1008 = arith.constant 1008 : index
    %203 = vector.load %arg19[%c0_140, %c1008] : memref<4x1792xf32, #tpu.memory_space<vmem>>, vector<4x28xf32>
    tpu.vector_store %arg19[%c0_140, %c1008], %202 {strides = array<i32>} : memref<4x1792xf32, #tpu.memory_space<vmem>>, vector<4x28xf32>,
    %204 = vector.extract_strided_slice %129 {offsets = [4, 252], sizes = [4, 28], strides = [1, 1]} : vector<16x448xf32> to vector<4x28xf32>
    %c0_141 = arith.constant 0 : index
    %c1036 = arith.constant 1036 : index
    %205 = vector.load %arg19[%c0_141, %c1036] : memref<4x1792xf32, #tpu.memory_space<vmem>>, vector<4x28xf32>
    tpu.vector_store %arg19[%c0_141, %c1036], %204 {strides = array<i32>} : memref<4x1792xf32, #tpu.memory_space<vmem>>, vector<4x28xf32>,
    %206 = vector.extract_strided_slice %129 {offsets = [8, 252], sizes = [4, 28], strides = [1, 1]} : vector<16x448xf32> to vector<4x28xf32>
    %c0_142 = arith.constant 0 : index
    %c1064 = arith.constant 1064 : index
    %207 = vector.load %arg19[%c0_142, %c1064] : memref<4x1792xf32, #tpu.memory_space<vmem>>, vector<4x28xf32>
    tpu.vector_store %arg19[%c0_142, %c1064], %206 {strides = array<i32>} : memref<4x1792xf32, #tpu.memory_space<vmem>>, vector<4x28xf32>,
    %208 = vector.extract_strided_slice %129 {offsets = [12, 252], sizes = [4, 28], strides = [1, 1]} : vector<16x448xf32> to vector<4x28xf32>
    %c0_143 = arith.constant 0 : index
    %c1092 = arith.constant 1092 : index
    %209 = vector.load %arg19[%c0_143, %c1092] : memref<4x1792xf32, #tpu.memory_space<vmem>>, vector<4x28xf32>
    tpu.vector_store %arg19[%c0_143, %c1092], %208 {strides = array<i32>} : memref<4x1792xf32, #tpu.memory_space<vmem>>, vector<4x28xf32>,
    %210 = vector.extract_strided_slice %129 {offsets = [0, 280], sizes = [4, 28], strides = [1, 1]} : vector<16x448xf32> to vector<4x28xf32>
    %c0_144 = arith.constant 0 : index
    %c1120 = arith.constant 1120 : index
    %211 = vector.load %arg19[%c0_144, %c1120] : memref<4x1792xf32, #tpu.memory_space<vmem>>, vector<4x28xf32>
    tpu.vector_store %arg19[%c0_144, %c1120], %210 {strides = array<i32>} : memref<4x1792xf32, #tpu.memory_space<vmem>>, vector<4x28xf32>,
    %212 = vector.extract_strided_slice %129 {offsets = [4, 280], sizes = [4, 28], strides = [1, 1]} : vector<16x448xf32> to vector<4x28xf32>
    %c0_145 = arith.constant 0 : index
    %c1148 = arith.constant 1148 : index
    %213 = vector.load %arg19[%c0_145, %c1148] : memref<4x1792xf32, #tpu.memory_space<vmem>>, vector<4x28xf32>
    tpu.vector_store %arg19[%c0_145, %c1148], %212 {strides = array<i32>} : memref<4x1792xf32, #tpu.memory_space<vmem>>, vector<4x28xf32>,
    %214 = vector.extract_strided_slice %129 {offsets = [8, 280], sizes = [4, 28], strides = [1, 1]} : vector<16x448xf32> to vector<4x28xf32>
    %c0_146 = arith.constant 0 : index
    %c1176 = arith.constant 1176 : index
    %215 = vector.load %arg19[%c0_146, %c1176] : memref<4x1792xf32, #tpu.memory_space<vmem>>, vector<4x28xf32>
    tpu.vector_store %arg19[%c0_146, %c1176], %214 {strides = array<i32>} : memref<4x1792xf32, #tpu.memory_space<vmem>>, vector<4x28xf32>,
    %216 = vector.extract_strided_slice %129 {offsets = [12, 280], sizes = [4, 28], strides = [1, 1]} : vector<16x448xf32> to vector<4x28xf32>
    %c0_147 = arith.constant 0 : index
    %c1204 = arith.constant 1204 : index
    %217 = vector.load %arg19[%c0_147, %c1204] : memref<4x1792xf32, #tpu.memory_space<vmem>>, vector<4x28xf32>
    tpu.vector_store %arg19[%c0_147, %c1204], %216 {strides = array<i32>} : memref<4x1792xf32, #tpu.memory_space<vmem>>, vector<4x28xf32>,
    %218 = vector.extract_strided_slice %129 {offsets = [0, 308], sizes = [4, 28], strides = [1, 1]} : vector<16x448xf32> to vector<4x28xf32>
    %c0_148 = arith.constant 0 : index
    %c1232 = arith.constant 1232 : index
    %219 = vector.load %arg19[%c0_148, %c1232] : memref<4x1792xf32, #tpu.memory_space<vmem>>, vector<4x28xf32>
    tpu.vector_store %arg19[%c0_148, %c1232], %218 {strides = array<i32>} : memref<4x1792xf32, #tpu.memory_space<vmem>>, vector<4x28xf32>,
    %220 = vector.extract_strided_slice %129 {offsets = [4, 308], sizes = [4, 28], strides = [1, 1]} : vector<16x448xf32> to vector<4x28xf32>
    %c0_149 = arith.constant 0 : index
    %c1260 = arith.constant 1260 : index
    %221 = vector.load %arg19[%c0_149, %c1260] : memref<4x1792xf32, #tpu.memory_space<vmem>>, vector<4x28xf32>
    tpu.vector_store %arg19[%c0_149, %c1260], %220 {strides = array<i32>} : memref<4x1792xf32, #tpu.memory_space<vmem>>, vector<4x28xf32>,
    %222 = vector.extract_strided_slice %129 {offsets = [8, 308], sizes = [4, 28], strides = [1, 1]} : vector<16x448xf32> to vector<4x28xf32>
    %c0_150 = arith.constant 0 : index
    %c1288 = arith.constant 1288 : index
    %223 = vector.load %arg19[%c0_150, %c1288] : memref<4x1792xf32, #tpu.memory_space<vmem>>, vector<4x28xf32>
    tpu.vector_store %arg19[%c0_150, %c1288], %222 {strides = array<i32>} : memref<4x1792xf32, #tpu.memory_space<vmem>>, vector<4x28xf32>,
    %224 = vector.extract_strided_slice %129 {offsets = [12, 308], sizes = [4, 28], strides = [1, 1]} : vector<16x448xf32> to vector<4x28xf32>
    %c0_151 = arith.constant 0 : index
    %c1316 = arith.constant 1316 : index
    %225 = vector.load %arg19[%c0_151, %c1316] : memref<4x1792xf32, #tpu.memory_space<vmem>>, vector<4x28xf32>
    tpu.vector_store %arg19[%c0_151, %c1316], %224 {strides = array<i32>} : memref<4x1792xf32, #tpu.memory_space<vmem>>, vector<4x28xf32>,
    %226 = vector.extract_strided_slice %129 {offsets = [0, 336], sizes = [4, 28], strides = [1, 1]} : vector<16x448xf32> to vector<4x28xf32>
    %c0_152 = arith.constant 0 : index
    %c1344 = arith.constant 1344 : index
    %227 = vector.load %arg19[%c0_152, %c1344] : memref<4x1792xf32, #tpu.memory_space<vmem>>, vector<4x28xf32>
    tpu.vector_store %arg19[%c0_152, %c1344], %226 {strides = array<i32>} : memref<4x1792xf32, #tpu.memory_space<vmem>>, vector<4x28xf32>,
    %228 = vector.extract_strided_slice %129 {offsets = [4, 336], sizes = [4, 28], strides = [1, 1]} : vector<16x448xf32> to vector<4x28xf32>
    %c0_153 = arith.constant 0 : index
    %c1372 = arith.constant 1372 : index
    %229 = vector.load %arg19[%c0_153, %c1372] : memref<4x1792xf32, #tpu.memory_space<vmem>>, vector<4x28xf32>
    tpu.vector_store %arg19[%c0_153, %c1372], %228 {strides = array<i32>} : memref<4x1792xf32, #tpu.memory_space<vmem>>, vector<4x28xf32>,
    %230 = vector.extract_strided_slice %129 {offsets = [8, 336], sizes = [4, 28], strides = [1, 1]} : vector<16x448xf32> to vector<4x28xf32>
    %c0_154 = arith.constant 0 : index
    %c1400 = arith.constant 1400 : index
    %231 = vector.load %arg19[%c0_154, %c1400] : memref<4x1792xf32, #tpu.memory_space<vmem>>, vector<4x28xf32>
    tpu.vector_store %arg19[%c0_154, %c1400], %230 {strides = array<i32>} : memref<4x1792xf32, #tpu.memory_space<vmem>>, vector<4x28xf32>,
    %232 = vector.extract_strided_slice %129 {offsets = [12, 336], sizes = [4, 28], strides = [1, 1]} : vector<16x448xf32> to vector<4x28xf32>
    %c0_155 = arith.constant 0 : index
    %c1428 = arith.constant 1428 : index
    %233 = vector.load %arg19[%c0_155, %c1428] : memref<4x1792xf32, #tpu.memory_space<vmem>>, vector<4x28xf32>
    tpu.vector_store %arg19[%c0_155, %c1428], %232 {strides = array<i32>} : memref<4x1792xf32, #tpu.memory_space<vmem>>, vector<4x28xf32>,
    %234 = vector.extract_strided_slice %129 {offsets = [0, 364], sizes = [4, 28], strides = [1, 1]} : vector<16x448xf32> to vector<4x28xf32>
    %c0_156 = arith.constant 0 : index
    %c1456 = arith.constant 1456 : index
    %235 = vector.load %arg19[%c0_156, %c1456] : memref<4x1792xf32, #tpu.memory_space<vmem>>, vector<4x28xf32>
    tpu.vector_store %arg19[%c0_156, %c1456], %234 {strides = array<i32>} : memref<4x1792xf32, #tpu.memory_space<vmem>>, vector<4x28xf32>,
    %236 = vector.extract_strided_slice %129 {offsets = [4, 364], sizes = [4, 28], strides = [1, 1]} : vector<16x448xf32> to vector<4x28xf32>
    %c0_157 = arith.constant 0 : index
    %c1484 = arith.constant 1484 : index
    %237 = vector.load %arg19[%c0_157, %c1484] : memref<4x1792xf32, #tpu.memory_space<vmem>>, vector<4x28xf32>
    tpu.vector_store %arg19[%c0_157, %c1484], %236 {strides = array<i32>} : memref<4x1792xf32, #tpu.memory_space<vmem>>, vector<4x28xf32>,
    %238 = vector.extract_strided_slice %129 {offsets = [8, 364], sizes = [4, 28], strides = [1, 1]} : vector<16x448xf32> to vector<4x28xf32>
    %c0_158 = arith.constant 0 : index
    %c1512 = arith.constant 1512 : index
    %239 = vector.load %arg19[%c0_158, %c1512] : memref<4x1792xf32, #tpu.memory_space<vmem>>, vector<4x28xf32>
    tpu.vector_store %arg19[%c0_158, %c1512], %238 {strides = array<i32>} : memref<4x1792xf32, #tpu.memory_space<vmem>>, vector<4x28xf32>,
    %240 = vector.extract_strided_slice %129 {offsets = [12, 364], sizes = [4, 28], strides = [1, 1]} : vector<16x448xf32> to vector<4x28xf32>
    %c0_159 = arith.constant 0 : index
    %c1540 = arith.constant 1540 : index
    %241 = vector.load %arg19[%c0_159, %c1540] : memref<4x1792xf32, #tpu.memory_space<vmem>>, vector<4x28xf32>
    tpu.vector_store %arg19[%c0_159, %c1540], %240 {strides = array<i32>} : memref<4x1792xf32, #tpu.memory_space<vmem>>, vector<4x28xf32>,
    %242 = vector.extract_strided_slice %129 {offsets = [0, 392], sizes = [4, 28], strides = [1, 1]} : vector<16x448xf32> to vector<4x28xf32>
    %c0_160 = arith.constant 0 : index
    %c1568 = arith.constant 1568 : index
    %243 = vector.load %arg19[%c0_160, %c1568] : memref<4x1792xf32, #tpu.memory_space<vmem>>, vector<4x28xf32>
    tpu.vector_store %arg19[%c0_160, %c1568], %242 {strides = array<i32>} : memref<4x1792xf32, #tpu.memory_space<vmem>>, vector<4x28xf32>,
    %244 = vector.extract_strided_slice %129 {offsets = [4, 392], sizes = [4, 28], strides = [1, 1]} : vector<16x448xf32> to vector<4x28xf32>
    %c0_161 = arith.constant 0 : index
    %c1596 = arith.constant 1596 : index
    %245 = vector.load %arg19[%c0_161, %c1596] : memref<4x1792xf32, #tpu.memory_space<vmem>>, vector<4x28xf32>
    tpu.vector_store %arg19[%c0_161, %c1596], %244 {strides = array<i32>} : memref<4x1792xf32, #tpu.memory_space<vmem>>, vector<4x28xf32>,
    %246 = vector.extract_strided_slice %129 {offsets = [8, 392], sizes = [4, 28], strides = [1, 1]} : vector<16x448xf32> to vector<4x28xf32>
    %c0_162 = arith.constant 0 : index
    %c1624 = arith.constant 1624 : index
    %247 = vector.load %arg19[%c0_162, %c1624] : memref<4x1792xf32, #tpu.memory_space<vmem>>, vector<4x28xf32>
    tpu.vector_store %arg19[%c0_162, %c1624], %246 {strides = array<i32>} : memref<4x1792xf32, #tpu.memory_space<vmem>>, vector<4x28xf32>,
    %248 = vector.extract_strided_slice %129 {offsets = [12, 392], sizes = [4, 28], strides = [1, 1]} : vector<16x448xf32> to vector<4x28xf32>
    %c0_163 = arith.constant 0 : index
    %c1652 = arith.constant 1652 : index
    %249 = vector.load %arg19[%c0_163, %c1652] : memref<4x1792xf32, #tpu.memory_space<vmem>>, vector<4x28xf32>
    tpu.vector_store %arg19[%c0_163, %c1652], %248 {strides = array<i32>} : memref<4x1792xf32, #tpu.memory_space<vmem>>, vector<4x28xf32>,
    %250 = vector.extract_strided_slice %129 {offsets = [0, 420], sizes = [4, 28], strides = [1, 1]} : vector<16x448xf32> to vector<4x28xf32>
    %c0_164 = arith.constant 0 : index
    %c1680 = arith.constant 1680 : index
    %251 = vector.load %arg19[%c0_164, %c1680] : memref<4x1792xf32, #tpu.memory_space<vmem>>, vector<4x28xf32>
    tpu.vector_store %arg19[%c0_164, %c1680], %250 {strides = array<i32>} : memref<4x1792xf32, #tpu.memory_space<vmem>>, vector<4x28xf32>,
    %252 = vector.extract_strided_slice %129 {offsets = [4, 420], sizes = [4, 28], strides = [1, 1]} : vector<16x448xf32> to vector<4x28xf32>
    %c0_165 = arith.constant 0 : index
    %c1708 = arith.constant 1708 : index
    %253 = vector.load %arg19[%c0_165, %c1708] : memref<4x1792xf32, #tpu.memory_space<vmem>>, vector<4x28xf32>
    tpu.vector_store %arg19[%c0_165, %c1708], %252 {strides = array<i32>} : memref<4x1792xf32, #tpu.memory_space<vmem>>, vector<4x28xf32>,
    %254 = vector.extract_strided_slice %129 {offsets = [8, 420], sizes = [4, 28], strides = [1, 1]} : vector<16x448xf32> to vector<4x28xf32>
    %c0_166 = arith.constant 0 : index
    %c1736 = arith.constant 1736 : index
    %255 = vector.load %arg19[%c0_166, %c1736] : memref<4x1792xf32, #tpu.memory_space<vmem>>, vector<4x28xf32>
    tpu.vector_store %arg19[%c0_166, %c1736], %254 {strides = array<i32>} : memref<4x1792xf32, #tpu.memory_space<vmem>>, vector<4x28xf32>,
    %256 = vector.extract_strided_slice %129 {offsets = [12, 420], sizes = [4, 28], strides = [1, 1]} : vector<16x448xf32> to vector<4x28xf32>
    %c0_167 = arith.constant 0 : index
    %c1764 = arith.constant 1764 : index
    %257 = vector.load %arg19[%c0_167, %c1764] : memref<4x1792xf32, #tpu.memory_space<vmem>>, vector<4x28xf32>
    tpu.vector_store %arg19[%c0_167, %c1764], %256 {strides = array<i32>} : memref<4x1792xf32, #tpu.memory_space<vmem>>, vector<4x28xf32>,
    %cst_168 = arith.constant 0.000000e+00 : f32
    %258 = vector.broadcast %cst_168 : f32 to vector<4x1xf32>
    %c0_169 = arith.constant 0 : index
    %c1791 = arith.constant 1791 : index
    %259 = vector.load %arg19[%c0_169, %c1791] : memref<4x1792xf32, #tpu.memory_space<vmem>>, vector<4x1xf32>
    tpu.vector_store %arg19[%c0_169, %c1791], %258 {strides = array<i32>} : memref<4x1792xf32, #tpu.memory_space<vmem>>, vector<4x1xf32>,
    %c0_170 = arith.constant 0 : index
    %c0_171 = arith.constant 0 : index
    %260 = vector.load %arg19[%c0_170, %c0_171] : memref<4x1792xf32, #tpu.memory_space<vmem>>, vector<4x1792xf32>
    %c0_172 = arith.constant 0 : index
    %c0_173 = arith.constant 0 : index
    %261 = vector.load %arg13[%c0_172, %c0_173] : memref<4x1xf32, #tpu.memory_space<vmem>>, vector<4x1xf32>
    %262 = vector.broadcast %261 : vector<4x1xf32> to vector<4x1792xf32>
    %263 = arith.mulf %260, %262 : vector<4x1792xf32>
    %cst_174 = arith.constant dense<0.000000e+00> : vector<1792xf32>
    %264 = vector.multi_reduction <add>, %263, %cst_174 [0] : vector<4x1792xf32> to vector<1792xf32>
    %265 = vector.shape_cast %264 : vector<1792xf32> to vector<1x1792xf32>
    %c0_175 = arith.constant 0 : index
    %c0_176 = arith.constant 0 : index
    %266 = vector.load %arg14[%c0_175, %c0_176] : memref<1x1xf32, #tpu.memory_space<vmem>>, vector<1x1xf32>
    %267 = vector.broadcast %266 : vector<1x1xf32> to vector<1x1792xf32>
    %268 = arith.addf %265, %267 : vector<1x1792xf32>
    %c0_177 = arith.constant 0 : index
    %c0_178 = arith.constant 0 : index
    %c0_179 = arith.constant 0 : index
    %269 = vector.load %arg15[%c0_177, %c0_178, %c0_179] : memref<1x1x1792xf32, #tpu.memory_space<vmem>>, vector<1x1x1792xf32>
    %270 = vector.shape_cast %269 : vector<1x1x1792xf32> to vector<1x1792xf32>
    %271 = vector.shape_cast %268 : vector<1x1792xf32> to vector<1x1x1792xf32>
    tpu.vector_store %arg15[%c0_177, %c0_178, %c0_179], %271 {strides = array<i32>} : memref<1x1x1792xf32, #tpu.memory_space<vmem>>, vector<1x1x1792xf32>,
    return
  }
  func.func @transform_0(%arg0: i32) -> (i32, i32, i32) {
    %c0_i32 = arith.constant 0 : i32
    %c0_i32_0 = arith.constant 0 : i32
    %c0_i32_1 = arith.constant 0 : i32
    return %arg0, %c0_i32, %c0_i32_0 : i32, i32, i32
  }
  func.func @transform_1(%arg0: i32) -> (i32, i32) {
    %c0_i32 = arith.constant 0 : i32
    %c0_i32_0 = arith.constant 0 : i32
    %c0_i32_1 = arith.constant 0 : i32
    return %c0_i32, %c0_i32_0 : i32, i32
  }
  func.func @transform_2(%arg0: i32) -> (i32, i32) {
    %c0_i32 = arith.constant 0 : i32
    %c0_i32_0 = arith.constant 0 : i32
    %c0_i32_1 = arith.constant 0 : i32
    return %c0_i32, %c0_i32_0 : i32, i32
  }
  func.func @transform_3(%arg0: i32) -> (i32, i32) {
    %c0_i32 = arith.constant 0 : i32
    %c0_i32_0 = arith.constant 0 : i32
    %c0_i32_1 = arith.constant 0 : i32
    return %c0_i32, %c0_i32_0 : i32, i32
  }
  func.func @transform_4(%arg0: i32) -> (i32, i32) {
    %c0_i32 = arith.constant 0 : i32
    %c0_i32_0 = arith.constant 0 : i32
    %c0_i32_1 = arith.constant 0 : i32
    return %c0_i32, %c0_i32_0 : i32, i32
  }
  func.func @transform_5(%arg0: i32) -> (i32, i32) {
    %c0_i32 = arith.constant 0 : i32
    %c0_i32_0 = arith.constant 0 : i32
    %c0_i32_1 = arith.constant 0 : i32
    return %c0_i32, %c0_i32_0 : i32, i32
  }
  func.func @transform_6(%arg0: i32) -> (i32, i32) {
    %c0_i32 = arith.constant 0 : i32
    %c0_i32_0 = arith.constant 0 : i32
    %c0_i32_1 = arith.constant 0 : i32
    return %c0_i32, %c0_i32_0 : i32, i32
  }
  func.func @transform_7(%arg0: i32) -> (i32, i32) {
    %c0_i32 = arith.constant 0 : i32
    %c0_i32_0 = arith.constant 0 : i32
    %c0_i32_1 = arith.constant 0 : i32
    return %c0_i32, %c0_i32_0 : i32, i32
  }
  func.func @transform_8(%arg0: i32) -> (i32, i32) {
    %c0_i32 = arith.constant 0 : i32
    %c0_i32_0 = arith.constant 0 : i32
    %c0_i32_1 = arith.constant 0 : i32
    return %c0_i32, %c0_i32_0 : i32, i32
  }
  func.func @transform_9(%arg0: i32) -> (i32, i32) {
    %c0_i32 = arith.constant 0 : i32
    %c0_i32_0 = arith.constant 0 : i32
    %c0_i32_1 = arith.constant 0 : i32
    return %c0_i32, %c0_i32_0 : i32, i32
  }
  func.func @transform_10(%arg0: i32) -> (i32, i32) {
    %c0_i32 = arith.constant 0 : i32
    %c0_i32_0 = arith.constant 0 : i32
    %c0_i32_1 = arith.constant 0 : i32
    return %c0_i32, %c0_i32_0 : i32, i32
  }
  func.func @transform_11(%arg0: i32) -> (i32, i32) {
    %c0_i32 = arith.constant 0 : i32
    %c0_i32_0 = arith.constant 0 : i32
    %c0_i32_1 = arith.constant 0 : i32
    return %c0_i32, %c0_i32_0 : i32, i32
  }
  func.func @transform_12(%arg0: i32) -> (i32, i32) {
    %c0_i32 = arith.constant 0 : i32
    %c0_i32_0 = arith.constant 0 : i32
    %c0_i32_1 = arith.constant 0 : i32
    return %c0_i32, %c0_i32_0 : i32, i32
  }
  func.func @transform_13(%arg0: i32) -> (i32, i32) {
    %c0_i32 = arith.constant 0 : i32
    %c0_i32_0 = arith.constant 0 : i32
    %c0_i32_1 = arith.constant 0 : i32
    return %c0_i32, %c0_i32_0 : i32, i32
  }
  func.func @transform_14(%arg0: i32) -> (i32, i32, i32) {
    %c0_i32 = arith.constant 0 : i32
    %c0_i32_0 = arith.constant 0 : i32
    %c0_i32_1 = arith.constant 0 : i32
    return %arg0, %c0_i32, %c0_i32_0 : i32, i32, i32
  }
}

</mosaic_0001>

<llo_original>
// kernel: decoder_blue_forward.1
$region0: #{decoder_blue_forward.1}
  #allocation0 [shape = 'u32[]', space=smem, size = 0x4, offset = 0x4, fixed_abs, tag = 'smem constant byte address 0x4 - core index']
  #allocation1 [shape = 'u32[144,128]{1,0:T(1,128)}', space=vmem, size = 0x12000, scoped, tag = 'internal scratch']
  #allocation2 [shape = 'f32[16,28]{1,0:T(8,128)}', space=vmem, size = 0x2000, scoped, tag = 'scratch operand']
  #allocation3 [shape = 'f32[16,112]{1,0:T(8,128)}', space=vmem, size = 0x2000, scoped, tag = 'scratch operand']
  #allocation4 [shape = 'f32[8,448]{1,0:T(8,128)}', space=vmem, size = 0x4000, scoped, tag = 'scratch operand']
  #allocation5 [shape = 'f32[4,1792]{1,0:T(4,128)}', space=vmem, size = 0x7000, scoped, tag = 'scratch operand']
  #allocation6 [shape = 'f32[1,1]{1,0:T(1,128)S(1)}', space=vmem, size = 0x200, scoped, tag = 'scoped memory for decoder_blue_forward.1']
  %s0 = inlined_call_operand.vmem [shape: f32[2,1,32], index: 0, kind: input, shape index: {}]
  %s1 = inlined_call_operand.vmem [shape: f32[32,448], index: 1, kind: input, shape index: {}]
  %s2 = inlined_call_operand.vmem [shape: f32[1,448], index: 2, kind: input, shape index: {}]
  %s3 = inlined_call_operand.vmem [shape: f32[64,16], index: 3, kind: input, shape index: {}]
  %s4 = inlined_call_operand.vmem [shape: f32[64,16], index: 4, kind: input, shape index: {}]
  %s5 = inlined_call_operand.vmem [shape: f32[64,1], index: 5, kind: input, shape index: {}]
  %s6 = inlined_call_operand.vmem [shape: f32[32,16], index: 6, kind: input, shape index: {}]
  %s7 = inlined_call_operand.vmem [shape: f32[32,16], index: 7, kind: input, shape index: {}]
  %s8 = inlined_call_operand.vmem [shape: f32[32,1], index: 8, kind: input, shape index: {}]
  %s9 = inlined_call_operand.vmem [shape: f32[16,8], index: 9, kind: input, shape index: {}]
  %s10 = inlined_call_operand.vmem [shape: f32[16,8], index: 10, kind: input, shape index: {}]
  %s11 = inlined_call_operand.vmem [shape: f32[16,1], index: 11, kind: input, shape index: {}]
  %s12 = inlined_call_operand.vmem [shape: f32[4,1], index: 12, kind: input, shape index: {}]
  %s13 = inlined_call_operand.<no memory space> [shape: f32[1,1], index: 13, kind: input, shape index: {}]
  %s14 = inlined_call_operand.vmem [shape: f32[2,1,1792], index: 14, kind: output, shape index: {}]
  %s15 = sld [smem:[#allocation0]]
  $region89: #{decoder_blue_forward.1} parent=0
    _
  %s17 = ssub.s32 1, %s15
  %s18 = scalar_select 0, %s17, %s15
  %v19 = vstv %s13
  %20 = vst [vmem:[#allocation6] sm:$0x1] %v19
  loop: start=0, step=1, limit=4
  $region2: #{decoder_blue_forward.1} parent=0 // loop_pre_header
    _
  $region3: #{decoder_blue_forward.1} parent=0 // loop_header
    %s22 = sphi 0, %s26
    %p23 = scmp.ge.s32.totalorder %s22, 4
    %s32 = sphi 0, %s34
    %s35 = sphi 0, %s32
    %s36 = sphi 0, %s35
    %s52 = sphi 0, %s36
    %s56 = sphi 0, %s56
    %s58 = sphi 0, %s56
    %s59 = sphi 0, %s58
    %s73 = sphi 0, %s59
    %s77 = sphi 0, %s77
    %s79 = sphi 0, %s77
    %s80 = sphi 0, %s79
    %s94 = sphi 0, %s80
    %s98 = sphi 0, %s98
    %s100 = sphi 0, %s98
    %s101 = sphi 0, %s100
    %s115 = sphi 0, %s101
    %s119 = sphi 0, %s119
    %s121 = sphi 0, %s119
    %s122 = sphi 0, %s121
    %s136 = sphi 0, %s122
    %s140 = sphi 0, %s140
    %s142 = sphi 0, %s140
    %s143 = sphi 0, %s142
    %s157 = sphi 0, %s143
    %s161 = sphi 0, %s161
    %s163 = sphi 0, %s161
    %s164 = sphi 0, %s163
    %s178 = sphi 0, %s164
    %s182 = sphi 0, %s182
    %s184 = sphi 0, %s182
    %s185 = sphi 0, %s184
    %s199 = sphi 0, %s185
    %s203 = sphi 0, %s203
    %s205 = sphi 0, %s203
    %s206 = sphi 0, %s205
    %s220 = sphi 0, %s206
    %s224 = sphi 0, %s224
    %s226 = sphi 0, %s224
    %s227 = sphi 0, %s226
    %s241 = sphi 0, %s227
    %s245 = sphi 0, %s245
    %s247 = sphi 0, %s245
    %s248 = sphi 0, %s247
    %s262 = sphi 0, %s248
    %s266 = sphi 0, %s266
    %s268 = sphi 0, %s266
    %s269 = sphi 0, %s268
    %s283 = sphi 0, %s269
    %s287 = sphi 0, %s287
    %s289 = sphi 0, %s287
    %s290 = sphi 0, %s289
    %s304 = sphi 0, %s290
    %s308 = sphi 0, %s308
    %s310 = sphi 0, %s308
    %s311 = sphi 0, %s310
    %s325 = sphi 0, %s311
    %s331 = sphi 0, %s333
    %s334 = sphi 0, %s331
    %s335 = sphi 0, %s334
    %s351 = sphi 0, %s335
  $region4: #{decoder_blue_forward.1} parent=0 // loop_header_branch
    %25 = sbr.rel (%p23) target = $region8
  $region5: #{decoder_blue_forward.1} parent=0 // loop_body
    %s27 = ssub.s32 %s22, 1
    %s28 = ssub.s32 %s22, 2
    %s29 = sadd.s32 %s22, 1
    %s30 = ssub.s32 %s22, %s29
    %p31 = scmp.eq.s32.totalorder %s30, 0
    %s33 = sadd.s32 %s32, 1
    %s34 = scalar_select %p31, %s32, %s33
    %p37 = pneg %p31
    %p38 = scmp.eq.s32.totalorder %s22, 1
    %p39 = por %p37, %p38
    %p40 = scmp.ne.s32.totalorder %s32, %s35
    %p41 = scmp.eq.s32.totalorder %s22, 0
    %p42 = por %p40, %p41
    %p43 = scmp.ne.s32.totalorder %s32, %s35
    %p44 = scmp.eq.s32.totalorder %s27, 1
    %p45 = por %p43, %p44
    %p46 = scmp.ne.s32.totalorder %s35, %s36
    %p47 = scmp.eq.s32.totalorder %s27, 0
    %p48 = por %p46, %p47
    %p49 = scmp.ne.s32.totalorder %s35, %s36
    %p50 = scmp.eq.s32.totalorder %s28, 1
    %p51 = por %p49, %p50
    %p53 = scmp.ne.s32.totalorder %s36, %s52
    %p54 = scmp.eq.s32.totalorder %s28, 0
    %p55 = por %p53, %p54
    %s57 = sadd.s32 %s56, 1
    %p60 = scmp.eq.s32.totalorder %s22, 1
    %p61 = scmp.ne.s32.totalorder %s56, %s58
    %p62 = scmp.eq.s32.totalorder %s22, 0
    %p63 = por %p61, %p62
    %p64 = scmp.ne.s32.totalorder %s56, %s58
    %p65 = scmp.eq.s32.totalorder %s27, 1
    %p66 = por %p64, %p65
    %p67 = scmp.ne.s32.totalorder %s58, %s59
    %p68 = scmp.eq.s32.totalorder %s27, 0
    %p69 = por %p67, %p68
    %p70 = scmp.ne.s32.totalorder %s58, %s59
    %p71 = scmp.eq.s32.totalorder %s28, 1
    %p72 = por %p70, %p71
    %p74 = scmp.ne.s32.totalorder %s59, %s73
    %p75 = scmp.eq.s32.totalorder %s28, 0
    %p76 = por %p74, %p75
    %s78 = sadd.s32 %s77, 1
    %p81 = scmp.eq.s32.totalorder %s22, 1
    %p82 = scmp.ne.s32.totalorder %s77, %s79
    %p83 = scmp.eq.s32.totalorder %s22, 0
    %p84 = por %p82, %p83
    %p85 = scmp.ne.s32.totalorder %s77, %s79
    %p86 = scmp.eq.s32.totalorder %s27, 1
    %p87 = por %p85, %p86
    %p88 = scmp.ne.s32.totalorder %s79, %s80
    %p89 = scmp.eq.s32.totalorder %s27, 0
    %p90 = por %p88, %p89
    %p91 = scmp.ne.s32.totalorder %s79, %s80
    %p92 = scmp.eq.s32.totalorder %s28, 1
    %p93 = por %p91, %p92
    %p95 = scmp.ne.s32.totalorder %s80, %s94
    %p96 = scmp.eq.s32.totalorder %s28, 0
    %p97 = por %p95, %p96
    %s99 = sadd.s32 %s98, 1
    %p102 = scmp.eq.s32.totalorder %s22, 1
    %p103 = scmp.ne.s32.totalorder %s98, %s100
    %p104 = scmp.eq.s32.totalorder %s22, 0
    %p105 = por %p103, %p104
    %p106 = scmp.ne.s32.totalorder %s98, %s100
    %p107 = scmp.eq.s32.totalorder %s27, 1
    %p108 = por %p106, %p107
    %p109 = scmp.ne.s32.totalorder %s100, %s101
    %p110 = scmp.eq.s32.totalorder %s27, 0
    %p111 = por %p109, %p110
    %p112 = scmp.ne.s32.totalorder %s100, %s101
    %p113 = scmp.eq.s32.totalorder %s28, 1
    %p114 = por %p112, %p113
    %p116 = scmp.ne.s32.totalorder %s101, %s115
    %p117 = scmp.eq.s32.totalorder %s28, 0
    %p118 = por %p116, %p117
    %s120 = sadd.s32 %s119, 1
    %p123 = scmp.eq.s32.totalorder %s22, 1
    %p124 = scmp.ne.s32.totalorder %s119, %s121
    %p125 = scmp.eq.s32.totalorder %s22, 0
    %p126 = por %p124, %p125
    %p127 = scmp.ne.s32.totalorder %s119, %s121
    %p128 = scmp.eq.s32.totalorder %s27, 1
    %p129 = por %p127, %p128
    %p130 = scmp.ne.s32.totalorder %s121, %s122
    %p131 = scmp.eq.s32.totalorder %s27, 0
    %p132 = por %p130, %p131
    %p133 = scmp.ne.s32.totalorder %s121, %s122
    %p134 = scmp.eq.s32.totalorder %s28, 1
    %p135 = por %p133, %p134
    %p137 = scmp.ne.s32.totalorder %s122, %s136
    %p138 = scmp.eq.s32.totalorder %s28, 0
    %p139 = por %p137, %p138
    %s141 = sadd.s32 %s140, 1
    %p144 = scmp.eq.s32.totalorder %s22, 1
    %p145 = scmp.ne.s32.totalorder %s140, %s142
    %p146 = scmp.eq.s32.totalorder %s22, 0
    %p147 = por %p145, %p146
    %p148 = scmp.ne.s32.totalorder %s140, %s142
    %p149 = scmp.eq.s32.totalorder %s27, 1
    %p150 = por %p148, %p149
    %p151 = scmp.ne.s32.totalorder %s142, %s143
    %p152 = scmp.eq.s32.totalorder %s27, 0
    %p153 = por %p151, %p152
    %p154 = scmp.ne.s32.totalorder %s142, %s143
    %p155 = scmp.eq.s32.totalorder %s28, 1
    %p156 = por %p154, %p155
    %p158 = scmp.ne.s32.totalorder %s143, %s157
    %p159 = scmp.eq.s32.totalorder %s28, 0
    %p160 = por %p158, %p159
    %s162 = sadd.s32 %s161, 1
    %p165 = scmp.eq.s32.totalorder %s22, 1
    %p166 = scmp.ne.s32.totalorder %s161, %s163
    %p167 = scmp.eq.s32.totalorder %s22, 0
    %p168 = por %p166, %p167
    %p169 = scmp.ne.s32.totalorder %s161, %s163
    %p170 = scmp.eq.s32.totalorder %s27, 1
    %p171 = por %p169, %p170
    %p172 = scmp.ne.s32.totalorder %s163, %s164
    %p173 = scmp.eq.s32.totalorder %s27, 0
    %p174 = por %p172, %p173
    %p175 = scmp.ne.s32.totalorder %s163, %s164
    %p176 = scmp.eq.s32.totalorder %s28, 1
    %p177 = por %p175, %p176
    %p179 = scmp.ne.s32.totalorder %s164, %s178
    %p180 = scmp.eq.s32.totalorder %s28, 0
    %p181 = por %p179, %p180
    %s183 = sadd.s32 %s182, 1
    %p186 = scmp.eq.s32.totalorder %s22, 1
    %p187 = scmp.ne.s32.totalorder %s182, %s184
    %p188 = scmp.eq.s32.totalorder %s22, 0
    %p189 = por %p187, %p188
    %p190 = scmp.ne.s32.totalorder %s182, %s184
    %p191 = scmp.eq.s32.totalorder %s27, 1
    %p192 = por %p190, %p191
    %p193 = scmp.ne.s32.totalorder %s184, %s185
    %p194 = scmp.eq.s32.totalorder %s27, 0
    %p195 = por %p193, %p194
    %p196 = scmp.ne.s32.totalorder %s184, %s185
    %p197 = scmp.eq.s32.totalorder %s28, 1
    %p198 = por %p196, %p197
    %p200 = scmp.ne.s32.totalorder %s185, %s199
    %p201 = scmp.eq.s32.totalorder %s28, 0
    %p202 = por %p200, %p201
    %s204 = sadd.s32 %s203, 1
    %p207 = scmp.eq.s32.totalorder %s22, 1
    %p208 = scmp.ne.s32.totalorder %s203, %s205
    %p209 = scmp.eq.s32.totalorder %s22, 0
    %p210 = por %p208, %p209
    %p211 = scmp.ne.s32.totalorder %s203, %s205
    %p212 = scmp.eq.s32.totalorder %s27, 1
    %p213 = por %p211, %p212
    %p214 = scmp.ne.s32.totalorder %s205, %s206
    %p215 = scmp.eq.s32.totalorder %s27, 0
    %p216 = por %p214, %p215
    %p217 = scmp.ne.s32.totalorder %s205, %s206
    %p218 = scmp.eq.s32.totalorder %s28, 1
    %p219 = por %p217, %p218
    %p221 = scmp.ne.s32.totalorder %s206, %s220
    %p222 = scmp.eq.s32.totalorder %s28, 0
    %p223 = por %p221, %p222
    %s225 = sadd.s32 %s224, 1
    %p228 = scmp.eq.s32.totalorder %s22, 1
    %p229 = scmp.ne.s32.totalorder %s224, %s226
    %p230 = scmp.eq.s32.totalorder %s22, 0
    %p231 = por %p229, %p230
    %p232 = scmp.ne.s32.totalorder %s224, %s226
    %p233 = scmp.eq.s32.totalorder %s27, 1
    %p234 = por %p232, %p233
    %p235 = scmp.ne.s32.totalorder %s226, %s227
    %p236 = scmp.eq.s32.totalorder %s27, 0
    %p237 = por %p235, %p236
    %p238 = scmp.ne.s32.totalorder %s226, %s227
    %p239 = scmp.eq.s32.totalorder %s28, 1
    %p240 = por %p238, %p239
    %p242 = scmp.ne.s32.totalorder %s227, %s241
    %p243 = scmp.eq.s32.totalorder %s28, 0
    %p244 = por %p242, %p243
    %s246 = sadd.s32 %s245, 1
    %p249 = scmp.eq.s32.totalorder %s22, 1
    %p250 = scmp.ne.s32.totalorder %s245, %s247
    %p251 = scmp.eq.s32.totalorder %s22, 0
    %p252 = por %p250, %p251
    %p253 = scmp.ne.s32.totalorder %s245, %s247
    %p254 = scmp.eq.s32.totalorder %s27, 1
    %p255 = por %p253, %p254
    %p256 = scmp.ne.s32.totalorder %s247, %s248
    %p257 = scmp.eq.s32.totalorder %s27, 0
    %p258 = por %p256, %p257
    %p259 = scmp.ne.s32.totalorder %s247, %s248
    %p260 = scmp.eq.s32.totalorder %s28, 1
    %p261 = por %p259, %p260
    %p263 = scmp.ne.s32.totalorder %s248, %s262
    %p264 = scmp.eq.s32.totalorder %s28, 0
    %p265 = por %p263, %p264
    %s267 = sadd.s32 %s266, 1
    %p270 = scmp.eq.s32.totalorder %s22, 1
    %p271 = scmp.ne.s32.totalorder %s266, %s268
    %p272 = scmp.eq.s32.totalorder %s22, 0
    %p273 = por %p271, %p272
    %p274 = scmp.ne.s32.totalorder %s266, %s268
    %p275 = scmp.eq.s32.totalorder %s27, 1
    %p276 = por %p274, %p275
    %p277 = scmp.ne.s32.totalorder %s268, %s269
    %p278 = scmp.eq.s32.totalorder %s27, 0
    %p279 = por %p277, %p278
    %p280 = scmp.ne.s32.totalorder %s268, %s269
    %p281 = scmp.eq.s32.totalorder %s28, 1
    %p282 = por %p280, %p281
    %p284 = scmp.ne.s32.totalorder %s269, %s283
    %p285 = scmp.eq.s32.totalorder %s28, 0
    %p286 = por %p284, %p285
    %s288 = sadd.s32 %s287, 1
    %p291 = scmp.eq.s32.totalorder %s22, 1
    %p292 = scmp.ne.s32.totalorder %s287, %s289
    %p293 = scmp.eq.s32.totalorder %s22, 0
    %p294 = por %p292, %p293
    %p295 = scmp.ne.s32.totalorder %s287, %s289
    %p296 = scmp.eq.s32.totalorder %s27, 1
    %p297 = por %p295, %p296
    %p298 = scmp.ne.s32.totalorder %s289, %s290
    %p299 = scmp.eq.s32.totalorder %s27, 0
    %p300 = por %p298, %p299
    %p301 = scmp.ne.s32.totalorder %s289, %s290
    %p302 = scmp.eq.s32.totalorder %s28, 1
    %p303 = por %p301, %p302
    %p305 = scmp.ne.s32.totalorder %s290, %s304
    %p306 = scmp.eq.s32.totalorder %s28, 0
    %p307 = por %p305, %p306
    %s309 = sadd.s32 %s308, 1
    %p312 = scmp.eq.s32.totalorder %s22, 1
    %p313 = scmp.ne.s32.totalorder %s308, %s310
    %p314 = scmp.eq.s32.totalorder %s22, 0
    %p315 = por %p313, %p314
    %p316 = scmp.ne.s32.totalorder %s308, %s310
    %p317 = scmp.eq.s32.totalorder %s27, 1
    %p318 = por %p316, %p317
    %p319 = scmp.ne.s32.totalorder %s310, %s311
    %p320 = scmp.eq.s32.totalorder %s27, 0
    %p321 = por %p319, %p320
    %p322 = scmp.ne.s32.totalorder %s310, %s311
    %p323 = scmp.eq.s32.totalorder %s28, 1
    %p324 = por %p322, %p323
    %p326 = scmp.ne.s32.totalorder %s311, %s325
    %p327 = scmp.eq.s32.totalorder %s28, 0
    %p328 = por %p326, %p327
    %s329 = ssub.s32 %s22, %s29
    %p330 = scmp.eq.s32.totalorder %s329, 0
    %s332 = sadd.s32 %s331, 1
    %s333 = scalar_select %p330, %s331, %s332
    %p336 = pneg %p330
    %p337 = scmp.eq.s32.totalorder %s22, 1
    %p338 = por %p336, %p337
    %p339 = scmp.ne.s32.totalorder %s331, %s334
    %p340 = scmp.eq.s32.totalorder %s22, 0
    %p341 = por %p339, %p340
    %p342 = scmp.ne.s32.totalorder %s331, %s334
    %p343 = scmp.eq.s32.totalorder %s27, 1
    %p344 = por %p342, %p343
    %p345 = scmp.ne.s32.totalorder %s334, %s335
    %p346 = scmp.eq.s32.totalorder %s27, 0
    %p347 = por %p345, %p346
    %p348 = scmp.ne.s32.totalorder %s334, %s335
    %p349 = scmp.eq.s32.totalorder %s28, 1
    %p350 = por %p348, %p349
    %p352 = scmp.ne.s32.totalorder %s335, %s351
    %p353 = scmp.eq.s32.totalorder %s28, 0
    %p354 = por %p352, %p353
    %p355 = scmp.le.s32.totalorder 1, %s22
    %p356 = scmp.lt.s32.totalorder %s22, 3
    %p357 = pnand %p355, %p356
    %p358 = pneg %p357
    // Predicated region
    $region9: #{decoder_blue_forward.1} parent=5 // pred_check
      _
    $region10: #{decoder_blue_forward.1} parent=5 // pred_check_branch
      %360 = sbr.rel (%p357) target = $region12
    $region11: #{decoder_blue_forward.1} parent=5 // pred_region
      %s361 = ssub.s32 %s22, 1
      // Predicated region
      $region13: #{decoder_blue_forward.1} parent=11 // pred_check
        %p362 = pneg %p69
      $region14: #{decoder_blue_forward.1} parent=11 // pred_check_branch
        %364 = sbr.rel (%p362) target = $region16
      $region15: #{decoder_blue_forward.1} parent=11 // pred_region
        _
      $region16: #{decoder_blue_forward.1} parent=11 // pred_fallthru
        _
      // Predicated region
      $region17: #{decoder_blue_forward.1} parent=11 // pred_check
        %p365 = pneg %p90
      $region18: #{decoder_blue_forward.1} parent=11 // pred_check_branch
        %367 = sbr.rel (%p365) target = $region20
      $region19: #{decoder_blue_forward.1} parent=11 // pred_region
        _
      $region20: #{decoder_blue_forward.1} parent=11 // pred_fallthru
        _
      // Predicated region
      $region21: #{decoder_blue_forward.1} parent=11 // pred_check
        %p368 = pneg %p111
      $region22: #{decoder_blue_forward.1} parent=11 // pred_check_branch
        %370 = sbr.rel (%p368) target = $region24
      $region23: #{decoder_blue_forward.1} parent=11 // pred_region
        _
      $region24: #{decoder_blue_forward.1} parent=11 // pred_fallthru
        _
      // Predicated region
      $region25: #{decoder_blue_forward.1} parent=11 // pred_check
        %p371 = pneg %p132
      $region26: #{decoder_blue_forward.1} parent=11 // pred_check_branch
        %373 = sbr.rel (%p371) target = $region28
      $region27: #{decoder_blue_forward.1} parent=11 // pred_region
        _
      $region28: #{decoder_blue_forward.1} parent=11 // pred_fallthru
        _
      // Predicated region
      $region29: #{decoder_blue_forward.1} parent=11 // pred_check
        %p374 = pneg %p153
      $region30: #{decoder_blue_forward.1} parent=11 // pred_check_branch
        %376 = sbr.rel (%p374) target = $region32
      $region31: #{decoder_blue_forward.1} parent=11 // pred_region
        _
      $region32: #{decoder_blue_forward.1} parent=11 // pred_fallthru
        _
      // Predicated region
      $region33: #{decoder_blue_forward.1} parent=11 // pred_check
        %p377 = pneg %p174
      $region34: #{decoder_blue_forward.1} parent=11 // pred_check_branch
        %379 = sbr.rel (%p377) target = $region36
      $region35: #{decoder_blue_forward.1} parent=11 // pred_region
        _
      $region36: #{decoder_blue_forward.1} parent=11 // pred_fallthru
        _
      // Predicated region
      $region37: #{decoder_blue_forward.1} parent=11 // pred_check
        %p380 = pneg %p195
      $region38: #{decoder_blue_forward.1} parent=11 // pred_check_branch
        %382 = sbr.rel (%p380) target = $region40
      $region39: #{decoder_blue_forward.1} parent=11 // pred_region
        _
      $region40: #{decoder_blue_forward.1} parent=11 // pred_fallthru
        _
      // Predicated region
      $region41: #{decoder_blue_forward.1} parent=11 // pred_check
        %p383 = pneg %p216
      $region42: #{decoder_blue_forward.1} parent=11 // pred_check_branch
        %385 = sbr.rel (%p383) target = $region44
      $region43: #{decoder_blue_forward.1} parent=11 // pred_region
        _
      $region44: #{decoder_blue_forward.1} parent=11 // pred_fallthru
        _
      // Predicated region
      $region45: #{decoder_blue_forward.1} parent=11 // pred_check
        %p386 = pneg %p237
      $region46: #{decoder_blue_forward.1} parent=11 // pred_check_branch
        %388 = sbr.rel (%p386) target = $region48
      $region47: #{decoder_blue_forward.1} parent=11 // pred_region
        _
      $region48: #{decoder_blue_forward.1} parent=11 // pred_fallthru
        _
      // Predicated region
      $region49: #{decoder_blue_forward.1} parent=11 // pred_check
        %p389 = pneg %p258
      $region50: #{decoder_blue_forward.1} parent=11 // pred_check_branch
        %391 = sbr.rel (%p389) target = $region52
      $region51: #{decoder_blue_forward.1} parent=11 // pred_region
        _
      $region52: #{decoder_blue_forward.1} parent=11 // pred_fallthru
        _
      // Predicated region
      $region53: #{decoder_blue_forward.1} parent=11 // pred_check
        %p392 = pneg %p279
      $region54: #{decoder_blue_forward.1} parent=11 // pred_check_branch
        %394 = sbr.rel (%p392) target = $region56
      $region55: #{decoder_blue_forward.1} parent=11 // pred_region
        _
      $region56: #{decoder_blue_forward.1} parent=11 // pred_fallthru
        _
      // Predicated region
      $region57: #{decoder_blue_forward.1} parent=11 // pred_check
        %p395 = pneg %p300
      $region58: #{decoder_blue_forward.1} parent=11 // pred_check_branch
        %397 = sbr.rel (%p395) target = $region60
      $region59: #{decoder_blue_forward.1} parent=11 // pred_region
        _
      $region60: #{decoder_blue_forward.1} parent=11 // pred_fallthru
        _
      // Predicated region
      $region61: #{decoder_blue_forward.1} parent=11 // pred_check
        %p398 = pneg %p321
      $region62: #{decoder_blue_forward.1} parent=11 // pred_check_branch
        %400 = sbr.rel (%p398) target = $region64
      $region63: #{decoder_blue_forward.1} parent=11 // pred_region
        _
      $region64: #{decoder_blue_forward.1} parent=11 // pred_fallthru
        _
    $region12: #{decoder_blue_forward.1} parent=5 // pred_fallthru
      _
    %p401 = scmp.lt.s32.totalorder %s22, 2
    // Predicated region
    $region65: #{decoder_blue_forward.1} parent=5 // pred_check
      %p402 = pneg %p401
    $region66: #{decoder_blue_forward.1} parent=5 // pred_check_branch
      %404 = sbr.rel (%p402) target = $region68
    $region67: #{decoder_blue_forward.1} parent=5 // pred_region
      // Predicated region
      $region69: #{decoder_blue_forward.1} parent=67 // pred_check
        %p405 = pneg %p42
      $region70: #{decoder_blue_forward.1} parent=67 // pred_check_branch
        %407 = sbr.rel (%p405) target = $region72
      $region71: #{decoder_blue_forward.1} parent=67 // pred_region
        %p408 = scmp.lt.s32.totalorder %s22, 1
        %s409 = scalar_select %p408, %s22, 1
        %s410 = scalar_lea.vmem %s0, %s409
      $region72: #{decoder_blue_forward.1} parent=67 // pred_fallthru
        _
    $region68: #{decoder_blue_forward.1} parent=5 // pred_fallthru
      _
    %p411 = scmp.le.s32.totalorder 1, %s22
    %p412 = scmp.lt.s32.totalorder %s22, 3
    %p413 = pnand %p411, %p412
    %p414 = pneg %p413
    // Predicated region
    $region73: #{decoder_blue_forward.1} parent=5 // pred_check
      _
    $region74: #{decoder_blue_forward.1} parent=5 // pred_check_branch
      %416 = sbr.rel (%p413) target = $region76
    $region75: #{decoder_blue_forward.1} parent=5 // pred_region
      %s417 = ssub.s32 %s22, 1
      %p418 = scmp.lt.s32.totalorder %s27, 1
      %s419 = scalar_select %p418, %s27, 1
      %s420 = scalar_lea.vmem %s0, %s419
      %p421 = pneg %p48
      %p422 = pneg %p45
      %p423 = pneg %p69
      %p424 = pneg %p66
      %p425 = pneg %p90
      %p426 = pneg %p87
      %p427 = pneg %p111
      %p428 = pneg %p108
      %p429 = pneg %p132
      %p430 = pneg %p129
      %p431 = pneg %p153
      %p432 = pneg %p150
      %p433 = pneg %p174
      %p434 = pneg %p171
      %p435 = pneg %p195
      %p436 = pneg %p192
      %p437 = pneg %p216
      %p438 = pneg %p213
      %p439 = pneg %p237
      %p440 = pneg %p234
      %p441 = pneg %p258
      %p442 = pneg %p255
      %p443 = pneg %p279
      %p444 = pneg %p276
      %p445 = pneg %p300
      %p446 = pneg %p297
      %p447 = pneg %p321
      %p448 = pneg %p318
      %p449 = pneg %p347
      %p450 = pneg %p344
      %p451 = scmp.lt.s32.totalorder %s27, 1
      %s452 = scalar_select %p451, %s27, 1
      %s453 = smul.addr %s452, 14
      %s454 = scalar_lea.vmem %s14, %s453
      %p455 = scmp.lt.s32.totalorder %s27, 1
      %s456 = scalar_select %p455, %s27, 1
      %s457 = scalar_lea.vmem %s0, %s456
      %p458 = scmp.lt.s32.totalorder %s27, 1
      %s459 = scalar_select %p458, %s27, 1
      %s460 = smul.addr %s459, 14
      %s461 = scalar_lea.vmem %s14, %s460
      %v462 = vld [vmem:[%s457] sm:$0x1]
      %v463 = vld [vmem:[%s1] sm:$0xff]
      %v464 = vld [vmem:[%s1 + $0x8] sm:$0xff]
      %v465 = vld [vmem:[%s1 + $0x10] sm:$0xff]
      %v466 = vld [vmem:[%s1 + $0x18] sm:$0xff]
      %v467 = vld [vmem:[%s1 + $0x20] sm:$0xff]
      %v468 = vld [vmem:[%s1 + $0x28] sm:$0xff]
      %v469 = vld [vmem:[%s1 + $0x30] sm:$0xff]
      %v470 = vld [vmem:[%s1 + $0x38] sm:$0xff]
      %v471 = vld [vmem:[%s1 + $0x40] sm:$0xff]
      %v472 = vld [vmem:[%s1 + $0x48] sm:$0xff]
      %v473 = vld [vmem:[%s1 + $0x50] sm:$0xff]
      %v474 = vld [vmem:[%s1 + $0x58] sm:$0xff]
      %v475 = vld [vmem:[%s1 + $0x60] sm:$0xff]
      %v476 = vld [vmem:[%s1 + $0x68] sm:$0xff]
      %v477 = vld [vmem:[%s1 + $0x70] sm:$0xff]
      %v478 = vld [vmem:[%s1 + $0x78] sm:$0xff]
      %v479 = vld [vmem:[%s2] sm:$0xf]
      %v481 = vlaneseq
      %v482 = vshrl.u32 %v481, 7
      %v483 = vsub.s32 0, %v482
      %v484 = vrot.slane %v479, %v483
      %v485 = vlaneseq
      %v486 = vshrl.u32 %v485, 7
      %v487 = vsub.s32 1, %v486
      %v488 = vrot.slane %v479, %v487
      %v489 = vlaneseq
      %v490 = vshrl.u32 %v489, 7
      %v491 = vsub.s32 2, %v490
      %v492 = vrot.slane %v479, %v491
      %v493 = vlaneseq
      %v494 = vshrl.u32 %v493, 7
      %v495 = vsub.s32 3, %v494
      %v496 = vrot.slane %v479, %v495
      %vm501 = vcmask 261120
      %v503 = vsel %vm501, %v462, 0
      %505 = vmatprep.subr.mxu0 %v464
      %506 = vmatpush1.msra.mxu0 %v463
      %507 = vmatprep.subr.mxu0 %v468
      %508 = vmatpush1.msra.mxu0 %v467
      %509 = vmatprep.subr.mxu0 %v472
      %510 = vmatpush1.msra.mxu0 %v471
      %511 = vmatprep.subr.mxu0 %v476
      %512 = vmatpush1.msra.mxu0 %v475
      %513 = vmatprep.subr.mxu0 0.0
      %514 = vmatpush1.msra.mxu0 0.0
      %515 = vmatprep.subr.mxu0 0.0
      %516 = vmatpush1.msra.mxu0 0.0
      %517 = vmatprep.subr.mxu0 0.0
      %518 = vmatpush1.msra.mxu0 0.0
      %519 = vmatprep.subr.mxu0 0.0
      %520 = vmatpush1.msra.mxu0 0.0
      %521 = vmatprep.subr.mxu0 0.0
      %522 = vmatpush1.msra.mxu0 0.0
      %523 = vmatprep.subr.mxu0 0.0
      %524 = vmatpush1.msra.mxu0 0.0
      %525 = vmatprep.subr.mxu0 0.0
      %526 = vmatpush1.msra.mxu0 0.0
      %527 = vmatprep.subr.mxu0 0.0
      %528 = vmatpush1.msra.mxu0 0.0
      %529 = vmatprep.subr.mxu0 0.0
      %530 = vmatpush1.msra.mxu0 0.0
      %531 = vmatprep.subr.mxu0 0.0
      %532 = vmatpush1.msra.mxu0 0.0
      %533 = vmatprep.subr.mxu0 0.0
      %534 = vmatpush1.msra.mxu0 0.0
      %535 = vmatprep.subr.mxu0 0.0
      %536 = vmatpush1.msra.mxu0 0.0
      %537 = vmatprep.subr.mxu0 0.0
      %538 = vmatpush1.msra.mxu0 0.0
      %539 = vmatprep.subr.mxu0 0.0
      %540 = vmatpush1.msra.mxu0 0.0
      %541 = vmatprep.subr.mxu0 0.0
      %542 = vmatpush1.msra.mxu0 0.0
      %543 = vmatprep.subr.mxu0 0.0
      %544 = vmatpush1.msra.mxu0 0.0
      %545 = vmatprep.subr.mxu0 0.0
      %546 = vmatpush1.msra.mxu0 0.0
      %547 = vmatprep.subr.mxu0 0.0
      %548 = vmatpush1.msra.mxu0 0.0
      %549 = vmatprep.subr.mxu0 0.0
      %550 = vmatpush1.msra.mxu0 0.0
      %551 = vmatprep.subr.mxu0 0.0
      %552 = vmatpush1.msra.mxu0 0.0
      %553 = vmatprep.subr.mxu0 0.0
      %554 = vmatpush1.msra.mxu0 0.0
      %555 = vmatprep.subr.mxu0 0.0
      %556 = vmatpush1.msra.mxu0 0.0
      %557 = vmatprep.subr.mxu0 0.0
      %558 = vmatpush1.msra.mxu0 0.0
      %559 = vmatprep.subr.mxu0 0.0
      %560 = vmatpush1.msra.mxu0 0.0
      %561 = vmatprep.subr.mxu0 0.0
      %562 = vmatpush1.msra.mxu0 0.0
      %563 = vmatprep.subr.mxu0 0.0
      %564 = vmatpush1.msra.mxu0 0.0
      %565 = vmatprep.subr.mxu0 0.0
      %566 = vmatpush1.msra.mxu0 0.0
      %567 = vmatprep.subr.mxu0 0.0
      %568 = vmatpush1.msra.mxu0 0.0
      %569 = vmatprep.mubr.f32.mxu0 0.0
      %570 = vmatmul.mubr.f32.gmra.mrb[0].mxu0 %v503
      %v571 = vpop.f32.mrb[0].mxu0
      %v572 = vadd.f32 %v484, %v571
      %v573 = vpop.f32.mrb[0].mxu0
      %v574 = vadd.f32 %v488, %v573
      %575 = vdwg.mxu0
      %576 = vmatprep.subr.mxu0 %v466
      %577 = vmatpush1.msra.mxu0 %v465
      %578 = vmatprep.subr.mxu0 %v470
      %579 = vmatpush1.msra.mxu0 %v469
      %580 = vmatprep.subr.mxu0 %v474
      %581 = vmatpush1.msra.mxu0 %v473
      %582 = vmatprep.subr.mxu0 %v478
      %583 = vmatpush1.msra.mxu0 %v477
      %584 = vmatprep.subr.mxu0 0.0
      %585 = vmatpush1.msra.mxu0 0.0
      %586 = vmatprep.subr.mxu0 0.0
      %587 = vmatpush1.msra.mxu0 0.0
      %588 = vmatprep.subr.mxu0 0.0
      %589 = vmatpush1.msra.mxu0 0.0
      %590 = vmatprep.subr.mxu0 0.0
      %591 = vmatpush1.msra.mxu0 0.0
      %592 = vmatprep.subr.mxu0 0.0
      %593 = vmatpush1.msra.mxu0 0.0
      %594 = vmatprep.subr.mxu0 0.0
      %595 = vmatpush1.msra.mxu0 0.0
      %596 = vmatprep.subr.mxu0 0.0
      %597 = vmatpush1.msra.mxu0 0.0
      %598 = vmatprep.subr.mxu0 0.0
      %599 = vmatpush1.msra.mxu0 0.0
      %600 = vmatprep.subr.mxu0 0.0
      %601 = vmatpush1.msra.mxu0 0.0
      %602 = vmatprep.subr.mxu0 0.0
      %603 = vmatpush1.msra.mxu0 0.0
      %604 = vmatprep.subr.mxu0 0.0
      %605 = vmatpush1.msra.mxu0 0.0
      %606 = vmatprep.subr.mxu0 0.0
      %607 = vmatpush1.msra.mxu0 0.0
      %608 = vmatprep.subr.mxu0 0.0
      %609 = vmatpush1.msra.mxu0 0.0
      %610 = vmatprep.subr.mxu0 0.0
      %611 = vmatpush1.msra.mxu0 0.0
      %612 = vmatprep.subr.mxu0 0.0
      %613 = vmatpush1.msra.mxu0 0.0
      %614 = vmatprep.subr.mxu0 0.0
      %615 = vmatpush1.msra.mxu0 0.0
      %616 = vmatprep.subr.mxu0 0.0
      %617 = vmatpush1.msra.mxu0 0.0
      %618 = vmatprep.subr.mxu0 0.0
      %619 = vmatpush1.msra.mxu0 0.0
      %620 = vmatprep.subr.mxu0 0.0
      %621 = vmatpush1.msra.mxu0 0.0
      %622 = vmatprep.subr.mxu0 0.0
      %623 = vmatpush1.msra.mxu0 0.0
      %624 = vmatprep.subr.mxu0 0.0
      %625 = vmatpush1.msra.mxu0 0.0
      %626 = vmatprep.subr.mxu0 0.0
      %627 = vmatpush1.msra.mxu0 0.0
      %628 = vmatprep.subr.mxu0 0.0
      %629 = vmatpush1.msra.mxu0 0.0
      %630 = vmatprep.subr.mxu0 0.0
      %631 = vmatpush1.msra.mxu0 0.0
      %632 = vmatprep.subr.mxu0 0.0
      %633 = vmatpush1.msra.mxu0 0.0
      %634 = vmatprep.subr.mxu0 0.0
      %635 = vmatpush1.msra.mxu0 0.0
      %636 = vmatprep.subr.mxu0 0.0
      %637 = vmatpush1.msra.mxu0 0.0
      %638 = vmatprep.subr.mxu0 0.0
      %639 = vmatpush1.msra.mxu0 0.0
      %640 = vmatprep.mubr.f32.mxu0 0.0
      %641 = vmatmul.mubr.f32.gmra.mrb[0].mxu0 %v503
      %v642 = vpop.f32.mrb[0].mxu0
      %v643 = vadd.f32 %v492, %v642
      %v644 = vpop.f32.mrb[0].mxu0
      %v645 = vadd.f32 %v496, %v644
      %646 = vdwg.mxu0
      %vm647 = vcmask 221184
      %648 = vst.msk [vmem:[#allocation2] sm:$0x1] %vm647, %v572
      %650 = vrot.lane.b32.xlu0 %v572, 100
      %v651 = vpop.permute.xlu0 %650
      %653 = vst.msk [vmem:[#allocation2 + $0x1] sm:$0x1] %vm647, %v651
      %654 = vrot.lane.b32.xlu0 %v572, 72
      %v655 = vpop.permute.xlu0 %654
      %657 = vst.msk [vmem:[#allocation2 + $0x2] sm:$0x1] %vm647, %v655
      %658 = vrot.lane.b32.xlu0 %v572, 44
      %v659 = vpop.permute.xlu0 %658
      %661 = vst.msk [vmem:[#allocation2 + $0x3] sm:$0x1] %vm647, %v659
      %663 = vrot.lane.b32.xlu0 %v572, 16
      %v664 = vpop.permute.xlu0 %663
      %665 = vrot.lane.b32.xlu0 %v574, 16
      %v666 = vpop.permute.xlu0 %665
      %vm667 = vcmask 130048
      %v668 = vsel %vm667, %v664, %v666
      %670 = vst.msk [vmem:[#allocation2 + $0x4] sm:$0x1] %vm647, %v668
      %671 = vrot.lane.b32.xlu0 %v574, 116
      %v672 = vpop.permute.xlu0 %671
      %674 = vst.msk [vmem:[#allocation2 + $0x5] sm:$0x1] %vm647, %v672
      %675 = vrot.lane.b32.xlu0 %v574, 88
      %v676 = vpop.permute.xlu0 %675
      %678 = vst.msk [vmem:[#allocation2 + $0x6] sm:$0x1] %vm647, %v676
      %679 = vrot.lane.b32.xlu0 %v574, 60
      %v680 = vpop.permute.xlu0 %679
      %682 = vst.msk [vmem:[#allocation2 + $0x7] sm:$0x1] %vm647, %v680
      %683 = vrot.lane.b32.xlu0 %v574, 32
      %v684 = vpop.permute.xlu0 %683
      %686 = vst.msk [vmem:[#allocation2 + $0x8] sm:$0x1] %vm647, %v684
      %688 = vrot.lane.b32.xlu0 %v574, 4
      %v689 = vpop.permute.xlu0 %688
      %690 = vrot.lane.b32.xlu0 %v643, 4
      %v691 = vpop.permute.xlu0 %690
      %vm692 = vcmask 31744
      %v693 = vsel %vm692, %v689, %v691
      %695 = vst.msk [vmem:[#allocation2 + $0x9] sm:$0x1] %vm647, %v693
      %696 = vrot.lane.b32.xlu0 %v643, 104
      %v697 = vpop.permute.xlu0 %696
      %699 = vst.msk [vmem:[#allocation2 + $0xa] sm:$0x1] %vm647, %v697
      %700 = vrot.lane.b32.xlu0 %v643, 76
      %v701 = vpop.permute.xlu0 %700
      %703 = vst.msk [vmem:[#allocation2 + $0xb] sm:$0x1] %vm647, %v701
      %704 = vrot.lane.b32.xlu0 %v643, 48
      %v705 = vpop.permute.xlu0 %704
      %707 = vst.msk [vmem:[#allocation2 + $0xc] sm:$0x1] %vm647, %v705
      %709 = vrot.lane.b32.xlu0 %v643, 20
      %v710 = vpop.permute.xlu0 %709
      %711 = vrot.lane.b32.xlu0 %v645, 20
      %v712 = vpop.permute.xlu0 %711
      %vm713 = vcmask 162816
      %v714 = vsel %vm713, %v710, %v712
      %716 = vst.msk [vmem:[#allocation2 + $0xd] sm:$0x1] %vm647, %v714
      %717 = vrot.lane.b32.xlu0 %v645, 120
      %v718 = vpop.permute.xlu0 %717
      %720 = vst.msk [vmem:[#allocation2 + $0xe] sm:$0x1] %vm647, %v718
      %721 = vrot.lane.b32.xlu0 %v645, 92
      %v722 = vpop.permute.xlu0 %721
      %724 = vst.msk [vmem:[#allocation2 + $0xf] sm:$0x1] %vm647, %v722
      %v725 = vld [vmem:[#allocation2] sm:$0xff]
      %v726 = vld [vmem:[#allocation2 + $0x8] sm:$0xff]
      %729 = vrot.lane.b32.xlu0 %v725, 1
      %v730 = vpop.permute.xlu0 %729
      %731 = vrot.lane.b32.xlu0 %v726, 1
      %v732 = vpop.permute.xlu0 %731
      %vm735 = vcmask 7168
      %v736 = vsel %vm735, 0.0, %v730
      %v737 = vsel %vm735, 0.0, %v732
      %v738 = vld [vmem:[%s3] sm:$0xff]
      %v739 = vld [vmem:[%s3 + $0x8] sm:$0xff]
      %v740 = vld [vmem:[%s3 + $0x10] sm:$0xff]
      %v741 = vld [vmem:[%s3 + $0x18] sm:$0xff]
      %v742 = vld [vmem:[%s3 + $0x20] sm:$0xff]
      %v743 = vld [vmem:[%s3 + $0x28] sm:$0xff]
      %v744 = vld [vmem:[%s3 + $0x30] sm:$0xff]
      %v745 = vld [vmem:[%s3 + $0x38] sm:$0xff]
      %v746 = vld [vmem:[%s4] sm:$0xff]
      %v747 = vld [vmem:[%s4 + $0x8] sm:$0xff]
      %v748 = vld [vmem:[%s4 + $0x10] sm:$0xff]
      %v749 = vld [vmem:[%s4 + $0x18] sm:$0xff]
      %v750 = vld [vmem:[%s4 + $0x20] sm:$0xff]
      %v751 = vld [vmem:[%s4 + $0x28] sm:$0xff]
      %v752 = vld [vmem:[%s4 + $0x30] sm:$0xff]
      %v753 = vld [vmem:[%s4 + $0x38] sm:$0xff]
      %v755 = vsel %vm667, %v746, 0
      %v758 = vsel %vm667, %v747, 0
      %v761 = vsel %vm667, %v748, 0
      %v764 = vsel %vm667, %v749, 0
      %v767 = vsel %vm667, %v750, 0
      %v770 = vsel %vm667, %v751, 0
      %v773 = vsel %vm667, %v752, 0
      %v776 = vsel %vm667, %v753, 0
      %778 = vmatprep.subr.mxu0 0.0
      %779 = vmatpush1.msra.mxu0 %v736
      %780 = vmatprep.subr.mxu0 0.0
      %781 = vmatpush1.msra.mxu0 %v737
      %782 = vmatprep.subr.mxu0 0.0
      %783 = vmatpush1.msra.mxu0 0.0
      %784 = vmatprep.subr.mxu0 0.0
      %785 = vmatpush1.msra.mxu0 0.0
      %786 = vmatprep.subr.mxu0 0.0
      %787 = vmatpush1.msra.mxu0 0.0
      %788 = vmatprep.subr.mxu0 0.0
      %789 = vmatpush1.msra.mxu0 0.0
      %790 = vmatprep.subr.mxu0 0.0
      %791 = vmatpush1.msra.mxu0 0.0
      %792 = vmatprep.subr.mxu0 0.0
      %793 = vmatpush1.msra.mxu0 0.0
      %794 = vmatprep.subr.mxu0 0.0
      %795 = vmatpush1.msra.mxu0 0.0
      %796 = vmatprep.subr.mxu0 0.0
      %797 = vmatpush1.msra.mxu0 0.0
      %798 = vmatprep.subr.mxu0 0.0
      %799 = vmatpush1.msra.mxu0 0.0
      %800 = vmatprep.subr.mxu0 0.0
      %801 = vmatpush1.msra.mxu0 0.0
      %802 = vmatprep.subr.mxu0 0.0
      %803 = vmatpush1.msra.mxu0 0.0
      %804 = vmatprep.subr.mxu0 0.0
      %805 = vmatpush1.msra.mxu0 0.0
      %806 = vmatprep.subr.mxu0 0.0
      %807 = vmatpush1.msra.mxu0 0.0
      %808 = vmatprep.subr.mxu0 0.0
      %809 = vmatpush1.msra.mxu0 0.0
      %810 = vmatprep.subr.mxu0 0.0
      %811 = vmatpush1.msra.mxu0 0.0
      %812 = vmatprep.subr.mxu0 0.0
      %813 = vmatpush1.msra.mxu0 0.0
      %814 = vmatprep.subr.mxu0 0.0
      %815 = vmatpush1.msra.mxu0 0.0
      %816 = vmatprep.subr.mxu0 0.0
      %817 = vmatpush1.msra.mxu0 0.0
      %818 = vmatprep.subr.mxu0 0.0
      %819 = vmatpush1.msra.mxu0 0.0
      %820 = vmatprep.subr.mxu0 0.0
      %821 = vmatpush1.msra.mxu0 0.0
      %822 = vmatprep.subr.mxu0 0.0
      %823 = vmatpush1.msra.mxu0 0.0
      %824 = vmatprep.subr.mxu0 0.0
      %825 = vmatpush1.msra.mxu0 0.0
      %826 = vmatprep.subr.mxu0 0.0
      %827 = vmatpush1.msra.mxu0 0.0
      %828 = vmatprep.subr.mxu0 0.0
      %829 = vmatpush1.msra.mxu0 0.0
      %830 = vmatprep.subr.mxu0 0.0
      %831 = vmatpush1.msra.mxu0 0.0
      %832 = vmatprep.subr.mxu0 0.0
      %833 = vmatpush1.msra.mxu0 0.0
      %834 = vmatprep.subr.mxu0 0.0
      %835 = vmatpush1.msra.mxu0 0.0
      %836 = vmatprep.subr.mxu0 0.0
      %837 = vmatpush1.msra.mxu0 0.0
      %838 = vmatprep.subr.mxu0 0.0
      %839 = vmatpush1.msra.mxu0 0.0
      %840 = vmatprep.subr.mxu0 0.0
      %841 = vmatpush1.msra.mxu0 0.0
      %842 = vmatprep.mubr.f32.mxu0 0.0
      %843 = vmatmul.mubr.f32.gmra.mrb[0].mxu0 %v755
      %v844 = vpop.f32.mrb[0].mxu0
      %v845 = vadd.f32 0.0, %v844
      %v846 = vpop.f32.mrb[0].mxu0
      %847 = vmatprep.mubr.f32.mxu0 0.0
      %848 = vmatmul.mubr.f32.gmra.mrb[0].mxu0 %v758
      %v849 = vpop.f32.mrb[0].mxu0
      %v850 = vadd.f32 0.0, %v849
      %v851 = vpop.f32.mrb[0].mxu0
      %852 = vmatprep.mubr.f32.mxu0 0.0
      %853 = vmatmul.mubr.f32.gmra.mrb[0].mxu0 %v761
      %v854 = vpop.f32.mrb[0].mxu0
      %v855 = vadd.f32 0.0, %v854
      %v856 = vpop.f32.mrb[0].mxu0
      %857 = vmatprep.mubr.f32.mxu0 0.0
      %858 = vmatmul.mubr.f32.gmra.mrb[0].mxu0 %v764
      %v859 = vpop.f32.mrb[0].mxu0
      %v860 = vadd.f32 0.0, %v859
      %v861 = vpop.f32.mrb[0].mxu0
      %862 = vmatprep.mubr.f32.mxu0 0.0
      %863 = vmatmul.mubr.f32.gmra.mrb[0].mxu0 %v767
      %v864 = vpop.f32.mrb[0].mxu0
      %v865 = vadd.f32 0.0, %v864
      %v866 = vpop.f32.mrb[0].mxu0
      %867 = vmatprep.mubr.f32.mxu0 0.0
      %868 = vmatmul.mubr.f32.gmra.mrb[0].mxu0 %v770
      %v869 = vpop.f32.mrb[0].mxu0
      %v870 = vadd.f32 0.0, %v869
      %v871 = vpop.f32.mrb[0].mxu0
      %872 = vmatprep.mubr.f32.mxu0 0.0
      %873 = vmatmul.mubr.f32.gmra.mrb[0].mxu0 %v773
      %v874 = vpop.f32.mrb[0].mxu0
      %v875 = vadd.f32 0.0, %v874
      %v876 = vpop.f32.mrb[0].mxu0
      %877 = vmatprep.mubr.f32.mxu0 0.0
      %878 = vmatmul.mubr.f32.gmra.mrb[0].mxu0 %v776
      %v879 = vpop.f32.mrb[0].mxu0
      %v880 = vadd.f32 0.0, %v879
      %v881 = vpop.f32.mrb[0].mxu0
      %882 = vdwg.mxu0
      %v884 = vsel %vm667, %v738, 0
      %v887 = vsel %vm667, %v739, 0
      %v890 = vsel %vm667, %v740, 0
      %v893 = vsel %vm667, %v741, 0
      %v896 = vsel %vm667, %v742, 0
      %v899 = vsel %vm667, %v743, 0
      %v902 = vsel %vm667, %v744, 0
      %v905 = vsel %vm667, %v745, 0
      %907 = vmatprep.subr.mxu0 0.0
      %908 = vmatpush1.msra.mxu0 %v725
      %909 = vmatprep.subr.mxu0 0.0
      %910 = vmatpush1.msra.mxu0 %v726
      %911 = vmatprep.subr.mxu0 0.0
      %912 = vmatpush1.msra.mxu0 0.0
      %913 = vmatprep.subr.mxu0 0.0
      %914 = vmatpush1.msra.mxu0 0.0
      %915 = vmatprep.subr.mxu0 0.0
      %916 = vmatpush1.msra.mxu0 0.0
      %917 = vmatprep.subr.mxu0 0.0
      %918 = vmatpush1.msra.mxu0 0.0
      %919 = vmatprep.subr.mxu0 0.0
      %920 = vmatpush1.msra.mxu0 0.0
      %921 = vmatprep.subr.mxu0 0.0
      %922 = vmatpush1.msra.mxu0 0.0
      %923 = vmatprep.subr.mxu0 0.0
      %924 = vmatpush1.msra.mxu0 0.0
      %925 = vmatprep.subr.mxu0 0.0
      %926 = vmatpush1.msra.mxu0 0.0
      %927 = vmatprep.subr.mxu0 0.0
      %928 = vmatpush1.msra.mxu0 0.0
      %929 = vmatprep.subr.mxu0 0.0
      %930 = vmatpush1.msra.mxu0 0.0
      %931 = vmatprep.subr.mxu0 0.0
      %932 = vmatpush1.msra.mxu0 0.0
      %933 = vmatprep.subr.mxu0 0.0
      %934 = vmatpush1.msra.mxu0 0.0
      %935 = vmatprep.subr.mxu0 0.0
      %936 = vmatpush1.msra.mxu0 0.0
      %937 = vmatprep.subr.mxu0 0.0
      %938 = vmatpush1.msra.mxu0 0.0
      %939 = vmatprep.subr.mxu0 0.0
      %940 = vmatpush1.msra.mxu0 0.0
      %941 = vmatprep.subr.mxu0 0.0
      %942 = vmatpush1.msra.mxu0 0.0
      %943 = vmatprep.subr.mxu0 0.0
      %944 = vmatpush1.msra.mxu0 0.0
      %945 = vmatprep.subr.mxu0 0.0
      %946 = vmatpush1.msra.mxu0 0.0
      %947 = vmatprep.subr.mxu0 0.0
      %948 = vmatpush1.msra.mxu0 0.0
      %949 = vmatprep.subr.mxu0 0.0
      %950 = vmatpush1.msra.mxu0 0.0
      %951 = vmatprep.subr.mxu0 0.0
      %952 = vmatpush1.msra.mxu0 0.0
      %953 = vmatprep.subr.mxu0 0.0
      %954 = vmatpush1.msra.mxu0 0.0
      %955 = vmatprep.subr.mxu0 0.0
      %956 = vmatpush1.msra.mxu0 0.0
      %957 = vmatprep.subr.mxu0 0.0
      %958 = vmatpush1.msra.mxu0 0.0
      %959 = vmatprep.subr.mxu0 0.0
      %960 = vmatpush1.msra.mxu0 0.0
      %961 = vmatprep.subr.mxu0 0.0
      %962 = vmatpush1.msra.mxu0 0.0
      %963 = vmatprep.subr.mxu0 0.0
      %964 = vmatpush1.msra.mxu0 0.0
      %965 = vmatprep.subr.mxu0 0.0
      %966 = vmatpush1.msra.mxu0 0.0
      %967 = vmatprep.subr.mxu0 0.0
      %968 = vmatpush1.msra.mxu0 0.0
      %969 = vmatprep.subr.mxu0 0.0
      %970 = vmatpush1.msra.mxu0 0.0
      %971 = vmatprep.mubr.f32.mxu0 0.0
      %972 = vmatmul.mubr.f32.gmra.mrb[0].mxu0 %v884
      %v973 = vpop.f32.mrb[0].mxu0
      %v974 = vadd.f32 %v845, %v973
      %v975 = vpop.f32.mrb[0].mxu0
      %976 = vmatprep.mubr.f32.mxu0 0.0
      %977 = vmatmul.mubr.f32.gmra.mrb[0].mxu0 %v887
      %v978 = vpop.f32.mrb[0].mxu0
      %v979 = vadd.f32 %v850, %v978
      %v980 = vpop.f32.mrb[0].mxu0
      %981 = vmatprep.mubr.f32.mxu0 0.0
      %982 = vmatmul.mubr.f32.gmra.mrb[0].mxu0 %v890
      %v983 = vpop.f32.mrb[0].mxu0
      %v984 = vadd.f32 %v855, %v983
      %v985 = vpop.f32.mrb[0].mxu0
      %986 = vmatprep.mubr.f32.mxu0 0.0
      %987 = vmatmul.mubr.f32.gmra.mrb[0].mxu0 %v893
      %v988 = vpop.f32.mrb[0].mxu0
      %v989 = vadd.f32 %v860, %v988
      %v990 = vpop.f32.mrb[0].mxu0
      %991 = vmatprep.mubr.f32.mxu0 0.0
      %992 = vmatmul.mubr.f32.gmra.mrb[0].mxu0 %v896
      %v993 = vpop.f32.mrb[0].mxu0
      %v994 = vadd.f32 %v865, %v993
      %v995 = vpop.f32.mrb[0].mxu0
      %996 = vmatprep.mubr.f32.mxu0 0.0
      %997 = vmatmul.mubr.f32.gmra.mrb[0].mxu0 %v899
      %v998 = vpop.f32.mrb[0].mxu0
      %v999 = vadd.f32 %v870, %v998
      %v1000 = vpop.f32.mrb[0].mxu0
      %1001 = vmatprep.mubr.f32.mxu0 0.0
      %1002 = vmatmul.mubr.f32.gmra.mrb[0].mxu0 %v902
      %v1003 = vpop.f32.mrb[0].mxu0
      %v1004 = vadd.f32 %v875, %v1003
      %v1005 = vpop.f32.mrb[0].mxu0
      %1006 = vmatprep.mubr.f32.mxu0 0.0
      %1007 = vmatmul.mubr.f32.gmra.mrb[0].mxu0 %v905
      %v1008 = vpop.f32.mrb[0].mxu0
      %v1009 = vadd.f32 %v880, %v1008
      %v1010 = vpop.f32.mrb[0].mxu0
      %1011 = vdwg.mxu0
      %v1012 = vld [vmem:[%s5] sm:$0xff]
      %v1013 = vld [vmem:[%s5 + $0x8] sm:$0xff]
      %v1014 = vld [vmem:[%s5 + $0x10] sm:$0xff]
      %v1015 = vld [vmem:[%s5 + $0x18] sm:$0xff]
      %v1016 = vld [vmem:[%s5 + $0x20] sm:$0xff]
      %v1017 = vld [vmem:[%s5 + $0x28] sm:$0xff]
      %v1018 = vld [vmem:[%s5 + $0x30] sm:$0xff]
      %v1019 = vld [vmem:[%s5 + $0x38] sm:$0xff]
      %1021 = vset.pattern.permute.xlu0 0
      %1022 = vperm.xlu0 %1021, %v1012
      %v1023 = vpop.permute.xlu0 %1022
      %1026 = vset.pattern.permute.xlu0 0
      %1027 = vperm.xlu0 %1026, %v1013
      %v1028 = vpop.permute.xlu0 %1027
      %1031 = vset.pattern.permute.xlu0 0
      %1032 = vperm.xlu0 %1031, %v1014
      %v1033 = vpop.permute.xlu0 %1032
      %1036 = vset.pattern.permute.xlu0 0
      %1037 = vperm.xlu0 %1036, %v1015
      %v1038 = vpop.permute.xlu0 %1037
      %1041 = vset.pattern.permute.xlu0 0
      %1042 = vperm.xlu0 %1041, %v1016
      %v1043 = vpop.permute.xlu0 %1042
      %1046 = vset.pattern.permute.xlu0 0
      %1047 = vperm.xlu0 %1046, %v1017
      %v1048 = vpop.permute.xlu0 %1047
      %1051 = vset.pattern.permute.xlu0 0
      %1052 = vperm.xlu0 %1051, %v1018
      %v1053 = vpop.permute.xlu0 %1052
      %1056 = vset.pattern.permute.xlu0 0
      %1057 = vperm.xlu0 %1056, %v1019
      %v1058 = vpop.permute.xlu0 %1057
      %v1060 = vadd.f32 %v974, %v1023
      %v1061 = vadd.f32 %v979, %v1028
      %v1062 = vadd.f32 %v984, %v1033
      %v1063 = vadd.f32 %v989, %v1038
      %v1064 = vadd.f32 %v994, %v1043
      %v1065 = vadd.f32 %v999, %v1048
      %v1066 = vadd.f32 %v1004, %v1053
      %v1067 = vadd.f32 %v1009, %v1058
      %v1068 = vmax.f32 %v1060, 0.0
      %v1069 = vmax.f32 %v1061, 0.0
      %v1070 = vmax.f32 %v1062, 0.0
      %v1071 = vmax.f32 %v1063, 0.0
      %v1072 = vmax.f32 %v1064, 0.0
      %v1073 = vmax.f32 %v1065, 0.0
      %v1074 = vmax.f32 %v1066, 0.0
      %v1075 = vmax.f32 %v1067, 0.0
      %vm1076 = vcmask 228352
      %1077 = vst.msk [vmem:[#allocation3] sm:$0xff] %vm1076, %v1068
      %1078 = vst.msk [vmem:[#allocation3 + $0x8] sm:$0xff] %vm1076, %v1069
      %1081 = vrot.lane.b32.xlu0 %v1070, 28
      %v1082 = vpop.permute.xlu0 %1081
      %1083 = vrot.lane.b32.xlu0 %v1071, 28
      %v1084 = vpop.permute.xlu0 %1083
      %vm1087 = vcmask 457952
      %1088 = vst.msk [vmem:[#allocation3] sm:$0xff] %vm1087, %v1082
      %1089 = vst.msk [vmem:[#allocation3 + $0x8] sm:$0xff] %vm1087, %v1084
      %1092 = vrot.lane.b32.xlu0 %v1072, 56
      %v1093 = vpop.permute.xlu0 %1092
      %1094 = vrot.lane.b32.xlu0 %v1073, 56
      %v1095 = vpop.permute.xlu0 %1094
      %vm1098 = vcmask 687552
      %1099 = vst.msk [vmem:[#allocation3] sm:$0xff] %vm1098, %v1093
      %1100 = vst.msk [vmem:[#allocation3 + $0x8] sm:$0xff] %vm1098, %v1095
      %1103 = vrot.lane.b32.xlu0 %v1074, 84
      %v1104 = vpop.permute.xlu0 %1103
      %1105 = vrot.lane.b32.xlu0 %v1075, 84
      %v1106 = vpop.permute.xlu0 %1105
      %vm1109 = vcmask 917152
      %1110 = vst.msk [vmem:[#allocation3] sm:$0xff] %vm1109, %v1104
      %1111 = vst.msk [vmem:[#allocation3 + $0x8] sm:$0xff] %vm1109, %v1106
      %vm1112 = vcmask 917368
      %1113 = vst.msk [vmem:[#allocation3] sm:$0xff] %vm1112, 0.0
      %1114 = vst.msk [vmem:[#allocation3 + $0x8] sm:$0xff] %vm1112, 0.0
      %v1115 = vld [vmem:[#allocation3] sm:$0xff]
      %v1116 = vld [vmem:[#allocation3 + $0x8] sm:$0xff]
      %1119 = vrot.lane.b32.xlu0 %v1115, 45
      %v1120 = vpop.permute.xlu0 %1119
      %1121 = vrot.lane.b32.xlu0 %v1116, 45
      %v1122 = vpop.permute.xlu0 %1121
      %v1125 = vsel %vm735, 0.0, %v1120
      %v1126 = vsel %vm735, 0.0, %v1122
      %1127 = vrot.lane.b32.xlu0 %v1115, 28
      %v1128 = vpop.permute.xlu0 %1127
      %1129 = vrot.lane.b32.xlu0 %v1116, 28
      %v1130 = vpop.permute.xlu0 %1129
      %v1133 = vsel %vm1076, %v1125, %v1128
      %v1134 = vsel %vm1076, %v1126, %v1130
      %v1135 = vld [vmem:[%s6] sm:$0xff]
      %v1136 = vld [vmem:[%s6 + $0x8] sm:$0xff]
      %v1137 = vld [vmem:[%s6 + $0x10] sm:$0xff]
      %v1138 = vld [vmem:[%s6 + $0x18] sm:$0xff]
      %v1139 = vld [vmem:[%s7] sm:$0xff]
      %v1140 = vld [vmem:[%s7 + $0x8] sm:$0xff]
      %v1141 = vld [vmem:[%s7 + $0x10] sm:$0xff]
      %v1142 = vld [vmem:[%s7 + $0x18] sm:$0xff]
      %v1144 = vsel %vm667, %v1139, 0
      %v1147 = vsel %vm667, %v1140, 0
      %v1150 = vsel %vm667, %v1141, 0
      %v1153 = vsel %vm667, %v1142, 0
      %1155 = vmatprep.subr.mxu0 0.0
      %1156 = vmatpush1.msra.mxu0 %v1133
      %1157 = vmatprep.subr.mxu0 0.0
      %1158 = vmatpush1.msra.mxu0 %v1134
      %1159 = vmatprep.subr.mxu0 0.0
      %1160 = vmatpush1.msra.mxu0 0.0
      %1161 = vmatprep.subr.mxu0 0.0
      %1162 = vmatpush1.msra.mxu0 0.0
      %1163 = vmatprep.subr.mxu0 0.0
      %1164 = vmatpush1.msra.mxu0 0.0
      %1165 = vmatprep.subr.mxu0 0.0
      %1166 = vmatpush1.msra.mxu0 0.0
      %1167 = vmatprep.subr.mxu0 0.0
      %1168 = vmatpush1.msra.mxu0 0.0
      %1169 = vmatprep.subr.mxu0 0.0
      %1170 = vmatpush1.msra.mxu0 0.0
      %1171 = vmatprep.subr.mxu0 0.0
      %1172 = vmatpush1.msra.mxu0 0.0
      %1173 = vmatprep.subr.mxu0 0.0
      %1174 = vmatpush1.msra.mxu0 0.0
      %1175 = vmatprep.subr.mxu0 0.0
      %1176 = vmatpush1.msra.mxu0 0.0
      %1177 = vmatprep.subr.mxu0 0.0
      %1178 = vmatpush1.msra.mxu0 0.0
      %1179 = vmatprep.subr.mxu0 0.0
      %1180 = vmatpush1.msra.mxu0 0.0
      %1181 = vmatprep.subr.mxu0 0.0
      %1182 = vmatpush1.msra.mxu0 0.0
      %1183 = vmatprep.subr.mxu0 0.0
      %1184 = vmatpush1.msra.mxu0 0.0
      %1185 = vmatprep.subr.mxu0 0.0
      %1186 = vmatpush1.msra.mxu0 0.0
      %1187 = vmatprep.subr.mxu0 0.0
      %1188 = vmatpush1.msra.mxu0 0.0
      %1189 = vmatprep.subr.mxu0 0.0
      %1190 = vmatpush1.msra.mxu0 0.0
      %1191 = vmatprep.subr.mxu0 0.0
      %1192 = vmatpush1.msra.mxu0 0.0
      %1193 = vmatprep.subr.mxu0 0.0
      %1194 = vmatpush1.msra.mxu0 0.0
      %1195 = vmatprep.subr.mxu0 0.0
      %1196 = vmatpush1.msra.mxu0 0.0
      %1197 = vmatprep.subr.mxu0 0.0
      %1198 = vmatpush1.msra.mxu0 0.0
      %1199 = vmatprep.subr.mxu0 0.0
      %1200 = vmatpush1.msra.mxu0 0.0
      %1201 = vmatprep.subr.mxu0 0.0
      %1202 = vmatpush1.msra.mxu0 0.0
      %1203 = vmatprep.subr.mxu0 0.0
      %1204 = vmatpush1.msra.mxu0 0.0
      %1205 = vmatprep.subr.mxu0 0.0
      %1206 = vmatpush1.msra.mxu0 0.0
      %1207 = vmatprep.subr.mxu0 0.0
      %1208 = vmatpush1.msra.mxu0 0.0
      %1209 = vmatprep.subr.mxu0 0.0
      %1210 = vmatpush1.msra.mxu0 0.0
      %1211 = vmatprep.subr.mxu0 0.0
      %1212 = vmatpush1.msra.mxu0 0.0
      %1213 = vmatprep.subr.mxu0 0.0
      %1214 = vmatpush1.msra.mxu0 0.0
      %1215 = vmatprep.subr.mxu0 0.0
      %1216 = vmatpush1.msra.mxu0 0.0
      %1217 = vmatprep.subr.mxu0 0.0
      %1218 = vmatpush1.msra.mxu0 0.0
      %1219 = vmatprep.mubr.f32.mxu0 0.0
      %1220 = vmatmul.mubr.f32.gmra.mrb[0].mxu0 %v1144
      %v1221 = vpop.f32.mrb[0].mxu0
      %v1222 = vadd.f32 0.0, %v1221
      %v1223 = vpop.f32.mrb[0].mxu0
      %1224 = vmatprep.mubr.f32.mxu0 0.0
      %1225 = vmatmul.mubr.f32.gmra.mrb[0].mxu0 %v1147
      %v1226 = vpop.f32.mrb[0].mxu0
      %v1227 = vadd.f32 0.0, %v1226
      %v1228 = vpop.f32.mrb[0].mxu0
      %1229 = vmatprep.mubr.f32.mxu0 0.0
      %1230 = vmatmul.mubr.f32.gmra.mrb[0].mxu0 %v1150
      %v1231 = vpop.f32.mrb[0].mxu0
      %v1232 = vadd.f32 0.0, %v1231
      %v1233 = vpop.f32.mrb[0].mxu0
      %1234 = vmatprep.mubr.f32.mxu0 0.0
      %1235 = vmatmul.mubr.f32.gmra.mrb[0].mxu0 %v1153
      %v1236 = vpop.f32.mrb[0].mxu0
      %v1237 = vadd.f32 0.0, %v1236
      %v1238 = vpop.f32.mrb[0].mxu0
      %1239 = vdwg.mxu0
      %v1241 = vsel %vm667, %v1135, 0
      %v1244 = vsel %vm667, %v1136, 0
      %v1247 = vsel %vm667, %v1137, 0
      %v1250 = vsel %vm667, %v1138, 0
      %1252 = vmatprep.subr.mxu0 0.0
      %1253 = vmatpush1.msra.mxu0 %v1115
      %1254 = vmatprep.subr.mxu0 0.0
      %1255 = vmatpush1.msra.mxu0 %v1116
      %1256 = vmatprep.subr.mxu0 0.0
      %1257 = vmatpush1.msra.mxu0 0.0
      %1258 = vmatprep.subr.mxu0 0.0
      %1259 = vmatpush1.msra.mxu0 0.0
      %1260 = vmatprep.subr.mxu0 0.0
      %1261 = vmatpush1.msra.mxu0 0.0
      %1262 = vmatprep.subr.mxu0 0.0
      %1263 = vmatpush1.msra.mxu0 0.0
      %1264 = vmatprep.subr.mxu0 0.0
      %1265 = vmatpush1.msra.mxu0 0.0
      %1266 = vmatprep.subr.mxu0 0.0
      %1267 = vmatpush1.msra.mxu0 0.0
      %1268 = vmatprep.subr.mxu0 0.0
      %1269 = vmatpush1.msra.mxu0 0.0
      %1270 = vmatprep.subr.mxu0 0.0
      %1271 = vmatpush1.msra.mxu0 0.0
      %1272 = vmatprep.subr.mxu0 0.0
      %1273 = vmatpush1.msra.mxu0 0.0
      %1274 = vmatprep.subr.mxu0 0.0
      %1275 = vmatpush1.msra.mxu0 0.0
      %1276 = vmatprep.subr.mxu0 0.0
      %1277 = vmatpush1.msra.mxu0 0.0
      %1278 = vmatprep.subr.mxu0 0.0
      %1279 = vmatpush1.msra.mxu0 0.0
      %1280 = vmatprep.subr.mxu0 0.0
      %1281 = vmatpush1.msra.mxu0 0.0
      %1282 = vmatprep.subr.mxu0 0.0
      %1283 = vmatpush1.msra.mxu0 0.0
      %1284 = vmatprep.subr.mxu0 0.0
      %1285 = vmatpush1.msra.mxu0 0.0
      %1286 = vmatprep.subr.mxu0 0.0
      %1287 = vmatpush1.msra.mxu0 0.0
      %1288 = vmatprep.subr.mxu0 0.0
      %1289 = vmatpush1.msra.mxu0 0.0
      %1290 = vmatprep.subr.mxu0 0.0
      %1291 = vmatpush1.msra.mxu0 0.0
      %1292 = vmatprep.subr.mxu0 0.0
      %1293 = vmatpush1.msra.mxu0 0.0
      %1294 = vmatprep.subr.mxu0 0.0
      %1295 = vmatpush1.msra.mxu0 0.0
      %1296 = vmatprep.subr.mxu0 0.0
      %1297 = vmatpush1.msra.mxu0 0.0
      %1298 = vmatprep.subr.mxu0 0.0
      %1299 = vmatpush1.msra.mxu0 0.0
      %1300 = vmatprep.subr.mxu0 0.0
      %1301 = vmatpush1.msra.mxu0 0.0
      %1302 = vmatprep.subr.mxu0 0.0
      %1303 = vmatpush1.msra.mxu0 0.0
      %1304 = vmatprep.subr.mxu0 0.0
      %1305 = vmatpush1.msra.mxu0 0.0
      %1306 = vmatprep.subr.mxu0 0.0
      %1307 = vmatpush1.msra.mxu0 0.0
      %1308 = vmatprep.subr.mxu0 0.0
      %1309 = vmatpush1.msra.mxu0 0.0
      %1310 = vmatprep.subr.mxu0 0.0
      %1311 = vmatpush1.msra.mxu0 0.0
      %1312 = vmatprep.subr.mxu0 0.0
      %1313 = vmatpush1.msra.mxu0 0.0
      %1314 = vmatprep.subr.mxu0 0.0
      %1315 = vmatpush1.msra.mxu0 0.0
      %1316 = vmatprep.mubr.f32.mxu0 0.0
      %1317 = vmatmul.mubr.f32.gmra.mrb[0].mxu0 %v1241
      %v1318 = vpop.f32.mrb[0].mxu0
      %v1319 = vadd.f32 %v1222, %v1318
      %v1320 = vpop.f32.mrb[0].mxu0
      %1321 = vmatprep.mubr.f32.mxu0 0.0
      %1322 = vmatmul.mubr.f32.gmra.mrb[0].mxu0 %v1244
      %v1323 = vpop.f32.mrb[0].mxu0
      %v1324 = vadd.f32 %v1227, %v1323
      %v1325 = vpop.f32.mrb[0].mxu0
      %1326 = vmatprep.mubr.f32.mxu0 0.0
      %1327 = vmatmul.mubr.f32.gmra.mrb[0].mxu0 %v1247
      %v1328 = vpop.f32.mrb[0].mxu0
      %v1329 = vadd.f32 %v1232, %v1328
      %v1330 = vpop.f32.mrb[0].mxu0
      %1331 = vmatprep.mubr.f32.mxu0 0.0
      %1332 = vmatmul.mubr.f32.gmra.mrb[0].mxu0 %v1250
      %v1333 = vpop.f32.mrb[0].mxu0
      %v1334 = vadd.f32 %v1237, %v1333
      %v1335 = vpop.f32.mrb[0].mxu0
      %1336 = vdwg.mxu0
      %v1337 = vld [vmem:[%s8] sm:$0xff]
      %v1338 = vld [vmem:[%s8 + $0x8] sm:$0xff]
      %v1339 = vld [vmem:[%s8 + $0x10] sm:$0xff]
      %v1340 = vld [vmem:[%s8 + $0x18] sm:$0xff]
      %1342 = vset.pattern.permute.xlu0 0
      %1343 = vperm.xlu0 %1342, %v1337
      %v1344 = vpop.permute.xlu0 %1343
      %1347 = vset.pattern.permute.xlu0 0
      %1348 = vperm.xlu0 %1347, %v1338
      %v1349 = vpop.permute.xlu0 %1348
      %1352 = vset.pattern.permute.xlu0 0
      %1353 = vperm.xlu0 %1352, %v1339
      %v1354 = vpop.permute.xlu0 %1353
      %1357 = vset.pattern.permute.xlu0 0
      %1358 = vperm.xlu0 %1357, %v1340
      %v1359 = vpop.permute.xlu0 %1358
      %v1361 = vadd.f32 %v1319, %v1344
      %v1362 = vadd.f32 %v1324, %v1349
      %v1363 = vadd.f32 %v1329, %v1354
      %v1364 = vadd.f32 %v1334, %v1359
      %v1365 = vmax.f32 %v1361, 0.0
      %v1366 = vmax.f32 %v1362, 0.0
      %v1367 = vmax.f32 %v1363, 0.0
      %v1368 = vmax.f32 %v1364, 0.0
      %1369 = vst.msk [vmem:[#allocation4] sm:$0xff] %vm1076, %v1365
      %1371 = vrot.lane.b32.xlu0 %v1366, 28
      %v1372 = vpop.permute.xlu0 %1371
      %1374 = vst.msk [vmem:[#allocation4] sm:$0xff] %vm1087, %v1372
      %1376 = vrot.lane.b32.xlu0 %v1367, 56
      %v1377 = vpop.permute.xlu0 %1376
      %1379 = vst.msk [vmem:[#allocation4] sm:$0xff] %vm1098, %v1377
      %1381 = vrot.lane.b32.xlu0 %v1368, 84
      %v1382 = vpop.permute.xlu0 %1381
      %1384 = vst.msk [vmem:[#allocation4] sm:$0xff] %vm1109, %v1382
      %1386 = vrot.lane.b32.xlu0 %v1365, 84
      %v1387 = vpop.permute.xlu0 %1386
      %vm1389 = vcmask 1048448
      %1390 = vst.msk [vmem:[#allocation4] sm:$0xff] %vm1389, %v1387
      %vm1391 = vcmask 97280
      %1392 = vst.msk [vmem:[#allocation4 + $0x8] sm:$0xff] %vm1391, %v1387
      %1393 = vrot.lane.b32.xlu0 %v1366, 112
      %v1394 = vpop.permute.xlu0 %1393
      %vm1396 = vcmask 326752
      %1397 = vst.msk [vmem:[#allocation4 + $0x8] sm:$0xff] %vm1396, %v1394
      %1398 = vrot.lane.b32.xlu0 %v1367, 12
      %v1399 = vpop.permute.xlu0 %1398
      %vm1401 = vcmask 556352
      %1402 = vst.msk [vmem:[#allocation4 + $0x8] sm:$0xff] %vm1401, %v1399
      %1403 = vrot.lane.b32.xlu0 %v1368, 40
      %v1404 = vpop.permute.xlu0 %1403
      %vm1406 = vcmask 785952
      %1407 = vst.msk [vmem:[#allocation4 + $0x8] sm:$0xff] %vm1406, %v1404
      %1408 = vrot.lane.b32.xlu0 %v1365, 40
      %v1409 = vpop.permute.xlu0 %1408
      %vm1411 = vcmask 1015552
      %1412 = vst.msk [vmem:[#allocation4 + $0x8] sm:$0xff] %vm1411, %v1409
      %1413 = vrot.lane.b32.xlu0 %v1366, 68
      %v1414 = vpop.permute.xlu0 %1413
      %vm1416 = vcmask 1048544
      %1417 = vst.msk [vmem:[#allocation4 + $0x8] sm:$0xff] %vm1416, %v1414
      %vm1418 = vcmask 195584
      %1419 = vst.msk [vmem:[#allocation4 + $0x10] sm:$0xff] %vm1418, %v1414
      %1420 = vrot.lane.b32.xlu0 %v1367, 96
      %v1421 = vpop.permute.xlu0 %1420
      %vm1423 = vcmask 425152
      %1424 = vst.msk [vmem:[#allocation4 + $0x10] sm:$0xff] %vm1423, %v1421
      %1425 = vrot.lane.b32.xlu0 %v1368, 124
      %v1426 = vpop.permute.xlu0 %1425
      %vm1428 = vcmask 654752
      %1429 = vst.msk [vmem:[#allocation4 + $0x10] sm:$0xff] %vm1428, %v1426
      %1430 = vrot.lane.b32.xlu0 %v1365, 124
      %v1431 = vpop.permute.xlu0 %1430
      %vm1433 = vcmask 884352
      %1434 = vst.msk [vmem:[#allocation4 + $0x10] sm:$0xff] %vm1433, %v1431
      %1435 = vrot.lane.b32.xlu0 %v1366, 24
      %v1436 = vpop.permute.xlu0 %1435
      %vm1438 = vcmask 1048416
      %1439 = vst.msk [vmem:[#allocation4 + $0x10] sm:$0xff] %vm1438, %v1436
      %vm1440 = vcmask 64512
      %1441 = vst.msk [vmem:[#allocation4 + $0x18] sm:$0xff] %vm1440, %v1436
      %1442 = vrot.lane.b32.xlu0 %v1367, 52
      %v1443 = vpop.permute.xlu0 %1442
      %vm1445 = vcmask 293952
      %1446 = vst.msk [vmem:[#allocation4 + $0x18] sm:$0xff] %vm1445, %v1443
      %1447 = vrot.lane.b32.xlu0 %v1368, 80
      %v1448 = vpop.permute.xlu0 %1447
      %vm1450 = vcmask 523552
      %1451 = vst.msk [vmem:[#allocation4 + $0x18] sm:$0xff] %vm1450, %v1448
      %vm1452 = vcmask 523768
      %1453 = vst.msk [vmem:[#allocation4 + $0x18] sm:$0xff] %vm1452, 0.0
      %v1454 = vld [vmem:[#allocation4] sm:$0xff]
      %v1455 = vld [vmem:[#allocation4 + $0x8] sm:$0xff]
      %v1456 = vld [vmem:[#allocation4 + $0x10] sm:$0xff]
      %v1457 = vld [vmem:[#allocation4 + $0x18] sm:$0xff]
      %1459 = vrot.lane.b32.xlu0 %v1457, 93
      %v1460 = vpop.permute.xlu0 %1459
      %v1462 = vsel %vm735, 0.0, %v1460
      %1466 = vrot.lane.b32.xlu0 %v1454, 28
      %v1467 = vpop.permute.xlu0 %1466
      %1468 = vrot.lane.b32.xlu0 %v1455, 28
      %v1469 = vpop.permute.xlu0 %1468
      %1470 = vrot.lane.b32.xlu0 %v1456, 28
      %v1471 = vpop.permute.xlu0 %1470
      %1472 = vrot.lane.b32.xlu0 %v1457, 28
      %v1473 = vpop.permute.xlu0 %1472
      %v1474 = vsel %vm1076, %v1467, %v1469
      %v1475 = vsel %vm1076, %v1469, %v1471
      %v1476 = vsel %vm1076, %v1471, %v1473
      %v1481 = vsel %vm1076, %v1462, %v1467
      %v1482 = vld [vmem:[%s9] sm:$0xff]
      %v1483 = vld [vmem:[%s9 + $0x8] sm:$0xff]
      %v1484 = vld [vmem:[%s10] sm:$0xff]
      %v1485 = vld [vmem:[%s10 + $0x8] sm:$0xff]
      %v1487 = vsel %vm1440, %v1484, 0
      %v1490 = vsel %vm1440, %v1485, 0
      %1492 = vmatprep.subr.mxu0 %v1474
      %1493 = vmatpush1.msra.mxu0 %v1481
      %1494 = vmatprep.subr.mxu0 0.0
      %1495 = vmatpush1.msra.mxu0 0.0
      %1496 = vmatprep.subr.mxu0 0.0
      %1497 = vmatpush1.msra.mxu0 0.0
      %1498 = vmatprep.subr.mxu0 0.0
      %1499 = vmatpush1.msra.mxu0 0.0
      %1500 = vmatprep.subr.mxu0 0.0
      %1501 = vmatpush1.msra.mxu0 0.0
      %1502 = vmatprep.subr.mxu0 0.0
      %1503 = vmatpush1.msra.mxu0 0.0
      %1504 = vmatprep.subr.mxu0 0.0
      %1505 = vmatpush1.msra.mxu0 0.0
      %1506 = vmatprep.subr.mxu0 0.0
      %1507 = vmatpush1.msra.mxu0 0.0
      %1508 = vmatprep.subr.mxu0 0.0
      %1509 = vmatpush1.msra.mxu0 0.0
      %1510 = vmatprep.subr.mxu0 0.0
      %1511 = vmatpush1.msra.mxu0 0.0
      %1512 = vmatprep.subr.mxu0 0.0
      %1513 = vmatpush1.msra.mxu0 0.0
      %1514 = vmatprep.subr.mxu0 0.0
      %1515 = vmatpush1.msra.mxu0 0.0
      %1516 = vmatprep.subr.mxu0 0.0
      %1517 = vmatpush1.msra.mxu0 0.0
      %1518 = vmatprep.subr.mxu0 0.0
      %1519 = vmatpush1.msra.mxu0 0.0
      %1520 = vmatprep.subr.mxu0 0.0
      %1521 = vmatpush1.msra.mxu0 0.0
      %1522 = vmatprep.subr.mxu0 0.0
      %1523 = vmatpush1.msra.mxu0 0.0
      %1524 = vmatprep.subr.mxu0 0.0
      %1525 = vmatpush1.msra.mxu0 0.0
      %1526 = vmatprep.subr.mxu0 0.0
      %1527 = vmatpush1.msra.mxu0 0.0
      %1528 = vmatprep.subr.mxu0 0.0
      %1529 = vmatpush1.msra.mxu0 0.0
      %1530 = vmatprep.subr.mxu0 0.0
      %1531 = vmatpush1.msra.mxu0 0.0
      %1532 = vmatprep.subr.mxu0 0.0
      %1533 = vmatpush1.msra.mxu0 0.0
      %1534 = vmatprep.subr.mxu0 0.0
      %1535 = vmatpush1.msra.mxu0 0.0
      %1536 = vmatprep.subr.mxu0 0.0
      %1537 = vmatpush1.msra.mxu0 0.0
      %1538 = vmatprep.subr.mxu0 0.0
      %1539 = vmatpush1.msra.mxu0 0.0
      %1540 = vmatprep.subr.mxu0 0.0
      %1541 = vmatpush1.msra.mxu0 0.0
      %1542 = vmatprep.subr.mxu0 0.0
      %1543 = vmatpush1.msra.mxu0 0.0
      %1544 = vmatprep.subr.mxu0 0.0
      %1545 = vmatpush1.msra.mxu0 0.0
      %1546 = vmatprep.subr.mxu0 0.0
      %1547 = vmatpush1.msra.mxu0 0.0
      %1548 = vmatprep.subr.mxu0 0.0
      %1549 = vmatpush1.msra.mxu0 0.0
      %1550 = vmatprep.subr.mxu0 0.0
      %1551 = vmatpush1.msra.mxu0 0.0
      %1552 = vmatprep.subr.mxu0 0.0
      %1553 = vmatpush1.msra.mxu0 0.0
      %1554 = vmatprep.subr.mxu0 0.0
      %1555 = vmatpush1.msra.mxu0 0.0
      %1556 = vmatprep.mubr.f32.mxu0 0.0
      %1557 = vmatmul.mubr.f32.gmra.mrb[0].mxu0 %v1487
      %v1558 = vpop.f32.mrb[0].mxu0
      %v1559 = vadd.f32 0.0, %v1558
      %v1560 = vpop.f32.mrb[0].mxu0
      %v1561 = vadd.f32 0.0, %v1560
      %1562 = vmatprep.mubr.f32.mxu0 0.0
      %1563 = vmatmul.mubr.f32.gmra.mrb[0].mxu0 %v1490
      %v1564 = vpop.f32.mrb[0].mxu0
      %v1565 = vadd.f32 0.0, %v1564
      %v1566 = vpop.f32.mrb[0].mxu0
      %v1567 = vadd.f32 0.0, %v1566
      %1568 = vdwg.mxu0
      %1569 = vmatprep.subr.mxu0 %v1476
      %1570 = vmatpush1.msra.mxu0 %v1475
      %1571 = vmatprep.subr.mxu0 0.0
      %1572 = vmatpush1.msra.mxu0 0.0
      %1573 = vmatprep.subr.mxu0 0.0
      %1574 = vmatpush1.msra.mxu0 0.0
      %1575 = vmatprep.subr.mxu0 0.0
      %1576 = vmatpush1.msra.mxu0 0.0
      %1577 = vmatprep.subr.mxu0 0.0
      %1578 = vmatpush1.msra.mxu0 0.0
      %1579 = vmatprep.subr.mxu0 0.0
      %1580 = vmatpush1.msra.mxu0 0.0
      %1581 = vmatprep.subr.mxu0 0.0
      %1582 = vmatpush1.msra.mxu0 0.0
      %1583 = vmatprep.subr.mxu0 0.0
      %1584 = vmatpush1.msra.mxu0 0.0
      %1585 = vmatprep.subr.mxu0 0.0
      %1586 = vmatpush1.msra.mxu0 0.0
      %1587 = vmatprep.subr.mxu0 0.0
      %1588 = vmatpush1.msra.mxu0 0.0
      %1589 = vmatprep.subr.mxu0 0.0
      %1590 = vmatpush1.msra.mxu0 0.0
      %1591 = vmatprep.subr.mxu0 0.0
      %1592 = vmatpush1.msra.mxu0 0.0
      %1593 = vmatprep.subr.mxu0 0.0
      %1594 = vmatpush1.msra.mxu0 0.0
      %1595 = vmatprep.subr.mxu0 0.0
      %1596 = vmatpush1.msra.mxu0 0.0
      %1597 = vmatprep.subr.mxu0 0.0
      %1598 = vmatpush1.msra.mxu0 0.0
      %1599 = vmatprep.subr.mxu0 0.0
      %1600 = vmatpush1.msra.mxu0 0.0
      %1601 = vmatprep.subr.mxu0 0.0
      %1602 = vmatpush1.msra.mxu0 0.0
      %1603 = vmatprep.subr.mxu0 0.0
      %1604 = vmatpush1.msra.mxu0 0.0
      %1605 = vmatprep.subr.mxu0 0.0
      %1606 = vmatpush1.msra.mxu0 0.0
      %1607 = vmatprep.subr.mxu0 0.0
      %1608 = vmatpush1.msra.mxu0 0.0
      %1609 = vmatprep.subr.mxu0 0.0
      %1610 = vmatpush1.msra.mxu0 0.0
      %1611 = vmatprep.subr.mxu0 0.0
      %1612 = vmatpush1.msra.mxu0 0.0
      %1613 = vmatprep.subr.mxu0 0.0
      %1614 = vmatpush1.msra.mxu0 0.0
      %1615 = vmatprep.subr.mxu0 0.0
      %1616 = vmatpush1.msra.mxu0 0.0
      %1617 = vmatprep.subr.mxu0 0.0
      %1618 = vmatpush1.msra.mxu0 0.0
      %1619 = vmatprep.subr.mxu0 0.0
      %1620 = vmatpush1.msra.mxu0 0.0
      %1621 = vmatprep.subr.mxu0 0.0
      %1622 = vmatpush1.msra.mxu0 0.0
      %1623 = vmatprep.subr.mxu0 0.0
      %1624 = vmatpush1.msra.mxu0 0.0
      %1625 = vmatprep.subr.mxu0 0.0
      %1626 = vmatpush1.msra.mxu0 0.0
      %1627 = vmatprep.subr.mxu0 0.0
      %1628 = vmatpush1.msra.mxu0 0.0
      %1629 = vmatprep.subr.mxu0 0.0
      %1630 = vmatpush1.msra.mxu0 0.0
      %1631 = vmatprep.subr.mxu0 0.0
      %1632 = vmatpush1.msra.mxu0 0.0
      %1633 = vmatprep.mubr.f32.mxu0 0.0
      %1634 = vmatmul.mubr.f32.gmra.mrb[0].mxu0 %v1487
      %v1635 = vpop.f32.mrb[0].mxu0
      %v1636 = vadd.f32 0.0, %v1635
      %v1637 = vpop.f32.mrb[0].mxu0
      %v1638 = vadd.f32 0.0, %v1637
      %1639 = vmatprep.mubr.f32.mxu0 0.0
      %1640 = vmatmul.mubr.f32.gmra.mrb[0].mxu0 %v1490
      %v1641 = vpop.f32.mrb[0].mxu0
      %v1642 = vadd.f32 0.0, %v1641
      %v1643 = vpop.f32.mrb[0].mxu0
      %v1644 = vadd.f32 0.0, %v1643
      %1645 = vdwg.mxu0
      %v1647 = vsel %vm1440, %v1482, 0
      %v1650 = vsel %vm1440, %v1483, 0
      %1652 = vmatprep.subr.mxu0 %v1455
      %1653 = vmatpush1.msra.mxu0 %v1454
      %1654 = vmatprep.subr.mxu0 0.0
      %1655 = vmatpush1.msra.mxu0 0.0
      %1656 = vmatprep.subr.mxu0 0.0
      %1657 = vmatpush1.msra.mxu0 0.0
      %1658 = vmatprep.subr.mxu0 0.0
      %1659 = vmatpush1.msra.mxu0 0.0
      %1660 = vmatprep.subr.mxu0 0.0
      %1661 = vmatpush1.msra.mxu0 0.0
      %1662 = vmatprep.subr.mxu0 0.0
      %1663 = vmatpush1.msra.mxu0 0.0
      %1664 = vmatprep.subr.mxu0 0.0
      %1665 = vmatpush1.msra.mxu0 0.0
      %1666 = vmatprep.subr.mxu0 0.0
      %1667 = vmatpush1.msra.mxu0 0.0
      %1668 = vmatprep.subr.mxu0 0.0
      %1669 = vmatpush1.msra.mxu0 0.0
      %1670 = vmatprep.subr.mxu0 0.0
      %1671 = vmatpush1.msra.mxu0 0.0
      %1672 = vmatprep.subr.mxu0 0.0
      %1673 = vmatpush1.msra.mxu0 0.0
      %1674 = vmatprep.subr.mxu0 0.0
      %1675 = vmatpush1.msra.mxu0 0.0
      %1676 = vmatprep.subr.mxu0 0.0
      %1677 = vmatpush1.msra.mxu0 0.0
      %1678 = vmatprep.subr.mxu0 0.0
      %1679 = vmatpush1.msra.mxu0 0.0
      %1680 = vmatprep.subr.mxu0 0.0
      %1681 = vmatpush1.msra.mxu0 0.0
      %1682 = vmatprep.subr.mxu0 0.0
      %1683 = vmatpush1.msra.mxu0 0.0
      %1684 = vmatprep.subr.mxu0 0.0
      %1685 = vmatpush1.msra.mxu0 0.0
      %1686 = vmatprep.subr.mxu0 0.0
      %1687 = vmatpush1.msra.mxu0 0.0
      %1688 = vmatprep.subr.mxu0 0.0
      %1689 = vmatpush1.msra.mxu0 0.0
      %1690 = vmatprep.subr.mxu0 0.0
      %1691 = vmatpush1.msra.mxu0 0.0
      %1692 = vmatprep.subr.mxu0 0.0
      %1693 = vmatpush1.msra.mxu0 0.0
      %1694 = vmatprep.subr.mxu0 0.0
      %1695 = vmatpush1.msra.mxu0 0.0
      %1696 = vmatprep.subr.mxu0 0.0
      %1697 = vmatpush1.msra.mxu0 0.0
      %1698 = vmatprep.subr.mxu0 0.0
      %1699 = vmatpush1.msra.mxu0 0.0
      %1700 = vmatprep.subr.mxu0 0.0
      %1701 = vmatpush1.msra.mxu0 0.0
      %1702 = vmatprep.subr.mxu0 0.0
      %1703 = vmatpush1.msra.mxu0 0.0
      %1704 = vmatprep.subr.mxu0 0.0
      %1705 = vmatpush1.msra.mxu0 0.0
      %1706 = vmatprep.subr.mxu0 0.0
      %1707 = vmatpush1.msra.mxu0 0.0
      %1708 = vmatprep.subr.mxu0 0.0
      %1709 = vmatpush1.msra.mxu0 0.0
      %1710 = vmatprep.subr.mxu0 0.0
      %1711 = vmatpush1.msra.mxu0 0.0
      %1712 = vmatprep.subr.mxu0 0.0
      %1713 = vmatpush1.msra.mxu0 0.0
      %1714 = vmatprep.subr.mxu0 0.0
      %1715 = vmatpush1.msra.mxu0 0.0
      %1716 = vmatprep.mubr.f32.mxu0 0.0
      %1717 = vmatmul.mubr.f32.gmra.mrb[0].mxu0 %v1647
      %v1718 = vpop.f32.mrb[0].mxu0
      %v1719 = vadd.f32 %v1559, %v1718
      %v1720 = vpop.f32.mrb[0].mxu0
      %v1721 = vadd.f32 %v1561, %v1720
      %1722 = vmatprep.mubr.f32.mxu0 0.0
      %1723 = vmatmul.mubr.f32.gmra.mrb[0].mxu0 %v1650
      %v1724 = vpop.f32.mrb[0].mxu0
      %v1725 = vadd.f32 %v1565, %v1724
      %v1726 = vpop.f32.mrb[0].mxu0
      %v1727 = vadd.f32 %v1567, %v1726
      %1728 = vdwg.mxu0
      %1729 = vmatprep.subr.mxu0 %v1457
      %1730 = vmatpush1.msra.mxu0 %v1456
      %1731 = vmatprep.subr.mxu0 0.0
      %1732 = vmatpush1.msra.mxu0 0.0
      %1733 = vmatprep.subr.mxu0 0.0
      %1734 = vmatpush1.msra.mxu0 0.0
      %1735 = vmatprep.subr.mxu0 0.0
      %1736 = vmatpush1.msra.mxu0 0.0
      %1737 = vmatprep.subr.mxu0 0.0
      %1738 = vmatpush1.msra.mxu0 0.0
      %1739 = vmatprep.subr.mxu0 0.0
      %1740 = vmatpush1.msra.mxu0 0.0
      %1741 = vmatprep.subr.mxu0 0.0
      %1742 = vmatpush1.msra.mxu0 0.0
      %1743 = vmatprep.subr.mxu0 0.0
      %1744 = vmatpush1.msra.mxu0 0.0
      %1745 = vmatprep.subr.mxu0 0.0
      %1746 = vmatpush1.msra.mxu0 0.0
      %1747 = vmatprep.subr.mxu0 0.0
      %1748 = vmatpush1.msra.mxu0 0.0
      %1749 = vmatprep.subr.mxu0 0.0
      %1750 = vmatpush1.msra.mxu0 0.0
      %1751 = vmatprep.subr.mxu0 0.0
      %1752 = vmatpush1.msra.mxu0 0.0
      %1753 = vmatprep.subr.mxu0 0.0
      %1754 = vmatpush1.msra.mxu0 0.0
      %1755 = vmatprep.subr.mxu0 0.0
      %1756 = vmatpush1.msra.mxu0 0.0
      %1757 = vmatprep.subr.mxu0 0.0
      %1758 = vmatpush1.msra.mxu0 0.0
      %1759 = vmatprep.subr.mxu0 0.0
      %1760 = vmatpush1.msra.mxu0 0.0
      %1761 = vmatprep.subr.mxu0 0.0
      %1762 = vmatpush1.msra.mxu0 0.0
      %1763 = vmatprep.subr.mxu0 0.0
      %1764 = vmatpush1.msra.mxu0 0.0
      %1765 = vmatprep.subr.mxu0 0.0
      %1766 = vmatpush1.msra.mxu0 0.0
      %1767 = vmatprep.subr.mxu0 0.0
      %1768 = vmatpush1.msra.mxu0 0.0
      %1769 = vmatprep.subr.mxu0 0.0
      %1770 = vmatpush1.msra.mxu0 0.0
      %1771 = vmatprep.subr.mxu0 0.0
      %1772 = vmatpush1.msra.mxu0 0.0
      %1773 = vmatprep.subr.mxu0 0.0
      %1774 = vmatpush1.msra.mxu0 0.0
      %1775 = vmatprep.subr.mxu0 0.0
      %1776 = vmatpush1.msra.mxu0 0.0
      %1777 = vmatprep.subr.mxu0 0.0
      %1778 = vmatpush1.msra.mxu0 0.0
      %1779 = vmatprep.subr.mxu0 0.0
      %1780 = vmatpush1.msra.mxu0 0.0
      %1781 = vmatprep.subr.mxu0 0.0
      %1782 = vmatpush1.msra.mxu0 0.0
      %1783 = vmatprep.subr.mxu0 0.0
      %1784 = vmatpush1.msra.mxu0 0.0
      %1785 = vmatprep.subr.mxu0 0.0
      %1786 = vmatpush1.msra.mxu0 0.0
      %1787 = vmatprep.subr.mxu0 0.0
      %1788 = vmatpush1.msra.mxu0 0.0
      %1789 = vmatprep.subr.mxu0 0.0
      %1790 = vmatpush1.msra.mxu0 0.0
      %1791 = vmatprep.subr.mxu0 0.0
      %1792 = vmatpush1.msra.mxu0 0.0
      %1793 = vmatprep.mubr.f32.mxu0 0.0
      %1794 = vmatmul.mubr.f32.gmra.mrb[0].mxu0 %v1647
      %v1795 = vpop.f32.mrb[0].mxu0
      %v1796 = vadd.f32 %v1636, %v1795
      %v1797 = vpop.f32.mrb[0].mxu0
      %v1798 = vadd.f32 %v1638, %v1797
      %1799 = vmatprep.mubr.f32.mxu0 0.0
      %1800 = vmatmul.mubr.f32.gmra.mrb[0].mxu0 %v1650
      %v1801 = vpop.f32.mrb[0].mxu0
      %v1802 = vadd.f32 %v1642, %v1801
      %v1803 = vpop.f32.mrb[0].mxu0
      %v1804 = vadd.f32 %v1644, %v1803
      %1805 = vdwg.mxu0
      %v1806 = vld [vmem:[%s11] sm:$0xff]
      %v1807 = vld [vmem:[%s11 + $0x8] sm:$0xff]
      %1809 = vset.pattern.permute.xlu0 0
      %1810 = vperm.xlu0 %1809, %v1806
      %v1811 = vpop.permute.xlu0 %1810
      %1814 = vset.pattern.permute.xlu0 0
      %1815 = vperm.xlu0 %1814, %v1807
      %v1816 = vpop.permute.xlu0 %1815
      %v1818 = vadd.f32 %v1719, %v1811
      %v1819 = vadd.f32 %v1721, %v1811
      %v1820 = vadd.f32 %v1796, %v1811
      %v1821 = vadd.f32 %v1798, %v1811
      %v1822 = vadd.f32 %v1725, %v1816
      %v1823 = vadd.f32 %v1727, %v1816
      %v1824 = vadd.f32 %v1802, %v1816
      %v1825 = vadd.f32 %v1804, %v1816
      %v1826 = vmax.f32 %v1818, 0.0
      %v1827 = vmax.f32 %v1819, 0.0
      %v1828 = vmax.f32 %v1820, 0.0
      %v1829 = vmax.f32 %v1821, 0.0
      %v1830 = vmax.f32 %v1822, 0.0
      %v1831 = vmax.f32 %v1823, 0.0
      %v1832 = vmax.f32 %v1824, 0.0
      %v1833 = vmax.f32 %v1825, 0.0
      %vm1834 = vcmask 224256
      %1835 = vst.msk [vmem:[#allocation5] sm:$0xf] %vm1834, %v1826
      %v1837 = vcombine.high %v1826, %v1826
      %1838 = vrot.lane.b32.xlu0 %v1837, 28
      %v1839 = vpop.permute.xlu0 %1838
      %vm1841 = vcmask 453856
      %1842 = vst.msk [vmem:[#allocation5] sm:$0xf] %vm1841, %v1839
      %1844 = vrot.lane.b32.xlu0 %v1830, 56
      %v1845 = vpop.permute.xlu0 %1844
      %vm1847 = vcmask 683456
      %1848 = vst.msk [vmem:[#allocation5] sm:$0xf] %vm1847, %v1845
      %v1849 = vcombine.high %v1830, %v1830
      %1850 = vrot.lane.b32.xlu0 %v1849, 84
      %v1851 = vpop.permute.xlu0 %1850
      %vm1853 = vcmask 913056
      %1854 = vst.msk [vmem:[#allocation5] sm:$0xf] %vm1853, %v1851
      %1855 = vrot.lane.b32.xlu0 %v1826, 84
      %v1856 = vpop.permute.xlu0 %1855
      %v1857 = vrot.slane %v1856, 4
      %vm1858 = vcmask 687104
      %v1859 = vsel %vm1858, %v1857, %v1856
      %vm1861 = vcmask 1044352
      %vm1862 = vcmask 97284
      %vm1863 = vmor %vm1862, %vm1861
      %1864 = vst.msk [vmem:[#allocation5] sm:$0xff] %vm1863, %v1859
      %1865 = vrot.lane.b32.xlu0 %v1837, 112
      %v1866 = vpop.permute.xlu0 %1865
      %vm1868 = vcmask 322656
      %1869 = vst.msk [vmem:[#allocation5 + $0x4] sm:$0xf] %vm1868, %v1866
      %1870 = vrot.lane.b32.xlu0 %v1830, 12
      %v1871 = vpop.permute.xlu0 %1870
      %vm1873 = vcmask 552256
      %1874 = vst.msk [vmem:[#allocation5 + $0x4] sm:$0xf] %vm1873, %v1871
      %1875 = vrot.lane.b32.xlu0 %v1849, 40
      %v1876 = vpop.permute.xlu0 %1875
      %vm1878 = vcmask 781856
      %1879 = vst.msk [vmem:[#allocation5 + $0x4] sm:$0xf] %vm1878, %v1876
      %1880 = vrot.lane.b32.xlu0 %v1826, 40
      %v1881 = vpop.permute.xlu0 %1880
      %vm1883 = vcmask 1011456
      %1884 = vst.msk [vmem:[#allocation5 + $0x4] sm:$0xf] %vm1883, %v1881
      %1885 = vrot.lane.b32.xlu0 %v1837, 68
      %v1886 = vpop.permute.xlu0 %1885
      %v1887 = vrot.slane %v1886, 4
      %vm1888 = vcmask 556032
      %v1889 = vsel %vm1888, %v1887, %v1886
      %vm1891 = vcmask 1044448
      %vm1892 = vcmask 195588
      %vm1893 = vmor %vm1892, %vm1891
      %1894 = vst.msk [vmem:[#allocation5 + $0x4] sm:$0xff] %vm1893, %v1889
      %1895 = vrot.lane.b32.xlu0 %v1830, 96
      %v1896 = vpop.permute.xlu0 %1895
      %vm1898 = vcmask 421056
      %1899 = vst.msk [vmem:[#allocation5 + $0x8] sm:$0xf] %vm1898, %v1896
      %1900 = vrot.lane.b32.xlu0 %v1849, 124
      %v1901 = vpop.permute.xlu0 %1900
      %vm1903 = vcmask 650656
      %1904 = vst.msk [vmem:[#allocation5 + $0x8] sm:$0xf] %vm1903, %v1901
      %1905 = vrot.lane.b32.xlu0 %v1826, 124
      %v1906 = vpop.permute.xlu0 %1905
      %vm1908 = vcmask 880256
      %1909 = vst.msk [vmem:[#allocation5 + $0x8] sm:$0xf] %vm1908, %v1906
      %1910 = vrot.lane.b32.xlu0 %v1837, 24
      %v1911 = vpop.permute.xlu0 %1910
      %v1912 = vrot.slane %v1911, 4
      %v1913 = vsel %vm1418, %v1912, %v1911
      %vm1915 = vcmask 1044320
      %vm1916 = vcmask 64516
      %vm1917 = vmor %vm1916, %vm1915
      %1918 = vst.msk [vmem:[#allocation5 + $0x8] sm:$0xff] %vm1917, %v1913
      %1919 = vrot.lane.b32.xlu0 %v1830, 52
      %v1920 = vpop.permute.xlu0 %1919
      %vm1922 = vcmask 289856
      %1923 = vst.msk [vmem:[#allocation5 + $0xc] sm:$0xf] %vm1922, %v1920
      %1924 = vrot.lane.b32.xlu0 %v1849, 80
      %v1925 = vpop.permute.xlu0 %1924
      %vm1927 = vcmask 519456
      %1928 = vst.msk [vmem:[#allocation5 + $0xc] sm:$0xf] %vm1927, %v1925
      %v1930 = vcombine.low %v1826, %v1827
      %1931 = vrot.lane.b32.xlu0 %v1930, 80
      %v1932 = vpop.permute.xlu0 %1931
      %v1933 = vrot.slane %v1932, 4
      %vm1934 = vcmask 654336
      %v1935 = vsel %vm1934, %v1932, %v1933
      %vm1937 = vcmask 749056
      %1938 = vst.msk [vmem:[#allocation5 + $0xc] sm:$0xf] %vm1937, %v1935
      %v1939 = vcombine.high %v1826, %v1827
      %1940 = vrot.lane.b32.xlu0 %v1939, 108
      %v1941 = vpop.permute.xlu0 %1940
      %v1942 = vrot.slane %v1941, 4
      %vm1943 = vcmask 883712
      %v1944 = vsel %vm1943, %v1941, %v1942
      %vm1946 = vcmask 978656
      %1947 = vst.msk [vmem:[#allocation5 + $0xc] sm:$0xf] %vm1946, %v1944
      %v1949 = vcombine.low %v1830, %v1831
      %1950 = vrot.lane.b32.xlu0 %v1949, 8
      %v1951 = vpop.permute.xlu0 %1950
      %v1952 = vrot.slane %v1951, 4
      %v1953 = vsel %vm1440, %v1952, %v1951
      %vm1955 = vcmask 1044416
      %vm1956 = vcmask 162820
      %vm1957 = vmor %vm1956, %vm1955
      %1958 = vst.msk [vmem:[#allocation5 + $0xc] sm:$0xff] %vm1957, %v1953
      %v1959 = vcombine.high %v1830, %v1831
      %1960 = vrot.lane.b32.xlu0 %v1959, 36
      %v1961 = vpop.permute.xlu0 %1960
      %v1962 = vrot.slane %v1961, 4
      %vm1963 = vcmask 293888
      %v1964 = vsel %vm1963, %v1961, %v1962
      %vm1966 = vcmask 388256
      %1967 = vst.msk [vmem:[#allocation5 + $0x10] sm:$0xf] %vm1966, %v1964
      %1968 = vrot.lane.b32.xlu0 %v1827, 36
      %v1969 = vpop.permute.xlu0 %1968
      %vm1971 = vcmask 617856
      %1972 = vst.msk [vmem:[#allocation5 + $0x10] sm:$0xf] %vm1971, %v1969
      %v1973 = vcombine.high %v1827, %v1827
      %1974 = vrot.lane.b32.xlu0 %v1973, 64
      %v1975 = vpop.permute.xlu0 %1974
      %vm1977 = vcmask 847456
      %1978 = vst.msk [vmem:[#allocation5 + $0x10] sm:$0xf] %vm1977, %v1975
      %1979 = vrot.lane.b32.xlu0 %v1831, 92
      %v1980 = vpop.permute.xlu0 %1979
      %v1981 = vrot.slane %v1980, 4
      %vm1982 = vcmask 752640
      %v1983 = vsel %vm1982, %v1981, %v1980
      %vm1985 = vcmask 1044288
      %vm1986 = vcmask 31748
      %vm1987 = vmor %vm1986, %vm1985
      %1988 = vst.msk [vmem:[#allocation5 + $0x10] sm:$0xff] %vm1987, %v1983
      %v1989 = vcombine.high %v1831, %v1831
      %1990 = vrot.lane.b32.xlu0 %v1989, 120
      %v1991 = vpop.permute.xlu0 %1990
      %vm1993 = vcmask 257056
      %1994 = vst.msk [vmem:[#allocation5 + $0x14] sm:$0xf] %vm1993, %v1991
      %1995 = vrot.lane.b32.xlu0 %v1827, 120
      %v1996 = vpop.permute.xlu0 %1995
      %vm1998 = vcmask 486656
      %1999 = vst.msk [vmem:[#allocation5 + $0x14] sm:$0xf] %vm1998, %v1996
      %2000 = vrot.lane.b32.xlu0 %v1973, 20
      %v2001 = vpop.permute.xlu0 %2000
      %vm2003 = vcmask 716256
      %2004 = vst.msk [vmem:[#allocation5 + $0x14] sm:$0xf] %vm2003, %v2001
      %2005 = vrot.lane.b32.xlu0 %v1831, 48
      %v2006 = vpop.permute.xlu0 %2005
      %vm2008 = vcmask 945856
      %2009 = vst.msk [vmem:[#allocation5 + $0x14] sm:$0xf] %vm2008, %v2006
      %2010 = vrot.lane.b32.xlu0 %v1989, 76
      %v2011 = vpop.permute.xlu0 %2010
      %v2012 = vrot.slane %v2011, 4
      %vm2013 = vcmask 621568
      %v2014 = vsel %vm2013, %v2012, %v2011
      %vm2016 = vcmask 1044384
      %vm2017 = vcmask 130052
      %vm2018 = vmor %vm2017, %vm2016
      %2019 = vst.msk [vmem:[#allocation5 + $0x14] sm:$0xff] %vm2018, %v2014
      %2020 = vrot.lane.b32.xlu0 %v1827, 76
      %v2021 = vpop.permute.xlu0 %2020
      %vm2023 = vcmask 355456
      %2024 = vst.msk [vmem:[#allocation5 + $0x18] sm:$0xf] %vm2023, %v2021
      %2025 = vrot.lane.b32.xlu0 %v1973, 104
      %v2026 = vpop.permute.xlu0 %2025
      %vm2028 = vcmask 585056
      %2029 = vst.msk [vmem:[#allocation5 + $0x18] sm:$0xf] %vm2028, %v2026
      %2030 = vrot.lane.b32.xlu0 %v1831, 4
      %v2031 = vpop.permute.xlu0 %2030
      %vm2033 = vcmask 814656
      %2034 = vst.msk [vmem:[#allocation5 + $0x18] sm:$0xf] %vm2033, %v2031
      %2035 = vrot.lane.b32.xlu0 %v1989, 32
      %v2036 = vpop.permute.xlu0 %2035
      %vm2038 = vcmask 1044256
      %2039 = vst.msk [vmem:[#allocation5 + $0x18] sm:$0xf] %vm2038, %v2036
      %2040 = vrot.lane.b32.xlu0 %v1827, 32
      %v2041 = vpop.permute.xlu0 %2040
      %2043 = vst.msk [vmem:[#allocation5 + $0x1c] sm:$0xf] %vm1834, %v2041
      %2044 = vrot.lane.b32.xlu0 %v1973, 60
      %v2045 = vpop.permute.xlu0 %2044
      %2047 = vst.msk [vmem:[#allocation5 + $0x1c] sm:$0xf] %vm1841, %v2045
      %2048 = vrot.lane.b32.xlu0 %v1831, 88
      %v2049 = vpop.permute.xlu0 %2048
      %2051 = vst.msk [vmem:[#allocation5 + $0x1c] sm:$0xf] %vm1847, %v2049
      %2052 = vrot.lane.b32.xlu0 %v1989, 116
      %v2053 = vpop.permute.xlu0 %2052
      %2055 = vst.msk [vmem:[#allocation5 + $0x1c] sm:$0xf] %vm1853, %v2053
      %v2057 = vcombine.low %v1827, %v1828
      %2058 = vrot.lane.b32.xlu0 %v2057, 116
      %v2059 = vpop.permute.xlu0 %2058
      %v2060 = vrot.slane %v2059, 4
      %vm2061 = vcmask 949248
      %v2062 = vsel %vm2061, %v2059, %v2060
      %2064 = vst.msk [vmem:[#allocation5 + $0x1c] sm:$0xff] %vm1863, %v2062
      %v2065 = vcombine.high %v1827, %v1828
      %2066 = vrot.lane.b32.xlu0 %v2065, 16
      %v2067 = vpop.permute.xlu0 %2066
      %v2068 = vrot.slane %v2067, 4
      %v2069 = vsel %vm667, %v2067, %v2068
      %2071 = vst.msk [vmem:[#allocation5 + $0x20] sm:$0xf] %vm1868, %v2069
      %v2073 = vcombine.low %v1831, %v1832
      %2074 = vrot.lane.b32.xlu0 %v2073, 44
      %v2075 = vpop.permute.xlu0 %2074
      %v2076 = vrot.slane %v2075, 4
      %vm2077 = vcmask 359424
      %v2078 = vsel %vm2077, %v2075, %v2076
      %2080 = vst.msk [vmem:[#allocation5 + $0x20] sm:$0xf] %vm1873, %v2078
      %v2081 = vcombine.high %v1831, %v1832
      %2082 = vrot.lane.b32.xlu0 %v2081, 72
      %v2083 = vpop.permute.xlu0 %2082
      %v2084 = vrot.slane %v2083, 4
      %vm2085 = vcmask 588800
      %v2086 = vsel %vm2085, %v2083, %v2084
      %2088 = vst.msk [vmem:[#allocation5 + $0x20] sm:$0xf] %vm1878, %v2086
      %2089 = vrot.lane.b32.xlu0 %v1828, 72
      %v2090 = vpop.permute.xlu0 %2089
      %2092 = vst.msk [vmem:[#allocation5 + $0x20] sm:$0xf] %vm1883, %v2090
      %v2093 = vcombine.high %v1828, %v1828
      %2094 = vrot.lane.b32.xlu0 %v2093, 100
      %v2095 = vpop.permute.xlu0 %2094
      %v2096 = vrot.slane %v2095, 4
      %vm2097 = vcmask 818176
      %v2098 = vsel %vm2097, %v2096, %v2095
      %2100 = vst.msk [vmem:[#allocation5 + $0x20] sm:$0xff] %vm1893, %v2098
      %2101 = vst.msk [vmem:[#allocation5 + $0x24] sm:$0xf] %vm1898, %v1832
      %v2102 = vcombine.high %v1832, %v1832
      %2103 = vrot.lane.b32.xlu0 %v2102, 28
      %v2104 = vpop.permute.xlu0 %2103
      %2106 = vst.msk [vmem:[#allocation5 + $0x24] sm:$0xf] %vm1903, %v2104
      %2107 = vrot.lane.b32.xlu0 %v1828, 28
      %v2108 = vpop.permute.xlu0 %2107
      %2110 = vst.msk [vmem:[#allocation5 + $0x24] sm:$0xf] %vm1908, %v2108
      %2111 = vrot.lane.b32.xlu0 %v2093, 56
      %v2112 = vpop.permute.xlu0 %2111
      %v2113 = vrot.slane %v2112, 4
      %vm2114 = vcmask 457728
      %v2115 = vsel %vm2114, %v2113, %v2112
      %2117 = vst.msk [vmem:[#allocation5 + $0x24] sm:$0xff] %vm1917, %v2115
      %2118 = vrot.lane.b32.xlu0 %v1832, 84
      %v2119 = vpop.permute.xlu0 %2118
      %2121 = vst.msk [vmem:[#allocation5 + $0x28] sm:$0xf] %vm1922, %v2119
      %2122 = vrot.lane.b32.xlu0 %v2102, 112
      %v2123 = vpop.permute.xlu0 %2122
      %2125 = vst.msk [vmem:[#allocation5 + $0x28] sm:$0xf] %vm1927, %v2123
      %2126 = vrot.lane.b32.xlu0 %v1828, 112
      %v2127 = vpop.permute.xlu0 %2126
      %2129 = vst.msk [vmem:[#allocation5 + $0x28] sm:$0xf] %vm1937, %v2127
      %2130 = vrot.lane.b32.xlu0 %v2093, 12
      %v2131 = vpop.permute.xlu0 %2130
      %2133 = vst.msk [vmem:[#allocation5 + $0x28] sm:$0xf] %vm1946, %v2131
      %2134 = vrot.lane.b32.xlu0 %v1832, 40
      %v2135 = vpop.permute.xlu0 %2134
      %v2136 = vrot.slane %v2135, 4
      %vm2137 = vcmask 326656
      %v2138 = vsel %vm2137, %v2136, %v2135
      %2140 = vst.msk [vmem:[#allocation5 + $0x28] sm:$0xff] %vm1957, %v2138
      %2141 = vrot.lane.b32.xlu0 %v2102, 68
      %v2142 = vpop.permute.xlu0 %2141
      %2144 = vst.msk [vmem:[#allocation5 + $0x2c] sm:$0xf] %vm1966, %v2142
      %v2146 = vcombine.low %v1828, %v1829
      %2147 = vrot.lane.b32.xlu0 %v2146, 68
      %v2148 = vpop.permute.xlu0 %2147
      %v2149 = vrot.slane %v2148, 4
      %v2150 = vsel %vm1888, %v2148, %v2149
      %2152 = vst.msk [vmem:[#allocation5 + $0x2c] sm:$0xf] %vm1971, %v2150
      %v2153 = vcombine.high %v1828, %v1829
      %2154 = vrot.lane.b32.xlu0 %v2153, 96
      %v2155 = vpop.permute.xlu0 %2154
      %v2156 = vrot.slane %v2155, 4
      %vm2157 = vcmask 785408
      %v2158 = vsel %vm2157, %v2155, %v2156
      %2160 = vst.msk [vmem:[#allocation5 + $0x2c] sm:$0xf] %vm1977, %v2158
      %v2162 = vcombine.low %v1832, %v1833
      %2163 = vrot.lane.b32.xlu0 %v2162, 124
      %v2164 = vpop.permute.xlu0 %2163
      %v2165 = vrot.slane %v2164, 4
      %vm2166 = vcmask 1014784
      %v2167 = vsel %vm2166, %v2164, %v2165
      %2169 = vst.msk [vmem:[#allocation5 + $0x2c] sm:$0xff] %vm1987, %v2167
      %v2170 = vcombine.high %v1832, %v1833
      %2171 = vrot.lane.b32.xlu0 %v2170, 24
      %v2172 = vpop.permute.xlu0 %2171
      %v2173 = vrot.slane %v2172, 4
      %v2174 = vsel %vm1418, %v2172, %v2173
      %2176 = vst.msk [vmem:[#allocation5 + $0x30] sm:$0xf] %vm1993, %v2174
      %2177 = vrot.lane.b32.xlu0 %v1829, 24
      %v2178 = vpop.permute.xlu0 %2177
      %2180 = vst.msk [vmem:[#allocation5 + $0x30] sm:$0xf] %vm1998, %v2178
      %v2181 = vcombine.high %v1829, %v1829
      %2182 = vrot.lane.b32.xlu0 %v2181, 52
      %v2183 = vpop.permute.xlu0 %2182
      %2185 = vst.msk [vmem:[#allocation5 + $0x30] sm:$0xf] %vm2003, %v2183
      %2186 = vrot.lane.b32.xlu0 %v1833, 80
      %v2187 = vpop.permute.xlu0 %2186
      %2189 = vst.msk [vmem:[#allocation5 + $0x30] sm:$0xf] %vm2008, %v2187
      %v2190 = vcombine.high %v1833, %v1833
      %2191 = vrot.lane.b32.xlu0 %v2190, 108
      %v2192 = vpop.permute.xlu0 %2191
      %v2193 = vrot.slane %v2192, 4
      %v2194 = vsel %vm1943, %v2193, %v2192
      %2196 = vst.msk [vmem:[#allocation5 + $0x30] sm:$0xff] %vm2018, %v2194
      %2197 = vrot.lane.b32.xlu0 %v1829, 108
      %v2198 = vpop.permute.xlu0 %2197
      %2200 = vst.msk [vmem:[#allocation5 + $0x34] sm:$0xf] %vm2023, %v2198
      %2201 = vrot.lane.b32.xlu0 %v2181, 8
      %v2202 = vpop.permute.xlu0 %2201
      %2204 = vst.msk [vmem:[#allocation5 + $0x34] sm:$0xf] %vm2028, %v2202
      %2205 = vrot.lane.b32.xlu0 %v1833, 36
      %v2206 = vpop.permute.xlu0 %2205
      %2208 = vst.msk [vmem:[#allocation5 + $0x34] sm:$0xf] %vm2033, %v2206
      %2209 = vrot.lane.b32.xlu0 %v2190, 64
      %v2210 = vpop.permute.xlu0 %2209
      %2212 = vst.msk [vmem:[#allocation5 + $0x34] sm:$0xf] %vm2038, %v2210
      %vm2213 = vcmask 1044472
      %2214 = vst.msk [vmem:[#allocation5 + $0x34] sm:$0xf] %vm2213, 0.0
      %v2215 = vld [vmem:[#allocation5] sm:$0xff]
      %v2216 = vld [vmem:[#allocation5 + $0x8] sm:$0xff]
      %v2217 = vld [vmem:[#allocation5 + $0x10] sm:$0xff]
      %v2218 = vld [vmem:[#allocation5 + $0x18] sm:$0xff]
      %v2219 = vld [vmem:[#allocation5 + $0x20] sm:$0xff]
      %v2220 = vld [vmem:[#allocation5 + $0x28] sm:$0xff]
      %v2221 = vld [vmem:[#allocation5 + $0x30] sm:$0xff]
      %v2222 = vld [vmem:[%s12] sm:$0xf]
      %2224 = vset.pattern.permute.xlu0 0
      %2225 = vperm.xlu0 %2224, %v2222
      %v2226 = vpop.permute.xlu0 %2225
      %v2228 = vunpack.c.l.s4 839922192
      %v2229 = vunpack.c.0.s8 %v2228
      %v2230 = vlaneseq
      %v2231 = vshrl.u32 %v2230, 7
      %v2232 = vsub.s32 %v2229, %v2231
      %v2233 = vrot.slane %v2226, %v2232
      %v2235 = vmul.f32 %v2215, %v2233
      %v2236 = vmul.f32 %v2216, %v2233
      %v2237 = vmul.f32 %v2217, %v2233
      %v2238 = vmul.f32 %v2218, %v2233
      %v2239 = vmul.f32 %v2219, %v2233
      %v2240 = vmul.f32 %v2220, %v2233
      %v2241 = vmul.f32 %v2221, %v2233
      %v2249 = vcombine.high %v2235, %v2235
      %v2250 = vcombine.high %v2236, %v2236
      %v2251 = vcombine.high %v2237, %v2237
      %v2252 = vcombine.high %v2238, %v2238
      %v2253 = vcombine.high %v2239, %v2239
      %v2254 = vcombine.high %v2240, %v2240
      %v2255 = vcombine.high %v2241, %v2241
      %vm2263 = vcmask 1043456
      %v2264 = vsel %vm2263, %v2235, 0.0
      %v2265 = vrot.slane %v2264, 4
      %v2266 = vadd.f32 %v2264, %v2265
      %v2267 = vrot.slane %v2266, 2
      %v2268 = vadd.f32 %v2266, %v2267
      %v2269 = vrot.slane %v2268, 1
      %v2270 = vadd.f32 %v2268, %v2269
      %v2271 = vsel %vm2263, %v2249, 0.0
      %v2272 = vrot.slane %v2271, 4
      %v2273 = vadd.f32 %v2271, %v2272
      %v2274 = vrot.slane %v2273, 2
      %v2275 = vadd.f32 %v2273, %v2274
      %v2276 = vrot.slane %v2275, 1
      %v2277 = vadd.f32 %v2275, %v2276
      %v2278 = vsel %vm2263, %v2236, 0.0
      %v2279 = vrot.slane %v2278, 4
      %v2280 = vadd.f32 %v2278, %v2279
      %v2281 = vrot.slane %v2280, 2
      %v2282 = vadd.f32 %v2280, %v2281
      %v2283 = vrot.slane %v2282, 1
      %v2284 = vadd.f32 %v2282, %v2283
      %v2285 = vsel %vm2263, %v2250, 0.0
      %v2286 = vrot.slane %v2285, 4
      %v2287 = vadd.f32 %v2285, %v2286
      %v2288 = vrot.slane %v2287, 2
      %v2289 = vadd.f32 %v2287, %v2288
      %v2290 = vrot.slane %v2289, 1
      %v2291 = vadd.f32 %v2289, %v2290
      %v2292 = vsel %vm2263, %v2237, 0.0
      %v2293 = vrot.slane %v2292, 4
      %v2294 = vadd.f32 %v2292, %v2293
      %v2295 = vrot.slane %v2294, 2
      %v2296 = vadd.f32 %v2294, %v2295
      %v2297 = vrot.slane %v2296, 1
      %v2298 = vadd.f32 %v2296, %v2297
      %v2299 = vsel %vm2263, %v2251, 0.0
      %v2300 = vrot.slane %v2299, 4
      %v2301 = vadd.f32 %v2299, %v2300
      %v2302 = vrot.slane %v2301, 2
      %v2303 = vadd.f32 %v2301, %v2302
      %v2304 = vrot.slane %v2303, 1
      %v2305 = vadd.f32 %v2303, %v2304
      %v2306 = vsel %vm2263, %v2238, 0.0
      %v2307 = vrot.slane %v2306, 4
      %v2308 = vadd.f32 %v2306, %v2307
      %v2309 = vrot.slane %v2308, 2
      %v2310 = vadd.f32 %v2308, %v2309
      %v2311 = vrot.slane %v2310, 1
      %v2312 = vadd.f32 %v2310, %v2311
      %v2313 = vsel %vm2263, %v2252, 0.0
      %v2314 = vrot.slane %v2313, 4
      %v2315 = vadd.f32 %v2313, %v2314
      %v2316 = vrot.slane %v2315, 2
      %v2317 = vadd.f32 %v2315, %v2316
      %v2318 = vrot.slane %v2317, 1
      %v2319 = vadd.f32 %v2317, %v2318
      %v2320 = vsel %vm2263, %v2239, 0.0
      %v2321 = vrot.slane %v2320, 4
      %v2322 = vadd.f32 %v2320, %v2321
      %v2323 = vrot.slane %v2322, 2
      %v2324 = vadd.f32 %v2322, %v2323
      %v2325 = vrot.slane %v2324, 1
      %v2326 = vadd.f32 %v2324, %v2325
      %v2327 = vsel %vm2263, %v2253, 0.0
      %v2328 = vrot.slane %v2327, 4
      %v2329 = vadd.f32 %v2327, %v2328
      %v2330 = vrot.slane %v2329, 2
      %v2331 = vadd.f32 %v2329, %v2330
      %v2332 = vrot.slane %v2331, 1
      %v2333 = vadd.f32 %v2331, %v2332
      %v2334 = vsel %vm2263, %v2240, 0.0
      %v2335 = vrot.slane %v2334, 4
      %v2336 = vadd.f32 %v2334, %v2335
      %v2337 = vrot.slane %v2336, 2
      %v2338 = vadd.f32 %v2336, %v2337
      %v2339 = vrot.slane %v2338, 1
      %v2340 = vadd.f32 %v2338, %v2339
      %v2341 = vsel %vm2263, %v2254, 0.0
      %v2342 = vrot.slane %v2341, 4
      %v2343 = vadd.f32 %v2341, %v2342
      %v2344 = vrot.slane %v2343, 2
      %v2345 = vadd.f32 %v2343, %v2344
      %v2346 = vrot.slane %v2345, 1
      %v2347 = vadd.f32 %v2345, %v2346
      %v2348 = vsel %vm2263, %v2241, 0.0
      %v2349 = vrot.slane %v2348, 4
      %v2350 = vadd.f32 %v2348, %v2349
      %v2351 = vrot.slane %v2350, 2
      %v2352 = vadd.f32 %v2350, %v2351
      %v2353 = vrot.slane %v2352, 1
      %v2354 = vadd.f32 %v2352, %v2353
      %v2355 = vsel %vm2263, %v2255, 0.0
      %v2356 = vrot.slane %v2355, 4
      %v2357 = vadd.f32 %v2355, %v2356
      %v2358 = vrot.slane %v2357, 2
      %v2359 = vadd.f32 %v2357, %v2358
      %v2360 = vrot.slane %v2359, 1
      %v2361 = vadd.f32 %v2359, %v2360
      %v2362 = vld [vmem:[#allocation6] sm:$0x1]
      %2364 = vset.pattern.permute.xlu0 0
      %2365 = vperm.xlu0 %2364, %v2362
      %v2366 = vpop.permute.xlu0 %2365
      %v2368 = vlaneseq
      %v2369 = vshrl.u32 %v2368, 7
      %v2370 = vsub.s32 0, %v2369
      %v2371 = vrot.slane %v2366, %v2370
      %v2372 = vadd.f32 %v2270, %v2371
      %v2373 = vadd.f32 %v2277, %v2371
      %v2374 = vadd.f32 %v2284, %v2371
      %v2375 = vadd.f32 %v2291, %v2371
      %v2376 = vadd.f32 %v2298, %v2371
      %v2377 = vadd.f32 %v2305, %v2371
      %v2378 = vadd.f32 %v2312, %v2371
      %v2379 = vadd.f32 %v2319, %v2371
      %v2380 = vadd.f32 %v2326, %v2371
      %v2381 = vadd.f32 %v2333, %v2371
      %v2382 = vadd.f32 %v2340, %v2371
      %v2383 = vadd.f32 %v2347, %v2371
      %v2384 = vadd.f32 %v2354, %v2371
      %v2385 = vadd.f32 %v2361, %v2371
      %v2400 = vcombine.low %v2372, %v2373
      %v2401 = vcombine.low %v2374, %v2375
      %v2402 = vcombine.low %v2376, %v2377
      %v2403 = vcombine.low %v2378, %v2379
      %v2405 = vunpack.c.l.s4 1966171168
      %v2406 = vunpack.c.0.s8 %v2405
      %v2407 = vlaneseq
      %v2408 = vshrl.u32 %v2407, 7
      %v2409 = vsub.s32 %v2406, %v2408
      %v2410 = vrot.slane %v2400, %v2409
      %v2412 = vunpack.c.l.s4 1966171168
      %v2413 = vunpack.c.0.s8 %v2412
      %v2414 = vlaneseq
      %v2415 = vshrl.u32 %v2414, 7
      %v2416 = vsub.s32 %v2413, %v2415
      %v2417 = vrot.slane %v2401, %v2416
      %v2419 = vunpack.c.l.s4 1966171168
      %v2420 = vunpack.c.0.s8 %v2419
      %v2421 = vlaneseq
      %v2422 = vshrl.u32 %v2421, 7
      %v2423 = vsub.s32 %v2420, %v2422
      %v2424 = vrot.slane %v2402, %v2423
      %v2426 = vunpack.c.l.s4 1966171168
      %v2427 = vunpack.c.0.s8 %v2426
      %v2428 = vlaneseq
      %v2429 = vshrl.u32 %v2428, 7
      %v2430 = vsub.s32 %v2427, %v2429
      %v2431 = vrot.slane %v2403, %v2430
      %v2432 = vcombine.low %v2410, %v2417
      %v2433 = vcombine.low %v2424, %v2431
      %v2435 = vunpack.c.l.s4 1966171168
      %v2436 = vunpack.c.0.s8 %v2435
      %v2437 = vlaneseq
      %v2438 = vshrl.u32 %v2437, 7
      %v2439 = vsub.s32 %v2436, %v2438
      %v2440 = vrot.slane %v2432, %v2439
      %v2442 = vunpack.c.l.s4 1966171168
      %v2443 = vunpack.c.0.s8 %v2442
      %v2444 = vlaneseq
      %v2445 = vshrl.u32 %v2444, 7
      %v2446 = vsub.s32 %v2443, %v2445
      %v2447 = vrot.slane %v2433, %v2446
      %v2448 = vcombine.low %v2440, %v2447
      %v2449 = vcombine.low %v2380, %v2381
      %v2450 = vcombine.low %v2382, %v2383
      %v2451 = vcombine.low %v2384, %v2385
      %v2453 = vunpack.c.l.s4 1966171168
      %v2454 = vunpack.c.0.s8 %v2453
      %v2455 = vlaneseq
      %v2456 = vshrl.u32 %v2455, 7
      %v2457 = vsub.s32 %v2454, %v2456
      %v2458 = vrot.slane %v2449, %v2457
      %v2460 = vunpack.c.l.s4 1966171168
      %v2461 = vunpack.c.0.s8 %v2460
      %v2462 = vlaneseq
      %v2463 = vshrl.u32 %v2462, 7
      %v2464 = vsub.s32 %v2461, %v2463
      %v2465 = vrot.slane %v2450, %v2464
      %v2467 = vunpack.c.l.s4 1966171168
      %v2468 = vunpack.c.0.s8 %v2467
      %v2469 = vlaneseq
      %v2470 = vshrl.u32 %v2469, 7
      %v2471 = vsub.s32 %v2468, %v2470
      %v2472 = vrot.slane %v2451, %v2471
      %v2473 = vcombine.low %v2458, %v2465
      %v2475 = vunpack.c.l.s4 1966171168
      %v2476 = vunpack.c.0.s8 %v2475
      %v2477 = vlaneseq
      %v2478 = vshrl.u32 %v2477, 7
      %v2479 = vsub.s32 %v2476, %v2478
      %v2480 = vrot.slane %v2473, %v2479
      %v2482 = vunpack.c.l.s4 1966171168
      %v2483 = vunpack.c.0.s8 %v2482
      %v2484 = vlaneseq
      %v2485 = vshrl.u32 %v2484, 7
      %v2486 = vsub.s32 %v2483, %v2485
      %v2487 = vrot.slane %v2472, %v2486
      %v2488 = vcombine.low %v2480, %v2487
      %2491 = vst [vmem:[%s461] sm:$0xff] %v2448
      %v2492 = vlaneseq
      %vm2493 = vcmp.ge.s32.totalorder %v2492, 0
      %vm2494 = vcmp.lt.s32.totalorder %v2492, 768
      %vm2495 = vmand %vm2493, %vm2494
      %2496 = vst.msk [vmem:[%s461 + $0x8] sm:$0x3f] %vm2495, %v2488
      %p2497 = scmp.lt.s32.totalorder %s27, 1
      %s2498 = scalar_select %p2497, %s27, 1
      %s2499 = smul.addr %s2498, 14
      %s2500 = scalar_lea.vmem %s14, %s2499
      // Predicated region
      $region77: #{decoder_blue_forward.1} parent=75 // pred_check
        %p2501 = pneg %p344
      $region78: #{decoder_blue_forward.1} parent=75 // pred_check_branch
        %2503 = sbr.rel (%p2501) target = $region80
      $region79: #{decoder_blue_forward.1} parent=75 // pred_region
        _
      $region80: #{decoder_blue_forward.1} parent=75 // pred_fallthru
        _
    $region76: #{decoder_blue_forward.1} parent=5 // pred_fallthru
      _
    %p2504 = scmp.le.s32.totalorder 2, %s22
    // Predicated region
    $region81: #{decoder_blue_forward.1} parent=5 // pred_check
      %p2505 = pneg %p2504
    $region82: #{decoder_blue_forward.1} parent=5 // pred_check_branch
      %2507 = sbr.rel (%p2505) target = $region84
    $region83: #{decoder_blue_forward.1} parent=5 // pred_region
      %s2508 = ssub.s32 %s22, 2
      // Predicated region
      $region85: #{decoder_blue_forward.1} parent=83 // pred_check
        %p2509 = pneg %p350
      $region86: #{decoder_blue_forward.1} parent=83 // pred_check_branch
        %2511 = sbr.rel (%p2509) target = $region88
      $region87: #{decoder_blue_forward.1} parent=83 // pred_region
        %p2512 = scmp.lt.s32.totalorder %s28, 1
        %s2513 = scalar_select %p2512, %s28, 1
        %s2514 = smul.addr %s2513, 14
        %s2515 = scalar_lea.vmem %s14, %s2514
      $region88: #{decoder_blue_forward.1} parent=83 // pred_fallthru
        _
    $region84: #{decoder_blue_forward.1} parent=5 // pred_fallthru
      _
  $region6: #{decoder_blue_forward.1} parent=0 // loop_footer
    %s26 = sadd.s32 1, %s22
  $region7: #{decoder_blue_forward.1} parent=0 // loop_footer_branch
    %21 = sbr.rel target = $region3
  $region8: #{decoder_blue_forward.1} parent=0 // loop_exit
    _

</llo_original>
